<compile_context>
chip_gen: v7x
topology: tpu7x:2x2x1
jax: 0.10.0
libtpu: 0.0.40
codegen_flags: <defaults>
</compile_context>

<pallas_src>
import math
from functools import partial

import jax
import jax.numpy as jnp
from jax.experimental import pallas as pl
from jax.experimental.pallas import tpu as pltpu

# ----------------------- config (IPMP_IPA defaults) -----------------------
NODE_DIM = 16        # must equal HIDDEN_DIM: the torch module applies
HIDDEN_DIM = 16      # nn.LayerNorm(hidden_dim) to node features.
EDGE_DIM = 16
N_HEADS = 1          # fused kernel layout assumes the module default single head
N_QPTS = 4
N_VPTS = 8
POSITION_SCALE = 10.0
LN_EPS = 1e-5
HEAD_WEIGHT_INIT = 0.541324854612918   # softplus(.) == 1.0

# 48 MiB is safe on all generations (v5e/v6e: 128 MiB physical, v7x: 64 MiB).
# On v6e you may raise this to 96 MiB if TILE_M_ATTN is pushed past 1024.
VMEM_LIMIT = 48 * 1024 * 1024
TILE_M_ATTN = 512               # rows (B*N) per grid step, fused IPA/node-update kernel
TILE_M_PROJ = 1024              # rows per grid step, projection matmul


def _round_up(x, m):
    return (x + m - 1) // m * m


# ----------------------------- Pallas kernels -----------------------------
def _matmul_bias_kernel(x_ref, w_ref, b_ref, o_ref):
    o_ref[...] = (
        jnp.dot(x_ref[...], w_ref[...], preferred_element_type=jnp.float32)
        + b_ref[...]
    )


def matmul_bias(x, w, b, tile=TILE_M_PROJ):
    """x: [M, K], w: [K, N], b: [N] -> [M, N].

    Tiled over M with a row-parallel grid; output columns padded to a multiple of
    128 so stores are lane-dense (no masked vst). No row padding (cdiv grid).
    """
    M, Kd = x.shape
    Nd = w.shape[1]
    Np = _round_up(Nd, 128)
    if Np != Nd:
        w = jnp.pad(w, ((0, 0), (0, Np - Nd)))
        b = jnp.pad(b, (0, Np - Nd))
    tm = min(tile, _round_up(M, 8))
    out = pl.pallas_call(
        _matmul_bias_kernel,
        out_shape=jax.ShapeDtypeStruct((M, Np), jnp.float32),
        grid=(pl.cdiv(M, tm),),
        in_specs=[
            pl.BlockSpec((tm, Kd), lambda i: (i, 0)),
            pl.BlockSpec((Kd, Np), lambda i: (0, 0)),   # resident weights
            pl.BlockSpec((1, Np), lambda i: (0, 0)),
        ],
        out_specs=pl.BlockSpec((tm, Np), lambda i: (i, 0)),
        compiler_params=pltpu.CompilerParams(
            dimension_semantics=("parallel",),
            vmem_limit_bytes=VMEM_LIMIT),
    )(x, w, b.reshape(1, Np))
    return out[:, :Nd] if Np != Nd else out


def _layernorm(x, g, b):
    mu = jnp.mean(x, axis=-1, keepdims=True)
    xc = x - mu
    var = jnp.mean(xc * xc, axis=-1, keepdims=True)
    return xc * jax.lax.rsqrt(var + LN_EPS) * g + b


def _ipa_node_kernel(scal_ref, qs_ref, nbr_ref, he_ref, mb_ref, vecs_ref,
                     wo_ref, w1_ref, w2_ref, o_ref,
                     *, hidden, n_qpts, n_vpts, edge_dim, node_dim):
    """Fused IPA attention + node update for one tile of rows.

    qs_ref  : [T, C + 3*Pq + 12 + D] f32 = [q | q_pts(x..,y..,z..) | R(9) | t(3) | h_V]
    nbr_ref : [T, K, QK + C + 3*Pv] bf16 = [k | k_pts | v | v_pts]  (gathered)
    he_ref  : [T, K, E]             bf16 = per-edge features (not gathered)
    mb_ref  : [T, K]   f32 additive attention-mask bias
    vecs_ref: [16, 4*D] packed small vectors
              rows: 0=Wb, 1=scale_row[q|q_pts], 2=bo, 3=b1, 4=b2, 5..8=ln0_g/b,ln1_g/b
    scal_ref: SMEM [2] = [linear_b bias, softplus(head_weight)*point_scale]
    """
    C = hidden
    Pq3 = n_qpts * 3
    Pv = n_vpts
    Pv3 = n_vpts * 3
    E = edge_dim
    D = node_dim
    QK = C + Pq3
    scale_b = math.sqrt(1.0 / 3.0)

    bb = scal_ref[0]
    hw = scal_ref[1]

    qs = qs_ref[...]                                  # f32
    nbr = nbr_ref[...].astype(jnp.float32)            # bf16 -> f32
    he = he_ref[...].astype(jnp.float32)              # bf16 -> f32
    mb = mb_ref[...]

    # query-side slab slices
    q_scaled = qs[:, :QK] * vecs_ref[1:2, :QK]        # per-lane scale row (no concat)
    qp = qs[:, C:QK]
    Rf = qs[:, QK:QK + 9]
    tx = qs[:, QK + 9:QK + 10]
    ty = qs[:, QK + 10:QK + 11]
    tz = qs[:, QK + 11:QK + 12]
    hv = qs[:, QK + 12:QK + 12 + D]

    # --- fused scalar + point attention logits: one pass over the [k|k_pts] slab ---
    qk = jnp.sum(q_scaled[:, None, :] * nbr[:, :, :QK], axis=-1)     # [T, K]
    kp = nbr[:, :, C:QK]
    kp2 = jnp.sum(kp * kp, axis=-1)                                   # [T, K]
    qp2 = jnp.sum(qp * qp, axis=-1, keepdims=True)                    # [T, 1]

    # pair bias b = h_E @ Wb + bb folded in-kernel
    wb = vecs_ref[0:1, :E]                                            # [1, E]
    pair_b = jnp.sum(he * wb, axis=-1) + bb                           # [T, K]

    logits = qk + scale_b * pair_b - 0.5 * hw * (qp2 + kp2) + mb
    mx = jnp.max(logits, axis=-1, keepdims=True)
    ex = jnp.exp(logits - mx)
    attn = ex * pl.reciprocal(jnp.sum(ex, axis=-1, keepdims=True), approx=True)

    # --- weighted sums: [v | v_pts] slab and h_E slab (no concat in HBM) ---
    out40 = jnp.sum(attn[:, :, None] * nbr[:, :, QK:], axis=1)        # [T, C + Pv3]
    o_pair = jnp.sum(attn[:, :, None] * he, axis=1)                   # [T, E]

    o = out40[:, :C]
    gx = out40[:, C:C + Pv]
    gy = out40[:, C + Pv:C + 2 * Pv]
    gz = out40[:, C + 2 * Pv:C + Pv3]

    # invert-apply frame: local = R^T (global - t)
    dx = gx - tx
    dy = gy - ty
    dz = gz - tz
    lx = Rf[:, 0:1] * dx + Rf[:, 3:4] * dy + Rf[:, 6:7] * dz
    ly = Rf[:, 1:2] * dx + Rf[:, 4:5] * dy + Rf[:, 7:8] * dz
    lz = Rf[:, 2:3] * dx + Rf[:, 5:6] * dy + Rf[:, 8:9] * dz
    pn = jnp.sqrt(lx * lx + ly * ly + lz * lz + 1e-8)

    # --- linear_out as per-piece matmuls over row-slices of Wo (no lane concat) ---
    wo = wo_ref[...]
    bo = vecs_ref[2:3, :D]
    s = (jnp.dot(o, wo[0:C, :], preferred_element_type=jnp.float32)
         + jnp.dot(lx, wo[C:C + Pv, :], preferred_element_type=jnp.float32)
         + jnp.dot(ly, wo[C + Pv:C + 2 * Pv, :], preferred_element_type=jnp.float32)
         + jnp.dot(lz, wo[C + 2 * Pv:C + Pv3, :], preferred_element_type=jnp.float32)
         + jnp.dot(pn, wo[C + Pv3:C + 4 * Pv, :], preferred_element_type=jnp.float32)
         + jnp.dot(o_pair, wo[C + 4 * Pv:, :], preferred_element_type=jnp.float32)
         + bo)

    # --- residual + LN + MLP(relu) + residual + LN (dropout = identity, eval) ---
    b1 = vecs_ref[3:4, :]
    b2 = vecs_ref[4:5, :D]
    g0 = vecs_ref[5:6, :D]
    be0 = vecs_ref[6:7, :D]
    g1 = vecs_ref[7:8, :D]
    be1 = vecs_ref[8:9, :D]

    x = hv + s
    x = _layernorm(x, g0, be0)
    h = jnp.maximum(
        jnp.dot(x, w1_ref[...], preferred_element_type=jnp.float32) + b1, 0.0)
    m = jnp.dot(h, w2_ref[...], preferred_element_type=jnp.float32) + b2
    o_ref[...] = _layernorm(x + m, g1, be1)


def ipa_node_update(qs, nbr, he, mask_bias, scalars, vecs, Wo, W1, W2,
                    tile=TILE_M_ATTN):
    """Row-tiled fused IPA attention + node update. Inputs flattened over M=B*N."""
    M, QS = qs.shape
    K, F = nbr.shape[1], nbr.shape[2]
    E = he.shape[2]
    D = NODE_DIM
    tm = min(tile, _round_up(M, 8))
    grid = (pl.cdiv(M, tm),)   # no wrapper-side padding; boundary blocks handled by Pallas

    kernel = partial(_ipa_node_kernel, hidden=HIDDEN_DIM, n_qpts=N_QPTS,
                     n_vpts=N_VPTS, edge_dim=EDGE_DIM, node_dim=NODE_DIM)
    out = pl.pallas_call(
        kernel,
        out_shape=jax.ShapeDtypeStruct((M, D), jnp.float32),
        grid=grid,
        in_specs=[
            pl.BlockSpec(memory_space=pltpu.MemorySpace.SMEM),   # scalars (2,)
            pl.BlockSpec((tm, QS), lambda i: (i, 0)),            # qs (f32)
            pl.BlockSpec((tm, K, F), lambda i: (i, 0, 0)),       # nbr (bf16)
            pl.BlockSpec((tm, K, E), lambda i: (i, 0, 0)),       # h_E (bf16)
            pl.BlockSpec((tm, K), lambda i: (i, 0)),             # mask bias
            pl.BlockSpec(vecs.shape, lambda i: (0, 0)),          # resident params
            pl.BlockSpec(Wo.shape, lambda i: (0, 0)),
            pl.BlockSpec(W1.shape, lambda i: (0, 0)),
            pl.BlockSpec(W2.shape, lambda i: (0, 0)),
        ],
        out_specs=pl.BlockSpec((tm, D), lambda i: (i, 0)),
        compiler_params=pltpu.CompilerParams(
            dimension_semantics=("parallel",),
            vmem_limit_bytes=VMEM_LIMIT),
    )(scalars, qs, nbr, he, mask_bias, vecs, Wo, W1, W2)
    return out


# ------------------------------ JAX glue ----------------------------------
def gather_nodes(nodes, idx):
    """nodes: [B, N, F], idx: [B, N, K] -> [B, N, K, F]."""
    return jax.vmap(lambda nb, ib: nb[ib])(nodes, idx)


def get_bb_frames(n_xyz, ca_xyz, c_xyz, eps=1e-8):
    # Gram-Schmidt frame (openfold Rigid.from_3_points(N, CA, C) convention).
    # TODO(synk): original PIPPack get_bb_frames not provided; this follows the
    # standard openfold from_3_points convention (R columns e0,e1,e2; t = CA).
    e0 = ca_xyz - n_xyz
    e1 = c_xyz - ca_xyz
    e0 = e0 / jnp.sqrt(jnp.sum(e0 * e0, axis=-1, keepdims=True) + eps)
    e1 = e1 - e0 * jnp.sum(e0 * e1, axis=-1, keepdims=True)
    e1 = e1 / jnp.sqrt(jnp.sum(e1 * e1, axis=-1, keepdims=True) + eps)
    e2 = jnp.cross(e0, e1)
    R = jnp.stack([e0, e1, e2], axis=-1)  # [..., 3, 3], columns e0,e1,e2
    return R, ca_xyz


def _split3_stack(x):
    """Torch-style point layout: split last dim into 3 chunks, stack as (x,y,z)."""
    c = x.shape[-1] // 3
    return jnp.stack([x[..., :c], x[..., c:2 * c], x[..., 2 * c:]], axis=-1)


# ------------------------------ parameters --------------------------------
def _linear(key, fan_in, fan_out):
    kw, kb = jax.random.split(key)
    bound = 1.0 / math.sqrt(fan_in)
    w = jax.random.uniform(kw, (fan_in, fan_out), jnp.float32, -bound, bound)
    b = jax.random.uniform(kb, (fan_out,), jnp.float32, -bound, bound)
    return w, b


def init_params(key):
    H, C, Pq, Pv = N_HEADS, HIDDEN_DIM, N_QPTS, N_VPTS
    out_dim = H * (EDGE_DIM + HIDDEN_DIM + 4 * Pv)
    keys = jax.random.split(key, 8)
    p = {}
    p['Wq'], p['bq'] = _linear(keys[0], NODE_DIM, H * C)
    p['Wkv'], p['bkv'] = _linear(keys[1], NODE_DIM, 2 * H * C)
    p['Wqp'], p['bqp'] = _linear(keys[2], NODE_DIM, H * Pq * 3)
    p['Wkvp'], p['bkvp'] = _linear(keys[3], NODE_DIM, H * (Pq + Pv) * 3)
    p['Wb'], p['bb'] = _linear(keys[4], EDGE_DIM, H)
    p['head_weights'] = jnp.full((H,), HEAD_WEIGHT_INIT, jnp.float32)
    p['Wo'], p['bo'] = _linear(keys[5], out_dim, NODE_DIM)
    p['W1'], p['b1'] = _linear(keys[6], NODE_DIM, NODE_DIM * 4)
    p['W2'], p['b2'] = _linear(keys[7], NODE_DIM * 4, NODE_DIM)
    p['ln0_g'] = jnp.ones((NODE_DIM,), jnp.float32)
    p['ln0_b'] = jnp.zeros((NODE_DIM,), jnp.float32)
    p['ln1_g'] = jnp.ones((NODE_DIM,), jnp.float32)
    p['ln1_b'] = jnp.zeros((NODE_DIM,), jnp.float32)
    return p


# ------------------------------- forward ----------------------------------
def ipmp_ipa_forward(params, h_V, h_E, E_idx, X, mask_V, mask_attend):
    assert N_HEADS == 1, "fused kernel layout assumes n_heads=1 (module default)"
    B, N, D = h_V.shape
    K = E_idx.shape[-1]
    C, Pq, Pv = HIDDEN_DIM, N_QPTS, N_VPTS
    QK = C + 3 * Pq

    # frames from scaled backbone coords (glue)
    sX = X / POSITION_SCALE
    R, t = get_bb_frames(sX[..., 0, :], sX[..., 1, :], sX[..., 2, :])

    def frame_apply(pts):        # pts: [B, N, P, 3]
        return jnp.einsum('bnij,bnpj->bnpi', R, pts) + t[:, :, None, :]

    def to_cm(pts):              # [B, N, P, 3] -> [B, N, 3*P]  (x.., y.., z..)
        return jnp.swapaxes(pts, -1, -2).reshape(B, N, -1)

    # fused node projections: one tiled Pallas matmul for q / kv / q_pts / kv_pts
    W_all = jnp.concatenate(
        [params['Wq'], params['Wkv'], params['Wqp'], params['Wkvp']], axis=1)
    b_all = jnp.concatenate(
        [params['bq'], params['bkv'], params['bqp'], params['bkvp']], axis=0)
    proj = matmul_bias(h_V.reshape(B * N, D), W_all, b_all).reshape(B, N, -1)

    off = 0
    q = proj[..., off:off + C]; off += C
    k = proj[..., off:off + C]; off += C
    v = proj[..., off:off + C]; off += C
    qp_raw = proj[..., off:off + Pq * 3]; off += Pq * 3
    kvp_raw = proj[..., off:off + (Pq + Pv) * 3]

    # global-frame points, coordinate-major layout
    q_pts = frame_apply(_split3_stack(qp_raw))              # [B,N,Pq,3]
    kv_pts = frame_apply(_split3_stack(kvp_raw))            # [B,N,Pq+Pv,3]
    qp_cm = to_cm(q_pts)                                    # [B,N,3*Pq]
    kp_cm = to_cm(kv_pts[:, :, :Pq, :])                     # [B,N,3*Pq]
    vp_cm = to_cm(kv_pts[:, :, Pq:, :])                     # [B,N,3*Pv]

    # single fused neighbor gather [k|k_pts|v|v_pts]; bf16 at the HBM boundary
    node_kv = jnp.concatenate([k, kp_cm, v, vp_cm], axis=-1).astype(jnp.bfloat16)
    nbr = gather_nodes(node_kv, E_idx)                              # [B,N,K,68] bf16
    he = h_E.astype(jnp.bfloat16)                                   # [B,N,K,E]  bf16

    # query-side slab (stays f32): [q | q_pts | R(9) | t(3) | h_V]  (56 lanes)
    qs = jnp.concatenate([q, qp_cm, R.reshape(B, N, 9), t, h_V], axis=-1)

    if mask_attend is not None:
        mask_bias = 100000.0 * (mask_attend.astype(jnp.float32) - 1.0)
    else:
        mask_bias = jnp.zeros((B, N, K), jnp.float32)

    hw = jax.nn.softplus(params['head_weights'])[0] * math.sqrt(
        1.0 / (3.0 * (Pq * 9.0 / 2.0)))
    scalars = jnp.stack([params['bb'][0], hw]).astype(jnp.float32)     # SMEM (2,)

    # packed small vectors: one (16, 4*D) VMEM block, resident across grid steps
    Wv = 4 * D
    padrow = lambda x: jnp.pad(x, (0, Wv - x.shape[0]))
    scale_row = jnp.concatenate([
        jnp.full((C,), math.sqrt(1.0 / (3.0 * C)), jnp.float32),
        jnp.full((3 * Pq,), hw, jnp.float32)])                          # [QK]
    vec_rows = [
        padrow(params['Wb'][:, 0]),     # 0
        padrow(scale_row),              # 1
        padrow(params['bo']),           # 2
        params['b1'],                   # 3
        padrow(params['b2']),           # 4
        padrow(params['ln0_g']),        # 5
        padrow(params['ln0_b']),        # 6
        padrow(params['ln1_g']),        # 7
        padrow(params['ln1_b']),        # 8
    ]
    while len(vec_rows) < 16:
        vec_rows.append(jnp.zeros((Wv,), jnp.float32))
    vecs = jnp.stack(vec_rows, axis=0).astype(jnp.float32)              # (16, 64)

    M = B * N
    h_new = ipa_node_update(
        qs.reshape(M, -1), nbr.reshape(M, K, -1), he.reshape(M, K, -1),
        mask_bias.reshape(M, K), scalars, vecs,
        params['Wo'], params['W1'], params['W2'])

    h_V_out = h_new.reshape(B, N, D)
    if mask_V is not None:
        h_V_out = h_V_out * mask_V[..., None]
    # edge_update=False (default): h_E is returned unchanged.
    return h_V_out, h_E


# --------------------------------- main ------------------------------------
if __name__ == "__main__":
    B, N, K = 2, 8, 4
    key = jax.random.PRNGKey(0)
    k_hv, k_he, k_idx, k_x, k_par = jax.random.split(key, 5)

    h_V = jax.random.normal(k_hv, (B, N, NODE_DIM), jnp.float32)
    h_E = jax.random.normal(k_he, (B, N, K, EDGE_DIM), jnp.float32)
    E_idx = jax.random.randint(k_idx, (B, N, K), 0, N, jnp.int32)
    X = jax.random.normal(k_x, (B, N, 4, 3), jnp.float32) * 3.0

    mask_V = jnp.ones((B, N), jnp.float32).at[:, -1].set(0.0)
    mask_attend = gather_nodes(mask_V[..., None], E_idx)[..., 0] * mask_V[..., None]

    params = init_params(k_par)

    fwd = jax.jit(ipmp_ipa_forward)
    h_V_out, h_E_out = fwd(params, h_V, h_E, E_idx, X, mask_V, mask_attend)
    jax.block_until_ready((h_V_out, h_E_out))

    assert h_V_out.shape == (B, N, NODE_DIM)
    assert h_E_out.shape == (B, N, K, EDGE_DIM)
    assert bool(jnp.all(jnp.isfinite(h_V_out)))
    print("KERNEL_OK")
</pallas_src>

<mosaic_0001>
module attributes {stable_mosaic.version = 11 : i64} {
  func.func @_matmul_bias_kernel(%arg0: i32, %arg1: memref<16x16xf32, #tpu.memory_space<vmem>>, %arg2: memref<16x128xf32, #tpu.memory_space<vmem>>, %arg3: memref<1x128xf32, #tpu.memory_space<vmem>>, %arg4: memref<16x128xf32, #tpu.memory_space<vmem>>) attributes {dimension_semantics = [#tpu.dimension_semantics<parallel>], iteration_bounds = array<i64: 1>, scalar_prefetch = 0 : i64, scratch_operands = 0 : i64, tpu.core_type = #tpu.core_type<tc>, window_params = [{transform_indices = @transform_0, window_bounds = array<i64: 16, 16>}, {pipeline_mode = #tpu.pipeline_mode<synchronous>, transform_indices = @transform_1, window_bounds = array<i64: 16, 128>}, {pipeline_mode = #tpu.pipeline_mode<synchronous>, transform_indices = @transform_2, window_bounds = array<i64: 1, 128>}, {transform_indices = @transform_3, window_bounds = array<i64: 16, 128>}]} {
    %c0 = arith.constant 0 : index
    %c0_0 = arith.constant 0 : index
    %0 = vector.load %arg1[%c0, %c0_0] : memref<16x16xf32, #tpu.memory_space<vmem>>, vector<16x16xf32>
    %c0_1 = arith.constant 0 : index
    %c0_2 = arith.constant 0 : index
    %1 = vector.load %arg2[%c0_1, %c0_2] : memref<16x128xf32, #tpu.memory_space<vmem>>, vector<16x128xf32>
    %cst = arith.constant dense<0.000000e+00> : vector<16x128xf32>
    %2 = tpu.matmul %0, %1, %cst {dimension_numbers = #tpu.dot_dimension_numbers<[1], [0], [0], [1], [0, 0, 1, 1], [], []>} : vector<16x16xf32>, vector<16x128xf32>, vector<16x128xf32> -> vector<16x128xf32>
    %c0_3 = arith.constant 0 : index
    %c0_4 = arith.constant 0 : index
    %3 = vector.load %arg3[%c0_3, %c0_4] : memref<1x128xf32, #tpu.memory_space<vmem>>, vector<1x128xf32>
    %4 = vector.broadcast %3 : vector<1x128xf32> to vector<16x128xf32>
    %5 = arith.addf %2, %4 : vector<16x128xf32>
    %c0_5 = arith.constant 0 : index
    %c0_6 = arith.constant 0 : index
    %6 = vector.load %arg4[%c0_5, %c0_6] : memref<16x128xf32, #tpu.memory_space<vmem>>, vector<16x128xf32>
    tpu.vector_store %arg4[%c0_5, %c0_6], %5 {strides = array<i32>} : memref<16x128xf32, #tpu.memory_space<vmem>>, vector<16x128xf32>,
    return
  }
  func.func @transform_0(%arg0: i32) -> (i32, i32) {
    %c0_i32 = arith.constant 0 : i32
    %c0_i32_0 = arith.constant 0 : i32
    return %arg0, %c0_i32 : i32, i32
  }
  func.func @transform_1(%arg0: i32) -> (i32, i32) {
    %c0_i32 = arith.constant 0 : i32
    %c0_i32_0 = arith.constant 0 : i32
    %c0_i32_1 = arith.constant 0 : i32
    return %c0_i32, %c0_i32_0 : i32, i32
  }
  func.func @transform_2(%arg0: i32) -> (i32, i32) {
    %c0_i32 = arith.constant 0 : i32
    %c0_i32_0 = arith.constant 0 : i32
    %c0_i32_1 = arith.constant 0 : i32
    return %c0_i32, %c0_i32_0 : i32, i32
  }
  func.func @transform_3(%arg0: i32) -> (i32, i32) {
    %c0_i32 = arith.constant 0 : i32
    %c0_i32_0 = arith.constant 0 : i32
    return %arg0, %c0_i32 : i32, i32
  }
}

module attributes {stable_mosaic.version = 11 : i64} {
  func.func @_ipa_node_kernel(%arg0: i32, %arg1: memref<2xf32, #tpu.memory_space<smem>>, %arg2: memref<16x56xf32, #tpu.memory_space<vmem>>, %arg3: memref<16x4x68xbf16, #tpu.memory_space<vmem>>, %arg4: memref<16x4x16xbf16, #tpu.memory_space<vmem>>, %arg5: memref<16x4xf32, #tpu.memory_space<vmem>>, %arg6: memref<16x64xf32, #tpu.memory_space<vmem>>, %arg7: memref<64x16xf32, #tpu.memory_space<vmem>>, %arg8: memref<16x64xf32, #tpu.memory_space<vmem>>, %arg9: memref<64x16xf32, #tpu.memory_space<vmem>>, %arg10: memref<16x16xf32, #tpu.memory_space<vmem>>) attributes {dimension_semantics = [#tpu.dimension_semantics<parallel>], iteration_bounds = array<i64: 1>, scalar_prefetch = 0 : i64, scratch_operands = 0 : i64, tpu.core_type = #tpu.core_type<tc>, window_params = [{transform_indices = @transform_0, window_bounds = array<i64: 2>}, {transform_indices = @transform_1, window_bounds = array<i64: 16, 56>}, {transform_indices = @transform_2, window_bounds = array<i64: 16, 4, 68>}, {transform_indices = @transform_3, window_bounds = array<i64: 16, 4, 16>}, {transform_indices = @transform_4, window_bounds = array<i64: 16, 4>}, {pipeline_mode = #tpu.pipeline_mode<synchronous>, transform_indices = @transform_5, window_bounds = array<i64: 16, 64>}, {pipeline_mode = #tpu.pipeline_mode<synchronous>, transform_indices = @transform_6, window_bounds = array<i64: 64, 16>}, {pipeline_mode = #tpu.pipeline_mode<synchronous>, transform_indices = @transform_7, window_bounds = array<i64: 16, 64>}, {pipeline_mode = #tpu.pipeline_mode<synchronous>, transform_indices = @transform_8, window_bounds = array<i64: 64, 16>}, {transform_indices = @transform_9, window_bounds = array<i64: 16, 16>}]} {
    %c0 = arith.constant 0 : index
    %0 = memref.load %arg1[%c0] : memref<2xf32, #tpu.memory_space<smem>>
    %c1 = arith.constant 1 : index
    %1 = memref.load %arg1[%c1] : memref<2xf32, #tpu.memory_space<smem>>
    %c0_0 = arith.constant 0 : index
    %c0_1 = arith.constant 0 : index
    %2 = vector.load %arg2[%c0_0, %c0_1] : memref<16x56xf32, #tpu.memory_space<vmem>>, vector<16x56xf32>
    %c0_2 = arith.constant 0 : index
    %c0_3 = arith.constant 0 : index
    %c0_4 = arith.constant 0 : index
    %3 = vector.load %arg3[%c0_2, %c0_3, %c0_4] : memref<16x4x68xbf16, #tpu.memory_space<vmem>>, vector<16x4x68xbf16>
    %4 = arith.extf %3 : vector<16x4x68xbf16> to vector<16x4x68xf32>
    %c0_5 = arith.constant 0 : index
    %c0_6 = arith.constant 0 : index
    %c0_7 = arith.constant 0 : index
    %5 = vector.load %arg4[%c0_5, %c0_6, %c0_7] : memref<16x4x16xbf16, #tpu.memory_space<vmem>>, vector<16x4x16xbf16>
    %6 = arith.extf %5 : vector<16x4x16xbf16> to vector<16x4x16xf32>
    %c0_8 = arith.constant 0 : index
    %c0_9 = arith.constant 0 : index
    %7 = vector.load %arg5[%c0_8, %c0_9] : memref<16x4xf32, #tpu.memory_space<vmem>>, vector<16x4xf32>
    %8 = vector.extract_strided_slice %2 {offsets = [0, 0], sizes = [16, 28], strides = [1, 1]} : vector<16x56xf32> to vector<16x28xf32>
    %c1_10 = arith.constant 1 : index
    %c0_11 = arith.constant 0 : index
    %9 = vector.load %arg6[%c1_10, %c0_11] : memref<16x64xf32, #tpu.memory_space<vmem>>, vector<1x28xf32>
    %10 = vector.broadcast %9 : vector<1x28xf32> to vector<16x28xf32>
    %11 = arith.mulf %8, %10 : vector<16x28xf32>
    %12 = vector.extract_strided_slice %2 {offsets = [0, 16], sizes = [16, 12], strides = [1, 1]} : vector<16x56xf32> to vector<16x12xf32>
    %13 = vector.extract_strided_slice %2 {offsets = [0, 28], sizes = [16, 9], strides = [1, 1]} : vector<16x56xf32> to vector<16x9xf32>
    %14 = vector.extract_strided_slice %2 {offsets = [0, 37], sizes = [16, 1], strides = [1, 1]} : vector<16x56xf32> to vector<16x1xf32>
    %15 = vector.extract_strided_slice %2 {offsets = [0, 38], sizes = [16, 1], strides = [1, 1]} : vector<16x56xf32> to vector<16x1xf32>
    %16 = vector.extract_strided_slice %2 {offsets = [0, 39], sizes = [16, 1], strides = [1, 1]} : vector<16x56xf32> to vector<16x1xf32>
    %17 = vector.extract_strided_slice %2 {offsets = [0, 40], sizes = [16, 16], strides = [1, 1]} : vector<16x56xf32> to vector<16x16xf32>
    %18 = vector.shape_cast %11 : vector<16x28xf32> to vector<16x1x28xf32>
    %19 = vector.extract_strided_slice %4 {offsets = [0, 0, 0], sizes = [16, 4, 28], strides = [1, 1, 1]} : vector<16x4x68xf32> to vector<16x4x28xf32>
    %20 = vector.broadcast %18 : vector<16x1x28xf32> to vector<16x4x28xf32>
    %21 = arith.mulf %20, %19 : vector<16x4x28xf32>
    %cst = arith.constant dense<0.000000e+00> : vector<16x4xf32>
    %22 = vector.multi_reduction <add>, %21, %cst [2] : vector<16x4x28xf32> to vector<16x4xf32>
    %23 = vector.extract_strided_slice %4 {offsets = [0, 0, 16], sizes = [16, 4, 12], strides = [1, 1, 1]} : vector<16x4x68xf32> to vector<16x4x12xf32>
    %24 = arith.mulf %23, %23 : vector<16x4x12xf32>
    %cst_12 = arith.constant dense<0.000000e+00> : vector<16x4xf32>
    %25 = vector.multi_reduction <add>, %24, %cst_12 [2] : vector<16x4x12xf32> to vector<16x4xf32>
    %26 = arith.mulf %12, %12 : vector<16x12xf32>
    %cst_13 = arith.constant dense<0.000000e+00> : vector<16xf32>
    %27 = vector.multi_reduction <add>, %26, %cst_13 [1] : vector<16x12xf32> to vector<16xf32>
    %28 = vector.shape_cast %27 : vector<16xf32> to vector<16x1xf32>
    %c0_14 = arith.constant 0 : index
    %c0_15 = arith.constant 0 : index
    %29 = vector.load %arg6[%c0_14, %c0_15] : memref<16x64xf32, #tpu.memory_space<vmem>>, vector<1x16xf32>
    %30 = vector.shape_cast %29 : vector<1x16xf32> to vector<1x1x16xf32>
    %31 = vector.broadcast %30 : vector<1x1x16xf32> to vector<16x4x16xf32>
    %32 = arith.mulf %6, %31 : vector<16x4x16xf32>
    %cst_16 = arith.constant dense<0.000000e+00> : vector<16x4xf32>
    %33 = vector.multi_reduction <add>, %32, %cst_16 [2] : vector<16x4x16xf32> to vector<16x4xf32>
    %34 = vector.broadcast %0 : f32 to vector<16x4xf32>
    %35 = arith.addf %33, %34 : vector<16x4xf32>
    %cst_17 = arith.constant 0.577350259 : f32
    %36 = vector.broadcast %cst_17 : f32 to vector<16x4xf32>
    %37 = arith.mulf %36, %35 : vector<16x4xf32>
    %38 = arith.addf %22, %37 : vector<16x4xf32>
    %cst_18 = arith.constant 5.000000e-01 : f32
    %39 = arith.mulf %cst_18, %1 : f32
    %40 = vector.broadcast %28 : vector<16x1xf32> to vector<16x4xf32>
    %41 = arith.addf %40, %25 : vector<16x4xf32>
    %42 = vector.broadcast %39 : f32 to vector<16x4xf32>
    %43 = arith.mulf %42, %41 : vector<16x4xf32>
    %44 = arith.subf %38, %43 : vector<16x4xf32>
    %45 = arith.addf %44, %7 : vector<16x4xf32>
    %cst_19 = arith.constant dense<0xFF800000> : vector<16xf32>
    %46 = vector.multi_reduction <maximumf>, %45, %cst_19 [1] : vector<16x4xf32> to vector<16xf32>
    %47 = vector.shape_cast %46 : vector<16xf32> to vector<16x1xf32>
    %48 = vector.broadcast %47 : vector<16x1xf32> to vector<16x4xf32>
    %49 = arith.subf %45, %48 : vector<16x4xf32>
    %50 = math.exp %49 : vector<16x4xf32>
    %cst_20 = arith.constant dense<0.000000e+00> : vector<16xf32>
    %51 = vector.multi_reduction <add>, %50, %cst_20 [1] : vector<16x4xf32> to vector<16xf32>
    %52 = vector.shape_cast %51 : vector<16xf32> to vector<16x1xf32>
    %53 = tpu.reciprocal %52 {approx = true} : vector<16x1xf32> -> vector<16x1xf32>
    %54 = vector.broadcast %53 : vector<16x1xf32> to vector<16x4xf32>
    %55 = arith.mulf %50, %54 : vector<16x4xf32>
    %56 = vector.shape_cast %55 : vector<16x4xf32> to vector<16x4x1xf32>
    %57 = vector.extract_strided_slice %4 {offsets = [0, 0, 28], sizes = [16, 4, 40], strides = [1, 1, 1]} : vector<16x4x68xf32> to vector<16x4x40xf32>
    %58 = vector.broadcast %56 : vector<16x4x1xf32> to vector<16x4x40xf32>
    %59 = arith.mulf %58, %57 : vector<16x4x40xf32>
    %cst_21 = arith.constant dense<0.000000e+00> : vector<16x40xf32>
    %60 = vector.multi_reduction <add>, %59, %cst_21 [1] : vector<16x4x40xf32> to vector<16x40xf32>
    %61 = vector.shape_cast %55 : vector<16x4xf32> to vector<16x4x1xf32>
    %62 = vector.broadcast %61 : vector<16x4x1xf32> to vector<16x4x16xf32>
    %63 = arith.mulf %62, %6 : vector<16x4x16xf32>
    %cst_22 = arith.constant dense<0.000000e+00> : vector<16x16xf32>
    %64 = vector.multi_reduction <add>, %63, %cst_22 [1] : vector<16x4x16xf32> to vector<16x16xf32>
    %65 = vector.extract_strided_slice %60 {offsets = [0, 0], sizes = [16, 16], strides = [1, 1]} : vector<16x40xf32> to vector<16x16xf32>
    %66 = vector.extract_strided_slice %60 {offsets = [0, 16], sizes = [16, 8], strides = [1, 1]} : vector<16x40xf32> to vector<16x8xf32>
    %67 = vector.extract_strided_slice %60 {offsets = [0, 24], sizes = [16, 8], strides = [1, 1]} : vector<16x40xf32> to vector<16x8xf32>
    %68 = vector.extract_strided_slice %60 {offsets = [0, 32], sizes = [16, 8], strides = [1, 1]} : vector<16x40xf32> to vector<16x8xf32>
    %69 = vector.broadcast %14 : vector<16x1xf32> to vector<16x8xf32>
    %70 = arith.subf %66, %69 : vector<16x8xf32>
    %71 = vector.broadcast %15 : vector<16x1xf32> to vector<16x8xf32>
    %72 = arith.subf %67, %71 : vector<16x8xf32>
    %73 = vector.broadcast %16 : vector<16x1xf32> to vector<16x8xf32>
    %74 = arith.subf %68, %73 : vector<16x8xf32>
    %75 = vector.extract_strided_slice %13 {offsets = [0, 0], sizes = [16, 1], strides = [1, 1]} : vector<16x9xf32> to vector<16x1xf32>
    %76 = vector.broadcast %75 : vector<16x1xf32> to vector<16x8xf32>
    %77 = arith.mulf %76, %70 : vector<16x8xf32>
    %78 = vector.extract_strided_slice %13 {offsets = [0, 3], sizes = [16, 1], strides = [1, 1]} : vector<16x9xf32> to vector<16x1xf32>
    %79 = vector.broadcast %78 : vector<16x1xf32> to vector<16x8xf32>
    %80 = arith.mulf %79, %72 : vector<16x8xf32>
    %81 = arith.addf %77, %80 : vector<16x8xf32>
    %82 = vector.extract_strided_slice %13 {offsets = [0, 6], sizes = [16, 1], strides = [1, 1]} : vector<16x9xf32> to vector<16x1xf32>
    %83 = vector.broadcast %82 : vector<16x1xf32> to vector<16x8xf32>
    %84 = arith.mulf %83, %74 : vector<16x8xf32>
    %85 = arith.addf %81, %84 : vector<16x8xf32>
    %86 = vector.extract_strided_slice %13 {offsets = [0, 1], sizes = [16, 1], strides = [1, 1]} : vector<16x9xf32> to vector<16x1xf32>
    %87 = vector.broadcast %86 : vector<16x1xf32> to vector<16x8xf32>
    %88 = arith.mulf %87, %70 : vector<16x8xf32>
    %89 = vector.extract_strided_slice %13 {offsets = [0, 4], sizes = [16, 1], strides = [1, 1]} : vector<16x9xf32> to vector<16x1xf32>
    %90 = vector.broadcast %89 : vector<16x1xf32> to vector<16x8xf32>
    %91 = arith.mulf %90, %72 : vector<16x8xf32>
    %92 = arith.addf %88, %91 : vector<16x8xf32>
    %93 = vector.extract_strided_slice %13 {offsets = [0, 7], sizes = [16, 1], strides = [1, 1]} : vector<16x9xf32> to vector<16x1xf32>
    %94 = vector.broadcast %93 : vector<16x1xf32> to vector<16x8xf32>
    %95 = arith.mulf %94, %74 : vector<16x8xf32>
    %96 = arith.addf %92, %95 : vector<16x8xf32>
    %97 = vector.extract_strided_slice %13 {offsets = [0, 2], sizes = [16, 1], strides = [1, 1]} : vector<16x9xf32> to vector<16x1xf32>
    %98 = vector.broadcast %97 : vector<16x1xf32> to vector<16x8xf32>
    %99 = arith.mulf %98, %70 : vector<16x8xf32>
    %100 = vector.extract_strided_slice %13 {offsets = [0, 5], sizes = [16, 1], strides = [1, 1]} : vector<16x9xf32> to vector<16x1xf32>
    %101 = vector.broadcast %100 : vector<16x1xf32> to vector<16x8xf32>
    %102 = arith.mulf %101, %72 : vector<16x8xf32>
    %103 = arith.addf %99, %102 : vector<16x8xf32>
    %104 = vector.extract_strided_slice %13 {offsets = [0, 8], sizes = [16, 1], strides = [1, 1]} : vector<16x9xf32> to vector<16x1xf32>
    %105 = vector.broadcast %104 : vector<16x1xf32> to vector<16x8xf32>
    %106 = arith.mulf %105, %74 : vector<16x8xf32>
    %107 = arith.addf %103, %106 : vector<16x8xf32>
    %108 = arith.mulf %85, %85 : vector<16x8xf32>
    %109 = arith.mulf %96, %96 : vector<16x8xf32>
    %110 = arith.addf %108, %109 : vector<16x8xf32>
    %111 = arith.mulf %107, %107 : vector<16x8xf32>
    %112 = arith.addf %110, %111 : vector<16x8xf32>
    %cst_23 = arith.constant 9.99999993E-9 : f32
    %113 = vector.broadcast %cst_23 : f32 to vector<16x8xf32>
    %114 = arith.addf %112, %113 : vector<16x8xf32>
    %115 = math.sqrt %114 : vector<16x8xf32>
    %c0_24 = arith.constant 0 : index
    %c0_25 = arith.constant 0 : index
    %116 = vector.load %arg7[%c0_24, %c0_25] : memref<64x16xf32, #tpu.memory_space<vmem>>, vector<64x16xf32>
    %c2 = arith.constant 2 : index
    %c0_26 = arith.constant 0 : index
    %117 = vector.load %arg6[%c2, %c0_26] : memref<16x64xf32, #tpu.memory_space<vmem>>, vector<1x16xf32>
    %118 = vector.extract_strided_slice %116 {offsets = [0, 0], sizes = [16, 16], strides = [1, 1]} : vector<64x16xf32> to vector<16x16xf32>
    %cst_27 = arith.constant dense<0.000000e+00> : vector<16x16xf32>
    %119 = tpu.matmul %65, %118, %cst_27 {dimension_numbers = #tpu.dot_dimension_numbers<[1], [0], [0], [1], [0, 0, 1, 1], [], []>} : vector<16x16xf32>, vector<16x16xf32>, vector<16x16xf32> -> vector<16x16xf32>
    %120 = vector.extract_strided_slice %116 {offsets = [16, 0], sizes = [8, 16], strides = [1, 1]} : vector<64x16xf32> to vector<8x16xf32>
    %cst_28 = arith.constant dense<0.000000e+00> : vector<16x16xf32>
    %121 = tpu.matmul %85, %120, %cst_28 {dimension_numbers = #tpu.dot_dimension_numbers<[1], [0], [0], [1], [0, 0, 1, 1], [], []>} : vector<16x8xf32>, vector<8x16xf32>, vector<16x16xf32> -> vector<16x16xf32>
    %122 = arith.addf %119, %121 : vector<16x16xf32>
    %123 = vector.extract_strided_slice %116 {offsets = [24, 0], sizes = [8, 16], strides = [1, 1]} : vector<64x16xf32> to vector<8x16xf32>
    %cst_29 = arith.constant dense<0.000000e+00> : vector<16x16xf32>
    %124 = tpu.matmul %96, %123, %cst_29 {dimension_numbers = #tpu.dot_dimension_numbers<[1], [0], [0], [1], [0, 0, 1, 1], [], []>} : vector<16x8xf32>, vector<8x16xf32>, vector<16x16xf32> -> vector<16x16xf32>
    %125 = arith.addf %122, %124 : vector<16x16xf32>
    %126 = vector.extract_strided_slice %116 {offsets = [32, 0], sizes = [8, 16], strides = [1, 1]} : vector<64x16xf32> to vector<8x16xf32>
    %cst_30 = arith.constant dense<0.000000e+00> : vector<16x16xf32>
    %127 = tpu.matmul %107, %126, %cst_30 {dimension_numbers = #tpu.dot_dimension_numbers<[1], [0], [0], [1], [0, 0, 1, 1], [], []>} : vector<16x8xf32>, vector<8x16xf32>, vector<16x16xf32> -> vector<16x16xf32>
    %128 = arith.addf %125, %127 : vector<16x16xf32>
    %129 = vector.extract_strided_slice %116 {offsets = [40, 0], sizes = [8, 16], strides = [1, 1]} : vector<64x16xf32> to vector<8x16xf32>
    %cst_31 = arith.constant dense<0.000000e+00> : vector<16x16xf32>
    %130 = tpu.matmul %115, %129, %cst_31 {dimension_numbers = #tpu.dot_dimension_numbers<[1], [0], [0], [1], [0, 0, 1, 1], [], []>} : vector<16x8xf32>, vector<8x16xf32>, vector<16x16xf32> -> vector<16x16xf32>
    %131 = arith.addf %128, %130 : vector<16x16xf32>
    %132 = vector.extract_strided_slice %116 {offsets = [48, 0], sizes = [16, 16], strides = [1, 1]} : vector<64x16xf32> to vector<16x16xf32>
    %cst_32 = arith.constant dense<0.000000e+00> : vector<16x16xf32>
    %133 = tpu.matmul %64, %132, %cst_32 {dimension_numbers = #tpu.dot_dimension_numbers<[1], [0], [0], [1], [0, 0, 1, 1], [], []>} : vector<16x16xf32>, vector<16x16xf32>, vector<16x16xf32> -> vector<16x16xf32>
    %134 = arith.addf %131, %133 : vector<16x16xf32>
    %135 = vector.broadcast %117 : vector<1x16xf32> to vector<16x16xf32>
    %136 = arith.addf %134, %135 : vector<16x16xf32>
    %c3 = arith.constant 3 : index
    %c0_33 = arith.constant 0 : index
    %137 = vector.load %arg6[%c3, %c0_33] : memref<16x64xf32, #tpu.memory_space<vmem>>, vector<1x64xf32>
    %c4 = arith.constant 4 : index
    %c0_34 = arith.constant 0 : index
    %138 = vector.load %arg6[%c4, %c0_34] : memref<16x64xf32, #tpu.memory_space<vmem>>, vector<1x16xf32>
    %c5 = arith.constant 5 : index
    %c0_35 = arith.constant 0 : index
    %139 = vector.load %arg6[%c5, %c0_35] : memref<16x64xf32, #tpu.memory_space<vmem>>, vector<1x16xf32>
    %c6 = arith.constant 6 : index
    %c0_36 = arith.constant 0 : index
    %140 = vector.load %arg6[%c6, %c0_36] : memref<16x64xf32, #tpu.memory_space<vmem>>, vector<1x16xf32>
    %c7 = arith.constant 7 : index
    %c0_37 = arith.constant 0 : index
    %141 = vector.load %arg6[%c7, %c0_37] : memref<16x64xf32, #tpu.memory_space<vmem>>, vector<1x16xf32>
    %c8 = arith.constant 8 : index
    %c0_38 = arith.constant 0 : index
    %142 = vector.load %arg6[%c8, %c0_38] : memref<16x64xf32, #tpu.memory_space<vmem>>, vector<1x16xf32>
    %143 = arith.addf %17, %136 : vector<16x16xf32>
    %cst_39 = arith.constant dense<0.000000e+00> : vector<16xf32>
    %144 = vector.multi_reduction <add>, %143, %cst_39 [1] : vector<16x16xf32> to vector<16xf32>
    %145 = vector.shape_cast %144 : vector<16xf32> to vector<16x1xf32>
    %cst_40 = arith.constant 1.600000e+01 : f32
    %146 = vector.broadcast %cst_40 : f32 to vector<16x1xf32>
    %147 = arith.divf %145, %146 : vector<16x1xf32>
    %148 = vector.broadcast %147 : vector<16x1xf32> to vector<16x16xf32>
    %149 = arith.subf %143, %148 : vector<16x16xf32>
    %150 = arith.mulf %149, %149 : vector<16x16xf32>
    %cst_41 = arith.constant dense<0.000000e+00> : vector<16xf32>
    %151 = vector.multi_reduction <add>, %150, %cst_41 [1] : vector<16x16xf32> to vector<16xf32>
    %152 = vector.shape_cast %151 : vector<16xf32> to vector<16x1xf32>
    %cst_42 = arith.constant 1.600000e+01 : f32
    %153 = vector.broadcast %cst_42 : f32 to vector<16x1xf32>
    %154 = arith.divf %152, %153 : vector<16x1xf32>
    %cst_43 = arith.constant 9.99999974E-6 : f32
    %155 = vector.broadcast %cst_43 : f32 to vector<16x1xf32>
    %156 = arith.addf %154, %155 : vector<16x1xf32>
    %157 = math.rsqrt %156 : vector<16x1xf32>
    %158 = vector.broadcast %157 : vector<16x1xf32> to vector<16x16xf32>
    %159 = arith.mulf %149, %158 : vector<16x16xf32>
    %160 = vector.broadcast %139 : vector<1x16xf32> to vector<16x16xf32>
    %161 = arith.mulf %159, %160 : vector<16x16xf32>
    %162 = vector.broadcast %140 : vector<1x16xf32> to vector<16x16xf32>
    %163 = arith.addf %161, %162 : vector<16x16xf32>
    %c0_44 = arith.constant 0 : index
    %c0_45 = arith.constant 0 : index
    %164 = vector.load %arg8[%c0_44, %c0_45] : memref<16x64xf32, #tpu.memory_space<vmem>>, vector<16x64xf32>
    %cst_46 = arith.constant dense<0.000000e+00> : vector<16x64xf32>
    %165 = tpu.matmul %163, %164, %cst_46 {dimension_numbers = #tpu.dot_dimension_numbers<[1], [0], [0], [1], [0, 0, 1, 1], [], []>} : vector<16x16xf32>, vector<16x64xf32>, vector<16x64xf32> -> vector<16x64xf32>
    %166 = vector.broadcast %137 : vector<1x64xf32> to vector<16x64xf32>
    %167 = arith.addf %165, %166 : vector<16x64xf32>
    %cst_47 = arith.constant 0.000000e+00 : f32
    %168 = vector.broadcast %cst_47 : f32 to vector<16x64xf32>
    %169 = arith.maximumf %167, %168 : vector<16x64xf32>
    %c0_48 = arith.constant 0 : index
    %c0_49 = arith.constant 0 : index
    %170 = vector.load %arg9[%c0_48, %c0_49] : memref<64x16xf32, #tpu.memory_space<vmem>>, vector<64x16xf32>
    %cst_50 = arith.constant dense<0.000000e+00> : vector<16x16xf32>
    %171 = tpu.matmul %169, %170, %cst_50 {dimension_numbers = #tpu.dot_dimension_numbers<[1], [0], [0], [1], [0, 0, 1, 1], [], []>} : vector<16x64xf32>, vector<64x16xf32>, vector<16x16xf32> -> vector<16x16xf32>
    %172 = vector.broadcast %138 : vector<1x16xf32> to vector<16x16xf32>
    %173 = arith.addf %171, %172 : vector<16x16xf32>
    %174 = arith.addf %163, %173 : vector<16x16xf32>
    %cst_51 = arith.constant dense<0.000000e+00> : vector<16xf32>
    %175 = vector.multi_reduction <add>, %174, %cst_51 [1] : vector<16x16xf32> to vector<16xf32>
    %176 = vector.shape_cast %175 : vector<16xf32> to vector<16x1xf32>
    %cst_52 = arith.constant 1.600000e+01 : f32
    %177 = vector.broadcast %cst_52 : f32 to vector<16x1xf32>
    %178 = arith.divf %176, %177 : vector<16x1xf32>
    %179 = vector.broadcast %178 : vector<16x1xf32> to vector<16x16xf32>
    %180 = arith.subf %174, %179 : vector<16x16xf32>
    %181 = arith.mulf %180, %180 : vector<16x16xf32>
    %cst_53 = arith.constant dense<0.000000e+00> : vector<16xf32>
    %182 = vector.multi_reduction <add>, %181, %cst_53 [1] : vector<16x16xf32> to vector<16xf32>
    %183 = vector.shape_cast %182 : vector<16xf32> to vector<16x1xf32>
    %cst_54 = arith.constant 1.600000e+01 : f32
    %184 = vector.broadcast %cst_54 : f32 to vector<16x1xf32>
    %185 = arith.divf %183, %184 : vector<16x1xf32>
    %cst_55 = arith.constant 9.99999974E-6 : f32
    %186 = vector.broadcast %cst_55 : f32 to vector<16x1xf32>
    %187 = arith.addf %185, %186 : vector<16x1xf32>
    %188 = math.rsqrt %187 : vector<16x1xf32>
    %189 = vector.broadcast %188 : vector<16x1xf32> to vector<16x16xf32>
    %190 = arith.mulf %180, %189 : vector<16x16xf32>
    %191 = vector.broadcast %141 : vector<1x16xf32> to vector<16x16xf32>
    %192 = arith.mulf %190, %191 : vector<16x16xf32>
    %193 = vector.broadcast %142 : vector<1x16xf32> to vector<16x16xf32>
    %194 = arith.addf %192, %193 : vector<16x16xf32>
    %c0_56 = arith.constant 0 : index
    %c0_57 = arith.constant 0 : index
    %195 = vector.load %arg10[%c0_56, %c0_57] : memref<16x16xf32, #tpu.memory_space<vmem>>, vector<16x16xf32>
    tpu.vector_store %arg10[%c0_56, %c0_57], %194 {strides = array<i32>} : memref<16x16xf32, #tpu.memory_space<vmem>>, vector<16x16xf32>,
    return
  }
  func.func @transform_0(%arg0: i32) -> i32 {
    %c0_i32 = arith.constant 0 : i32
    %c0_i32_0 = arith.constant 0 : i32
    return %c0_i32 : i32
  }
  func.func @transform_1(%arg0: i32) -> (i32, i32) {
    %c0_i32 = arith.constant 0 : i32
    %c0_i32_0 = arith.constant 0 : i32
    return %arg0, %c0_i32 : i32, i32
  }
  func.func @transform_2(%arg0: i32) -> (i32, i32, i32) {
    %c0_i32 = arith.constant 0 : i32
    %c0_i32_0 = arith.constant 0 : i32
    %c0_i32_1 = arith.constant 0 : i32
    return %arg0, %c0_i32, %c0_i32_0 : i32, i32, i32
  }
  func.func @transform_3(%arg0: i32) -> (i32, i32, i32) {
    %c0_i32 = arith.constant 0 : i32
    %c0_i32_0 = arith.constant 0 : i32
    %c0_i32_1 = arith.constant 0 : i32
    return %arg0, %c0_i32, %c0_i32_0 : i32, i32, i32
  }
  func.func @transform_4(%arg0: i32) -> (i32, i32) {
    %c0_i32 = arith.constant 0 : i32
    %c0_i32_0 = arith.constant 0 : i32
    return %arg0, %c0_i32 : i32, i32
  }
  func.func @transform_5(%arg0: i32) -> (i32, i32) {
    %c0_i32 = arith.constant 0 : i32
    %c0_i32_0 = arith.constant 0 : i32
    %c0_i32_1 = arith.constant 0 : i32
    return %c0_i32, %c0_i32_0 : i32, i32
  }
  func.func @transform_6(%arg0: i32) -> (i32, i32) {
    %c0_i32 = arith.constant 0 : i32
    %c0_i32_0 = arith.constant 0 : i32
    %c0_i32_1 = arith.constant 0 : i32
    return %c0_i32, %c0_i32_0 : i32, i32
  }
  func.func @transform_7(%arg0: i32) -> (i32, i32) {
    %c0_i32 = arith.constant 0 : i32
    %c0_i32_0 = arith.constant 0 : i32
    %c0_i32_1 = arith.constant 0 : i32
    return %c0_i32, %c0_i32_0 : i32, i32
  }
  func.func @transform_8(%arg0: i32) -> (i32, i32) {
    %c0_i32 = arith.constant 0 : i32
    %c0_i32_0 = arith.constant 0 : i32
    %c0_i32_1 = arith.constant 0 : i32
    return %c0_i32, %c0_i32_0 : i32, i32
  }
  func.func @transform_9(%arg0: i32) -> (i32, i32) {
    %c0_i32 = arith.constant 0 : i32
    %c0_i32_0 = arith.constant 0 : i32
    return %arg0, %c0_i32 : i32, i32
  }
}

</mosaic_0001>

<llo_original>
// kernel: ipmp_ipa_forward.2
$region0: #{ipmp_ipa_forward.2}
  #allocation0 [shape = 'u32[]', space=smem, size = 0x4, offset = 0x4, fixed_abs, tag = 'smem constant byte address 0x4 - core index']
  #allocation1 [shape = 'u32[144,128]{1,0:T(1,128)}', space=vmem, size = 0x12000, scoped, tag = 'internal scratch']
  %s0 = inlined_call_operand.vmem [shape: f32[16,16], index: 0, kind: input, shape index: {}]
  %s1 = inlined_call_operand.vmem [shape: f32[16,128], index: 1, kind: input, shape index: {}]
  %s2 = inlined_call_operand.vmem [shape: f32[1,128], index: 2, kind: input, shape index: {}]
  %s3 = inlined_call_operand.vmem [shape: f32[16,128], index: 3, kind: output, shape index: {}]
  %s4 = sld [smem:[#allocation0]]
  $region22: #{ipmp_ipa_forward.2} parent=0
    _
  %s6 = ssub.s32 1, %s4
  %s7 = scalar_select 0, %s6, %s4
  // Predicated region
  $region2: #{ipmp_ipa_forward.2} parent=0 // pred_check
    _
  $region3: #{ipmp_ipa_forward.2} parent=0 // pred_check_branch
    %9 = sbr.rel (0) target = $region5
  $region4: #{ipmp_ipa_forward.2} parent=0 // pred_region
    _
  $region5: #{ipmp_ipa_forward.2} parent=0 // pred_fallthru
    _
  // Predicated region
  $region6: #{ipmp_ipa_forward.2} parent=0 // pred_check
    _
  $region7: #{ipmp_ipa_forward.2} parent=0 // pred_check_branch
    %11 = sbr.rel (0) target = $region9
  $region8: #{ipmp_ipa_forward.2} parent=0 // pred_region
    _
  $region9: #{ipmp_ipa_forward.2} parent=0 // pred_fallthru
    _
  // Predicated region
  $region10: #{ipmp_ipa_forward.2} parent=0 // pred_check
    _
  $region11: #{ipmp_ipa_forward.2} parent=0 // pred_check_branch
    %13 = sbr.rel (0) target = $region13
  $region12: #{ipmp_ipa_forward.2} parent=0 // pred_region
    _
  $region13: #{ipmp_ipa_forward.2} parent=0 // pred_fallthru
    _
  %v14 = vld [vmem:[%s0] sm:$0xff]
  %v15 = vld [vmem:[%s0 + $0x8] sm:$0xff]
  %v16 = vld [vmem:[%s1] sm:$0xff]
  %v17 = vld [vmem:[%s1 + $0x8] sm:$0xff]
  %v18 = vld [vmem:[%s2] sm:$0x1]
  %v20 = vlaneseq
  %v21 = vshrl.u32 %v20, 7
  %v22 = vsub.s32 0, %v21
  %v23 = vrot.slane %v18, %v22
  %vm25 = vcmask 130048
  %v27 = vsel %vm25, %v14, 0
  %v30 = vsel %vm25, %v15, 0
  %32 = vmatprep.subr.mxu0 0.0
  %33 = vmatpush1.msra.mxu0 %v16
  %34 = vmatprep.subr.mxu0 0.0
  %35 = vmatpush1.msra.mxu0 %v17
  %36 = vmatprep.subr.mxu0 0.0
  %37 = vmatpush1.msra.mxu0 0.0
  %38 = vmatprep.subr.mxu0 0.0
  %39 = vmatpush1.msra.mxu0 0.0
  %40 = vmatprep.subr.mxu0 0.0
  %41 = vmatpush1.msra.mxu0 0.0
  %42 = vmatprep.subr.mxu0 0.0
  %43 = vmatpush1.msra.mxu0 0.0
  %44 = vmatprep.subr.mxu0 0.0
  %45 = vmatpush1.msra.mxu0 0.0
  %46 = vmatprep.subr.mxu0 0.0
  %47 = vmatpush1.msra.mxu0 0.0
  %48 = vmatprep.subr.mxu0 0.0
  %49 = vmatpush1.msra.mxu0 0.0
  %50 = vmatprep.subr.mxu0 0.0
  %51 = vmatpush1.msra.mxu0 0.0
  %52 = vmatprep.subr.mxu0 0.0
  %53 = vmatpush1.msra.mxu0 0.0
  %54 = vmatprep.subr.mxu0 0.0
  %55 = vmatpush1.msra.mxu0 0.0
  %56 = vmatprep.subr.mxu0 0.0
  %57 = vmatpush1.msra.mxu0 0.0
  %58 = vmatprep.subr.mxu0 0.0
  %59 = vmatpush1.msra.mxu0 0.0
  %60 = vmatprep.subr.mxu0 0.0
  %61 = vmatpush1.msra.mxu0 0.0
  %62 = vmatprep.subr.mxu0 0.0
  %63 = vmatpush1.msra.mxu0 0.0
  %64 = vmatprep.subr.mxu0 0.0
  %65 = vmatpush1.msra.mxu0 0.0
  %66 = vmatprep.subr.mxu0 0.0
  %67 = vmatpush1.msra.mxu0 0.0
  %68 = vmatprep.subr.mxu0 0.0
  %69 = vmatpush1.msra.mxu0 0.0
  %70 = vmatprep.subr.mxu0 0.0
  %71 = vmatpush1.msra.mxu0 0.0
  %72 = vmatprep.subr.mxu0 0.0
  %73 = vmatpush1.msra.mxu0 0.0
  %74 = vmatprep.subr.mxu0 0.0
  %75 = vmatpush1.msra.mxu0 0.0
  %76 = vmatprep.subr.mxu0 0.0
  %77 = vmatpush1.msra.mxu0 0.0
  %78 = vmatprep.subr.mxu0 0.0
  %79 = vmatpush1.msra.mxu0 0.0
  %80 = vmatprep.subr.mxu0 0.0
  %81 = vmatpush1.msra.mxu0 0.0
  %82 = vmatprep.subr.mxu0 0.0
  %83 = vmatpush1.msra.mxu0 0.0
  %84 = vmatprep.subr.mxu0 0.0
  %85 = vmatpush1.msra.mxu0 0.0
  %86 = vmatprep.subr.mxu0 0.0
  %87 = vmatpush1.msra.mxu0 0.0
  %88 = vmatprep.subr.mxu0 0.0
  %89 = vmatpush1.msra.mxu0 0.0
  %90 = vmatprep.subr.mxu0 0.0
  %91 = vmatpush1.msra.mxu0 0.0
  %92 = vmatprep.subr.mxu0 0.0
  %93 = vmatpush1.msra.mxu0 0.0
  %94 = vmatprep.subr.mxu0 0.0
  %95 = vmatpush1.msra.mxu0 0.0
  %96 = vmatprep.mubr.f32.mxu0 0.0
  %97 = vmatmul.mubr.f32.gmra.mrb[0].mxu0 %v27
  %v98 = vpop.f32.mrb[0].mxu0
  %v99 = vadd.f32 %v23, %v98
  %v100 = vpop.f32.mrb[0].mxu0
  %101 = vmatprep.mubr.f32.mxu0 0.0
  %102 = vmatmul.mubr.f32.gmra.mrb[0].mxu0 %v30
  %v103 = vpop.f32.mrb[0].mxu0
  %v104 = vadd.f32 %v23, %v103
  %v105 = vpop.f32.mrb[0].mxu0
  %106 = vdwg.mxu0
  %107 = vst [vmem:[%s3] sm:$0xff] %v99
  %108 = vst [vmem:[%s3 + $0x8] sm:$0xff] %v104
  // Predicated region
  $region14: #{ipmp_ipa_forward.2} parent=0 // pred_check
    _
  $region15: #{ipmp_ipa_forward.2} parent=0 // pred_check_branch
    %110 = sbr.rel (0) target = $region17
  $region16: #{ipmp_ipa_forward.2} parent=0 // pred_region
    _
  $region17: #{ipmp_ipa_forward.2} parent=0 // pred_fallthru
    _
  // Predicated region
  $region18: #{ipmp_ipa_forward.2} parent=0 // pred_check
    _
  $region19: #{ipmp_ipa_forward.2} parent=0 // pred_check_branch
    %112 = sbr.rel (0) target = $region21
  $region20: #{ipmp_ipa_forward.2} parent=0 // pred_region
    _
  $region21: #{ipmp_ipa_forward.2} parent=0 // pred_fallthru
    _

// kernel: ipmp_ipa_forward.3
$region0: #{ipmp_ipa_forward.3}
  #allocation0 [shape = 'u32[]', space=smem, size = 0x4, offset = 0x4, fixed_abs, tag = 'smem constant byte address 0x4 - core index']
  #allocation1 [shape = 'u32[144,128]{1,0:T(1,128)}', space=vmem, size = 0x12000, scoped, tag = 'internal scratch']
  %s0 = inlined_call_operand.vmem [shape: f32[2], index: 0, kind: input, shape index: {}]
  %s1 = inlined_call_operand.vmem [shape: f32[16,56], index: 1, kind: input, shape index: {}]
  %s2 = inlined_call_operand.vmem [shape: bf16[16,4,68], index: 2, kind: input, shape index: {}]
  %s3 = inlined_call_operand.vmem [shape: bf16[16,4,16], index: 3, kind: input, shape index: {}]
  %s4 = inlined_call_operand.vmem [shape: f32[16,4], index: 4, kind: input, shape index: {}]
  %s5 = inlined_call_operand.vmem [shape: f32[16,64], index: 5, kind: input, shape index: {}]
  %s6 = inlined_call_operand.vmem [shape: f32[64,16], index: 6, kind: input, shape index: {}]
  %s7 = inlined_call_operand.vmem [shape: f32[16,64], index: 7, kind: input, shape index: {}]
  %s8 = inlined_call_operand.vmem [shape: f32[64,16], index: 8, kind: input, shape index: {}]
  %s9 = inlined_call_operand.vmem [shape: f32[16,16], index: 9, kind: output, shape index: {}]
  %s10 = sld [smem:[#allocation0]]
  $region50: #{ipmp_ipa_forward.3} parent=0
    _
  %s12 = ssub.s32 1, %s10
  %s13 = scalar_select 0, %s12, %s10
  $region1: #{ipmp_ipa_forward.3} parent=0
    #allocation2 [shape = 'u8[512]{0}', space=smem, size = 0x200, scoped, tag = 'input window, operand 0, single buffered']
    #allocation3 [shape = 's32[1]{0}', space=sflag, size = 0x4, scoped, tag = 'scoped memory for ipmp_ipa_forward.3']
    %14 = vsyncpa [#allocation3], 0
    // Predicated region
    $region2: #{ipmp_ipa_forward.3} parent=1 // pred_check
      _
    $region3: #{ipmp_ipa_forward.3} parent=1 // pred_check_branch
      %16 = sbr.rel (0) target = $region5
    $region4: #{ipmp_ipa_forward.3} parent=1 // pred_region
      %s18 = ssub.s32 16, 16
      %19 = vsyncadd [#allocation3], %s18
      %s21 = sshll.u32 %s0, 4
      %s22 = int_to_ptr.vmem [resolvable:$true] %s21
      %24 = dma.vmem_to_smem %s22, 16, [#allocation2], [#allocation3]
    $region5: #{ipmp_ipa_forward.3} parent=1 // pred_fallthru
      _
    // Predicated region
    $region6: #{ipmp_ipa_forward.3} parent=1 // pred_check
      _
    $region7: #{ipmp_ipa_forward.3} parent=1 // pred_check_branch
      %26 = sbr.rel (0) target = $region9
    $region8: #{ipmp_ipa_forward.3} parent=1 // pred_region
      _
    $region9: #{ipmp_ipa_forward.3} parent=1 // pred_fallthru
      _
    // Predicated region
    $region10: #{ipmp_ipa_forward.3} parent=1 // pred_check
      _
    $region11: #{ipmp_ipa_forward.3} parent=1 // pred_check_branch
      %28 = sbr.rel (0) target = $region13
    $region12: #{ipmp_ipa_forward.3} parent=1 // pred_region
      _
    $region13: #{ipmp_ipa_forward.3} parent=1 // pred_fallthru
      _
    // Predicated region
    $region14: #{ipmp_ipa_forward.3} parent=1 // pred_check
      _
    $region15: #{ipmp_ipa_forward.3} parent=1 // pred_check_branch
      %30 = sbr.rel (0) target = $region17
    $region16: #{ipmp_ipa_forward.3} parent=1 // pred_region
      _
    $region17: #{ipmp_ipa_forward.3} parent=1 // pred_fallthru
      _
    // Predicated region
    $region18: #{ipmp_ipa_forward.3} parent=1 // pred_check
      _
    $region19: #{ipmp_ipa_forward.3} parent=1 // pred_check_branch
      %32 = sbr.rel (0) target = $region21
    $region20: #{ipmp_ipa_forward.3} parent=1 // pred_region
      _
    $region21: #{ipmp_ipa_forward.3} parent=1 // pred_fallthru
      _
    // Predicated region
    $region22: #{ipmp_ipa_forward.3} parent=1 // pred_check
      _
    $region23: #{ipmp_ipa_forward.3} parent=1 // pred_check_branch
      %34 = sbr.rel (0) target = $region25
    $region24: #{ipmp_ipa_forward.3} parent=1 // pred_region
      _
    $region25: #{ipmp_ipa_forward.3} parent=1 // pred_fallthru
      _
    // Predicated region
    $region26: #{ipmp_ipa_forward.3} parent=1 // pred_check
      _
    $region27: #{ipmp_ipa_forward.3} parent=1 // pred_check_branch
      %36 = sbr.rel (0) target = $region29
    $region28: #{ipmp_ipa_forward.3} parent=1 // pred_region
      _
    $region29: #{ipmp_ipa_forward.3} parent=1 // pred_fallthru
      _
    // Predicated region
    $region30: #{ipmp_ipa_forward.3} parent=1 // pred_check
      _
    $region31: #{ipmp_ipa_forward.3} parent=1 // pred_check_branch
      %38 = sbr.rel (0) target = $region33
    $region32: #{ipmp_ipa_forward.3} parent=1 // pred_region
      _
    $region33: #{ipmp_ipa_forward.3} parent=1 // pred_fallthru
      _
    // Predicated region
    $region34: #{ipmp_ipa_forward.3} parent=1 // pred_check
      _
    $region35: #{ipmp_ipa_forward.3} parent=1 // pred_check_branch
      %40 = sbr.rel (0) target = $region37
    $region36: #{ipmp_ipa_forward.3} parent=1 // pred_region
      _
    $region37: #{ipmp_ipa_forward.3} parent=1 // pred_fallthru
      _
    // Predicated region
    $region38: #{ipmp_ipa_forward.3} parent=1 // pred_check
      _
    $region39: #{ipmp_ipa_forward.3} parent=1 // pred_check_branch
      %42 = sbr.rel (0) target = $region41
    $region40: #{ipmp_ipa_forward.3} parent=1 // pred_region
      %43 = dma.done [#allocation3], 16
    $region41: #{ipmp_ipa_forward.3} parent=1 // pred_fallthru
      _
    %44 = sfence
    %s45 = sld [smem:[#allocation2]]
    %s46 = sld [smem:[#allocation2 + $0x1]]
    %v47 = vld [vmem:[%s1] sm:$0xff]
    %v48 = vld [vmem:[%s1 + $0x8] sm:$0xff]
    %v49 = vld [vmem:[%s2] sm:$0x3]
    %v50 = vld [vmem:[%s2 + $0x2] sm:$0x3]
    %v51 = vld [vmem:[%s2 + $0x4] sm:$0x3]
    %v52 = vld [vmem:[%s2 + $0x6] sm:$0x3]
    %v53 = vld [vmem:[%s2 + $0x8] sm:$0x3]
    %v54 = vld [vmem:[%s2 + $0xa] sm:$0x3]
    %v55 = vld [vmem:[%s2 + $0xc] sm:$0x3]
    %v56 = vld [vmem:[%s2 + $0xe] sm:$0x3]
    %v57 = vld [vmem:[%s2 + $0x10] sm:$0x3]
    %v58 = vld [vmem:[%s2 + $0x12] sm:$0x3]
    %v59 = vld [vmem:[%s2 + $0x14] sm:$0x3]
    %v60 = vld [vmem:[%s2 + $0x16] sm:$0x3]
    %v61 = vld [vmem:[%s2 + $0x18] sm:$0x3]
    %v62 = vld [vmem:[%s2 + $0x1a] sm:$0x3]
    %v63 = vld [vmem:[%s2 + $0x1c] sm:$0x3]
    %v64 = vld [vmem:[%s2 + $0x1e] sm:$0x3]
    %v65 = vunpack.c.l.bf16 %v49
    %v66 = vunpack.c.l.bf16 %v50
    %v67 = vunpack.c.l.bf16 %v51
    %v68 = vunpack.c.l.bf16 %v52
    %v69 = vunpack.c.l.bf16 %v53
    %v70 = vunpack.c.l.bf16 %v54
    %v71 = vunpack.c.l.bf16 %v55
    %v72 = vunpack.c.l.bf16 %v56
    %v73 = vunpack.c.l.bf16 %v57
    %v74 = vunpack.c.l.bf16 %v58
    %v75 = vunpack.c.l.bf16 %v59
    %v76 = vunpack.c.l.bf16 %v60
    %v77 = vunpack.c.l.bf16 %v61
    %v78 = vunpack.c.l.bf16 %v62
    %v79 = vunpack.c.l.bf16 %v63
    %v80 = vunpack.c.l.bf16 %v64
    %v81 = vld [vmem:[%s3] sm:$0x3]
    %v82 = vld [vmem:[%s3 + $0x2] sm:$0x3]
    %v83 = vld [vmem:[%s3 + $0x4] sm:$0x3]
    %v84 = vld [vmem:[%s3 + $0x6] sm:$0x3]
    %v85 = vld [vmem:[%s3 + $0x8] sm:$0x3]
    %v86 = vld [vmem:[%s3 + $0xa] sm:$0x3]
    %v87 = vld [vmem:[%s3 + $0xc] sm:$0x3]
    %v88 = vld [vmem:[%s3 + $0xe] sm:$0x3]
    %v89 = vld [vmem:[%s3 + $0x10] sm:$0x3]
    %v90 = vld [vmem:[%s3 + $0x12] sm:$0x3]
    %v91 = vld [vmem:[%s3 + $0x14] sm:$0x3]
    %v92 = vld [vmem:[%s3 + $0x16] sm:$0x3]
    %v93 = vld [vmem:[%s3 + $0x18] sm:$0x3]
    %v94 = vld [vmem:[%s3 + $0x1a] sm:$0x3]
    %v95 = vld [vmem:[%s3 + $0x1c] sm:$0x3]
    %v96 = vld [vmem:[%s3 + $0x1e] sm:$0x3]
    %v97 = vunpack.c.l.bf16 %v81
    %v98 = vunpack.c.l.bf16 %v82
    %v99 = vunpack.c.l.bf16 %v83
    %v100 = vunpack.c.l.bf16 %v84
    %v101 = vunpack.c.l.bf16 %v85
    %v102 = vunpack.c.l.bf16 %v86
    %v103 = vunpack.c.l.bf16 %v87
    %v104 = vunpack.c.l.bf16 %v88
    %v105 = vunpack.c.l.bf16 %v89
    %v106 = vunpack.c.l.bf16 %v90
    %v107 = vunpack.c.l.bf16 %v91
    %v108 = vunpack.c.l.bf16 %v92
    %v109 = vunpack.c.l.bf16 %v93
    %v110 = vunpack.c.l.bf16 %v94
    %v111 = vunpack.c.l.bf16 %v95
    %v112 = vunpack.c.l.bf16 %v96
    %v113 = vld [vmem:[%s4] sm:$0xff]
    %v114 = vld [vmem:[%s4 + $0x8] sm:$0xff]
    %v115 = vld [vmem:[%s5 + $0x1] sm:$0x1]
    %v116 = vlaneseq
    %v117 = vshrl.u32 %v116, 7
    %v118 = vsub.s32 0, %v117
    %v119 = vrot.slane %v115, %v118
    %v120 = vmul.f32 %v47, %v119
    %v121 = vmul.f32 %v48, %v119
    %v124 = vcombine.high %v120, %v120
    %v126 = vunpack.c.l.s4 1966171168
    %v127 = vunpack.c.0.s8 %v126
    %v128 = vlaneseq
    %v129 = vshrl.u32 %v128, 7
    %v130 = vsub.s32 %v127, %v129
    %v131 = vrot.slane %v120, %v130
    %v133 = vunpack.c.l.s4 1966171168
    %v134 = vunpack.c.0.s8 %v133
    %v135 = vlaneseq
    %v136 = vshrl.u32 %v135, 7
    %v137 = vsub.s32 %v134, %v136
    %v138 = vrot.slane %v124, %v137
    %v139 = vcombine.high %v131, %v131
    %v140 = vcombine.high %v138, %v138
    %v142 = vunpack.c.l.s4 1966171168
    %v143 = vunpack.c.0.s8 %v142
    %v144 = vlaneseq
    %v145 = vshrl.u32 %v144, 7
    %v146 = vsub.s32 %v143, %v145
    %v147 = vrot.slane %v131, %v146
    %v149 = vunpack.c.l.s4 1966171168
    %v150 = vunpack.c.0.s8 %v149
    %v151 = vlaneseq
    %v152 = vshrl.u32 %v151, 7
    %v153 = vsub.s32 %v150, %v152
    %v154 = vrot.slane %v138, %v153
    %v156 = vunpack.c.l.s4 1966171168
    %v157 = vunpack.c.0.s8 %v156
    %v158 = vlaneseq
    %v159 = vshrl.u32 %v158, 7
    %v160 = vsub.s32 %v157, %v159
    %v161 = vrot.slane %v139, %v160
    %v163 = vunpack.c.l.s4 1966171168
    %v164 = vunpack.c.0.s8 %v163
    %v165 = vlaneseq
    %v166 = vshrl.u32 %v165, 7
    %v167 = vsub.s32 %v164, %v166
    %v168 = vrot.slane %v140, %v167
    %v169 = vcombine.high %v147, %v147
    %v170 = vcombine.high %v154, %v154
    %v171 = vcombine.high %v161, %v161
    %v172 = vcombine.high %v168, %v168
    %v173 = vcombine.high %v121, %v121
    %v175 = vunpack.c.l.s4 1966171168
    %v176 = vunpack.c.0.s8 %v175
    %v177 = vlaneseq
    %v178 = vshrl.u32 %v177, 7
    %v179 = vsub.s32 %v176, %v178
    %v180 = vrot.slane %v121, %v179
    %v182 = vunpack.c.l.s4 1966171168
    %v183 = vunpack.c.0.s8 %v182
    %v184 = vlaneseq
    %v185 = vshrl.u32 %v184, 7
    %v186 = vsub.s32 %v183, %v185
    %v187 = vrot.slane %v173, %v186
    %v188 = vcombine.high %v180, %v180
    %v189 = vcombine.high %v187, %v187
    %v191 = vunpack.c.l.s4 1966171168
    %v192 = vunpack.c.0.s8 %v191
    %v193 = vlaneseq
    %v194 = vshrl.u32 %v193, 7
    %v195 = vsub.s32 %v192, %v194
    %v196 = vrot.slane %v180, %v195
    %v198 = vunpack.c.l.s4 1966171168
    %v199 = vunpack.c.0.s8 %v198
    %v200 = vlaneseq
    %v201 = vshrl.u32 %v200, 7
    %v202 = vsub.s32 %v199, %v201
    %v203 = vrot.slane %v187, %v202
    %v205 = vunpack.c.l.s4 1966171168
    %v206 = vunpack.c.0.s8 %v205
    %v207 = vlaneseq
    %v208 = vshrl.u32 %v207, 7
    %v209 = vsub.s32 %v206, %v208
    %v210 = vrot.slane %v188, %v209
    %v212 = vunpack.c.l.s4 1966171168
    %v213 = vunpack.c.0.s8 %v212
    %v214 = vlaneseq
    %v215 = vshrl.u32 %v214, 7
    %v216 = vsub.s32 %v213, %v215
    %v217 = vrot.slane %v189, %v216
    %v218 = vcombine.high %v196, %v196
    %v219 = vcombine.high %v203, %v203
    %v220 = vcombine.high %v210, %v210
    %v221 = vcombine.high %v217, %v217
    %v222 = vlaneseq
    %v223 = vshrl.u32 %v222, 7
    %v224 = vsub.s32 0, %v223
    %v225 = vrot.slane %v147, %v224
    %v226 = vlaneseq
    %v227 = vshrl.u32 %v226, 7
    %v228 = vsub.s32 0, %v227
    %v229 = vrot.slane %v161, %v228
    %v230 = vlaneseq
    %v231 = vshrl.u32 %v230, 7
    %v232 = vsub.s32 0, %v231
    %v233 = vrot.slane %v169, %v232
    %v234 = vlaneseq
    %v235 = vshrl.u32 %v234, 7
    %v236 = vsub.s32 0, %v235
    %v237 = vrot.slane %v171, %v236
    %v238 = vlaneseq
    %v239 = vshrl.u32 %v238, 7
    %v240 = vsub.s32 0, %v239
    %v241 = vrot.slane %v154, %v240
    %v242 = vlaneseq
    %v243 = vshrl.u32 %v242, 7
    %v244 = vsub.s32 0, %v243
    %v245 = vrot.slane %v168, %v244
    %v246 = vlaneseq
    %v247 = vshrl.u32 %v246, 7
    %v248 = vsub.s32 0, %v247
    %v249 = vrot.slane %v170, %v248
    %v250 = vlaneseq
    %v251 = vshrl.u32 %v250, 7
    %v252 = vsub.s32 0, %v251
    %v253 = vrot.slane %v172, %v252
    %v254 = vlaneseq
    %v255 = vshrl.u32 %v254, 7
    %v256 = vsub.s32 0, %v255
    %v257 = vrot.slane %v196, %v256
    %v258 = vlaneseq
    %v259 = vshrl.u32 %v258, 7
    %v260 = vsub.s32 0, %v259
    %v261 = vrot.slane %v210, %v260
    %v262 = vlaneseq
    %v263 = vshrl.u32 %v262, 7
    %v264 = vsub.s32 0, %v263
    %v265 = vrot.slane %v218, %v264
    %v266 = vlaneseq
    %v267 = vshrl.u32 %v266, 7
    %v268 = vsub.s32 0, %v267
    %v269 = vrot.slane %v220, %v268
    %v270 = vlaneseq
    %v271 = vshrl.u32 %v270, 7
    %v272 = vsub.s32 0, %v271
    %v273 = vrot.slane %v203, %v272
    %v274 = vlaneseq
    %v275 = vshrl.u32 %v274, 7
    %v276 = vsub.s32 0, %v275
    %v277 = vrot.slane %v217, %v276
    %v278 = vlaneseq
    %v279 = vshrl.u32 %v278, 7
    %v280 = vsub.s32 0, %v279
    %v281 = vrot.slane %v219, %v280
    %v282 = vlaneseq
    %v283 = vshrl.u32 %v282, 7
    %v284 = vsub.s32 0, %v283
    %v285 = vrot.slane %v221, %v284
    %v302 = vmul.f32 %v225, %v65
    %v303 = vmul.f32 %v229, %v66
    %v304 = vmul.f32 %v233, %v67
    %v305 = vmul.f32 %v237, %v68
    %v306 = vmul.f32 %v241, %v69
    %v307 = vmul.f32 %v245, %v70
    %v308 = vmul.f32 %v249, %v71
    %v309 = vmul.f32 %v253, %v72
    %v310 = vmul.f32 %v257, %v73
    %v311 = vmul.f32 %v261, %v74
    %v312 = vmul.f32 %v265, %v75
    %v313 = vmul.f32 %v269, %v76
    %v314 = vmul.f32 %v273, %v77
    %v315 = vmul.f32 %v277, %v78
    %v316 = vmul.f32 %v281, %v79
    %v317 = vmul.f32 %v285, %v80
    %vm318 = vcmask 224256
    %v319 = vsel %vm318, %v302, 0.0
    %320 = vadd.xlane.f32.xlu0 %v319
    %v321 = vpop.xlane.xlu0 %320
    %v322 = vsel %vm318, %v303, 0.0
    %323 = vadd.xlane.f32.xlu0 %v322
    %v324 = vpop.xlane.xlu0 %323
    %v325 = vsel %vm318, %v304, 0.0
    %326 = vadd.xlane.f32.xlu0 %v325
    %v327 = vpop.xlane.xlu0 %326
    %v328 = vsel %vm318, %v305, 0.0
    %329 = vadd.xlane.f32.xlu0 %v328
    %v330 = vpop.xlane.xlu0 %329
    %v331 = vsel %vm318, %v306, 0.0
    %332 = vadd.xlane.f32.xlu0 %v331
    %v333 = vpop.xlane.xlu0 %332
    %v334 = vsel %vm318, %v307, 0.0
    %335 = vadd.xlane.f32.xlu0 %v334
    %v336 = vpop.xlane.xlu0 %335
    %v337 = vsel %vm318, %v308, 0.0
    %338 = vadd.xlane.f32.xlu0 %v337
    %v339 = vpop.xlane.xlu0 %338
    %v340 = vsel %vm318, %v309, 0.0
    %341 = vadd.xlane.f32.xlu0 %v340
    %v342 = vpop.xlane.xlu0 %341
    %v343 = vsel %vm318, %v310, 0.0
    %344 = vadd.xlane.f32.xlu0 %v343
    %v345 = vpop.xlane.xlu0 %344
    %v346 = vsel %vm318, %v311, 0.0
    %347 = vadd.xlane.f32.xlu0 %v346
    %v348 = vpop.xlane.xlu0 %347
    %v349 = vsel %vm318, %v312, 0.0
    %350 = vadd.xlane.f32.xlu0 %v349
    %v351 = vpop.xlane.xlu0 %350
    %v352 = vsel %vm318, %v313, 0.0
    %353 = vadd.xlane.f32.xlu0 %v352
    %v354 = vpop.xlane.xlu0 %353
    %v355 = vsel %vm318, %v314, 0.0
    %356 = vadd.xlane.f32.xlu0 %v355
    %v357 = vpop.xlane.xlu0 %356
    %v358 = vsel %vm318, %v315, 0.0
    %359 = vadd.xlane.f32.xlu0 %v358
    %v360 = vpop.xlane.xlu0 %359
    %v361 = vsel %vm318, %v316, 0.0
    %362 = vadd.xlane.f32.xlu0 %v361
    %v363 = vpop.xlane.xlu0 %362
    %v364 = vsel %vm318, %v317, 0.0
    %365 = vadd.xlane.f32.xlu0 %v364
    %v366 = vpop.xlane.xlu0 %365
    %v367 = vmul.f32 %v65, %v65
    %v368 = vmul.f32 %v66, %v66
    %v369 = vmul.f32 %v67, %v67
    %v370 = vmul.f32 %v68, %v68
    %v371 = vmul.f32 %v69, %v69
    %v372 = vmul.f32 %v70, %v70
    %v373 = vmul.f32 %v71, %v71
    %v374 = vmul.f32 %v72, %v72
    %v375 = vmul.f32 %v73, %v73
    %v376 = vmul.f32 %v74, %v74
    %v377 = vmul.f32 %v75, %v75
    %v378 = vmul.f32 %v76, %v76
    %v379 = vmul.f32 %v77, %v77
    %v380 = vmul.f32 %v78, %v78
    %v381 = vmul.f32 %v79, %v79
    %v382 = vmul.f32 %v80, %v80
    %399 = vrot.lane.b32.xlu0 %v367, 112
    %v400 = vpop.permute.xlu0 %399
    %401 = vrot.lane.b32.xlu0 %v368, 112
    %v402 = vpop.permute.xlu0 %401
    %403 = vrot.lane.b32.xlu0 %v369, 112
    %v404 = vpop.permute.xlu0 %403
    %405 = vrot.lane.b32.xlu0 %v370, 112
    %v406 = vpop.permute.xlu0 %405
    %407 = vrot.lane.b32.xlu0 %v371, 112
    %v408 = vpop.permute.xlu0 %407
    %409 = vrot.lane.b32.xlu0 %v372, 112
    %v410 = vpop.permute.xlu0 %409
    %411 = vrot.lane.b32.xlu0 %v373, 112
    %v412 = vpop.permute.xlu0 %411
    %413 = vrot.lane.b32.xlu0 %v374, 112
    %v414 = vpop.permute.xlu0 %413
    %415 = vrot.lane.b32.xlu0 %v375, 112
    %v416 = vpop.permute.xlu0 %415
    %417 = vrot.lane.b32.xlu0 %v376, 112
    %v418 = vpop.permute.xlu0 %417
    %419 = vrot.lane.b32.xlu0 %v377, 112
    %v420 = vpop.permute.xlu0 %419
    %421 = vrot.lane.b32.xlu0 %v378, 112
    %v422 = vpop.permute.xlu0 %421
    %423 = vrot.lane.b32.xlu0 %v379, 112
    %v424 = vpop.permute.xlu0 %423
    %425 = vrot.lane.b32.xlu0 %v380, 112
    %v426 = vpop.permute.xlu0 %425
    %427 = vrot.lane.b32.xlu0 %v381, 112
    %v428 = vpop.permute.xlu0 %427
    %429 = vrot.lane.b32.xlu0 %v382, 112
    %v430 = vpop.permute.xlu0 %429
    %vm447 = vcmask 93184
    %v448 = vsel %vm447, %v400, 0.0
    %449 = vadd.xlane.f32.xlu0 %v448
    %v450 = vpop.xlane.xlu0 %449
    %v451 = vsel %vm447, %v402, 0.0
    %452 = vadd.xlane.f32.xlu0 %v451
    %v453 = vpop.xlane.xlu0 %452
    %v454 = vsel %vm447, %v404, 0.0
    %455 = vadd.xlane.f32.xlu0 %v454
    %v456 = vpop.xlane.xlu0 %455
    %v457 = vsel %vm447, %v406, 0.0
    %458 = vadd.xlane.f32.xlu0 %v457
    %v459 = vpop.xlane.xlu0 %458
    %v460 = vsel %vm447, %v408, 0.0
    %461 = vadd.xlane.f32.xlu0 %v460
    %v462 = vpop.xlane.xlu0 %461
    %v463 = vsel %vm447, %v410, 0.0
    %464 = vadd.xlane.f32.xlu0 %v463
    %v465 = vpop.xlane.xlu0 %464
    %v466 = vsel %vm447, %v412, 0.0
    %467 = vadd.xlane.f32.xlu0 %v466
    %v468 = vpop.xlane.xlu0 %467
    %v469 = vsel %vm447, %v414, 0.0
    %470 = vadd.xlane.f32.xlu0 %v469
    %v471 = vpop.xlane.xlu0 %470
    %v472 = vsel %vm447, %v416, 0.0
    %473 = vadd.xlane.f32.xlu0 %v472
    %v474 = vpop.xlane.xlu0 %473
    %v475 = vsel %vm447, %v418, 0.0
    %476 = vadd.xlane.f32.xlu0 %v475
    %v477 = vpop.xlane.xlu0 %476
    %v478 = vsel %vm447, %v420, 0.0
    %479 = vadd.xlane.f32.xlu0 %v478
    %v480 = vpop.xlane.xlu0 %479
    %v481 = vsel %vm447, %v422, 0.0
    %482 = vadd.xlane.f32.xlu0 %v481
    %v483 = vpop.xlane.xlu0 %482
    %v484 = vsel %vm447, %v424, 0.0
    %485 = vadd.xlane.f32.xlu0 %v484
    %v486 = vpop.xlane.xlu0 %485
    %v487 = vsel %vm447, %v426, 0.0
    %488 = vadd.xlane.f32.xlu0 %v487
    %v489 = vpop.xlane.xlu0 %488
    %v490 = vsel %vm447, %v428, 0.0
    %491 = vadd.xlane.f32.xlu0 %v490
    %v492 = vpop.xlane.xlu0 %491
    %v493 = vsel %vm447, %v430, 0.0
    %494 = vadd.xlane.f32.xlu0 %v493
    %v495 = vpop.xlane.xlu0 %494
    %v496 = vmul.f32 %v47, %v47
    %v497 = vmul.f32 %v48, %v48
    %500 = vrot.lane.b32.xlu0 %v496, 112
    %v501 = vpop.permute.xlu0 %500
    %502 = vrot.lane.b32.xlu0 %v497, 112
    %v503 = vpop.permute.xlu0 %502
    %vm506 = vcmask 97280
    %v507 = vsel %vm506, %v501, 0.0
    %508 = vadd.xlane.f32.xlu0 %v507
    %v509 = vpop.xlane.xlu0 %508
    %v510 = vsel %vm506, %v503, 0.0
    %511 = vadd.xlane.f32.xlu0 %v510
    %v512 = vpop.xlane.xlu0 %511
    %v513 = vld [vmem:[%s5] sm:$0x1]
    %v514 = vlaneseq
    %v515 = vshrl.u32 %v514, 7
    %v516 = vsub.s32 0, %v515
    %v517 = vrot.slane %v513, %v516
    %v518 = vmul.f32 %v97, %v517
    %v519 = vmul.f32 %v98, %v517
    %v520 = vmul.f32 %v99, %v517
    %v521 = vmul.f32 %v100, %v517
    %v522 = vmul.f32 %v101, %v517
    %v523 = vmul.f32 %v102, %v517
    %v524 = vmul.f32 %v103, %v517
    %v525 = vmul.f32 %v104, %v517
    %v526 = vmul.f32 %v105, %v517
    %v527 = vmul.f32 %v106, %v517
    %v528 = vmul.f32 %v107, %v517
    %v529 = vmul.f32 %v108, %v517
    %v530 = vmul.f32 %v109, %v517
    %v531 = vmul.f32 %v110, %v517
    %v532 = vmul.f32 %v111, %v517
    %v533 = vmul.f32 %v112, %v517
    %vm534 = vcmask 125952
    %v535 = vsel %vm534, %v518, 0.0
    %536 = vadd.xlane.f32.xlu0 %v535
    %v537 = vpop.xlane.xlu0 %536
    %v538 = vsel %vm534, %v519, 0.0
    %539 = vadd.xlane.f32.xlu0 %v538
    %v540 = vpop.xlane.xlu0 %539
    %v541 = vsel %vm534, %v520, 0.0
    %542 = vadd.xlane.f32.xlu0 %v541
    %v543 = vpop.xlane.xlu0 %542
    %v544 = vsel %vm534, %v521, 0.0
    %545 = vadd.xlane.f32.xlu0 %v544
    %v546 = vpop.xlane.xlu0 %545
    %v547 = vsel %vm534, %v522, 0.0
    %548 = vadd.xlane.f32.xlu0 %v547
    %v549 = vpop.xlane.xlu0 %548
    %v550 = vsel %vm534, %v523, 0.0
    %551 = vadd.xlane.f32.xlu0 %v550
    %v552 = vpop.xlane.xlu0 %551
    %v553 = vsel %vm534, %v524, 0.0
    %554 = vadd.xlane.f32.xlu0 %v553
    %v555 = vpop.xlane.xlu0 %554
    %v556 = vsel %vm534, %v525, 0.0
    %557 = vadd.xlane.f32.xlu0 %v556
    %v558 = vpop.xlane.xlu0 %557
    %v559 = vsel %vm534, %v526, 0.0
    %560 = vadd.xlane.f32.xlu0 %v559
    %v561 = vpop.xlane.xlu0 %560
    %v562 = vsel %vm534, %v527, 0.0
    %563 = vadd.xlane.f32.xlu0 %v562
    %v564 = vpop.xlane.xlu0 %563
    %v565 = vsel %vm534, %v528, 0.0
    %566 = vadd.xlane.f32.xlu0 %v565
    %v567 = vpop.xlane.xlu0 %566
    %v568 = vsel %vm534, %v529, 0.0
    %569 = vadd.xlane.f32.xlu0 %v568
    %v570 = vpop.xlane.xlu0 %569
    %v571 = vsel %vm534, %v530, 0.0
    %572 = vadd.xlane.f32.xlu0 %v571
    %v573 = vpop.xlane.xlu0 %572
    %v574 = vsel %vm534, %v531, 0.0
    %575 = vadd.xlane.f32.xlu0 %v574
    %v576 = vpop.xlane.xlu0 %575
    %v577 = vsel %vm534, %v532, 0.0
    %578 = vadd.xlane.f32.xlu0 %v577
    %v579 = vpop.xlane.xlu0 %578
    %v580 = vsel %vm534, %v533, 0.0
    %581 = vadd.xlane.f32.xlu0 %v580
    %v582 = vpop.xlane.xlu0 %581
    %v583 = vstv %s45
    %v584 = vadd.f32 %v537, %v583
    %v585 = vadd.f32 %v540, %v583
    %v586 = vadd.f32 %v543, %v583
    %v587 = vadd.f32 %v546, %v583
    %v588 = vadd.f32 %v549, %v583
    %v589 = vadd.f32 %v552, %v583
    %v590 = vadd.f32 %v555, %v583
    %v591 = vadd.f32 %v558, %v583
    %v592 = vadd.f32 %v561, %v583
    %v593 = vadd.f32 %v564, %v583
    %v594 = vadd.f32 %v567, %v583
    %v595 = vadd.f32 %v570, %v583
    %v596 = vadd.f32 %v573, %v583
    %v597 = vadd.f32 %v576, %v583
    %v598 = vadd.f32 %v579, %v583
    %v599 = vadd.f32 %v582, %v583
    %v600 = vmul.f32 %v584, 0.57735026
    %v601 = vmul.f32 %v585, 0.57735026
    %v602 = vmul.f32 %v586, 0.57735026
    %v603 = vmul.f32 %v587, 0.57735026
    %v604 = vmul.f32 %v588, 0.57735026
    %v605 = vmul.f32 %v589, 0.57735026
    %v606 = vmul.f32 %v590, 0.57735026
    %v607 = vmul.f32 %v591, 0.57735026
    %v608 = vmul.f32 %v592, 0.57735026
    %v609 = vmul.f32 %v593, 0.57735026
    %v610 = vmul.f32 %v594, 0.57735026
    %v611 = vmul.f32 %v595, 0.57735026
    %v612 = vmul.f32 %v596, 0.57735026
    %v613 = vmul.f32 %v597, 0.57735026
    %v614 = vmul.f32 %v598, 0.57735026
    %v615 = vmul.f32 %v599, 0.57735026
    %v616 = vadd.f32 %v321, %v600
    %v617 = vadd.f32 %v324, %v601
    %v618 = vadd.f32 %v327, %v602
    %v619 = vadd.f32 %v330, %v603
    %v620 = vadd.f32 %v333, %v604
    %v621 = vadd.f32 %v336, %v605
    %v622 = vadd.f32 %v339, %v606
    %v623 = vadd.f32 %v342, %v607
    %v624 = vadd.f32 %v345, %v608
    %v625 = vadd.f32 %v348, %v609
    %v626 = vadd.f32 %v351, %v610
    %v627 = vadd.f32 %v354, %v611
    %v628 = vadd.f32 %v357, %v612
    %v629 = vadd.f32 %v360, %v613
    %v630 = vadd.f32 %v363, %v614
    %v631 = vadd.f32 %v366, %v615
    %s632 = smul.f32 %s46, 0.5
    %v649 = vlaneseq
    %v650 = vand.u32 %v649, 127
    %v651 = vlaneseq
    %v652 = vshrl.u32 %v651, 7
    %v653 = vsub.s32 %v650, %v652
    %v654 = vrot.slane %v450, %v653
    %v655 = vlaneseq
    %v656 = vshrl.u32 %v655, 7
    %v657 = vsub.s32 %v650, %v656
    %v658 = vrot.slane %v453, %v657
    %v659 = vlaneseq
    %v660 = vshrl.u32 %v659, 7
    %v661 = vsub.s32 %v650, %v660
    %v662 = vrot.slane %v456, %v661
    %v663 = vlaneseq
    %v664 = vshrl.u32 %v663, 7
    %v665 = vsub.s32 %v650, %v664
    %v666 = vrot.slane %v459, %v665
    %v667 = vlaneseq
    %v668 = vshrl.u32 %v667, 7
    %v669 = vsub.s32 %v650, %v668
    %v670 = vrot.slane %v462, %v669
    %v671 = vlaneseq
    %v672 = vshrl.u32 %v671, 7
    %v673 = vsub.s32 %v650, %v672
    %v674 = vrot.slane %v465, %v673
    %v675 = vlaneseq
    %v676 = vshrl.u32 %v675, 7
    %v677 = vsub.s32 %v650, %v676
    %v678 = vrot.slane %v468, %v677
    %v679 = vlaneseq
    %v680 = vshrl.u32 %v679, 7
    %v681 = vsub.s32 %v650, %v680
    %v682 = vrot.slane %v471, %v681
    %v683 = vlaneseq
    %v684 = vshrl.u32 %v683, 7
    %v685 = vsub.s32 %v650, %v684
    %v686 = vrot.slane %v474, %v685
    %v687 = vlaneseq
    %v688 = vshrl.u32 %v687, 7
    %v689 = vsub.s32 %v650, %v688
    %v690 = vrot.slane %v477, %v689
    %v691 = vlaneseq
    %v692 = vshrl.u32 %v691, 7
    %v693 = vsub.s32 %v650, %v692
    %v694 = vrot.slane %v480, %v693
    %v695 = vlaneseq
    %v696 = vshrl.u32 %v695, 7
    %v697 = vsub.s32 %v650, %v696
    %v698 = vrot.slane %v483, %v697
    %v699 = vlaneseq
    %v700 = vshrl.u32 %v699, 7
    %v701 = vsub.s32 %v650, %v700
    %v702 = vrot.slane %v486, %v701
    %v703 = vlaneseq
    %v704 = vshrl.u32 %v703, 7
    %v705 = vsub.s32 %v650, %v704
    %v706 = vrot.slane %v489, %v705
    %v707 = vlaneseq
    %v708 = vshrl.u32 %v707, 7
    %v709 = vsub.s32 %v650, %v708
    %v710 = vrot.slane %v492, %v709
    %v711 = vlaneseq
    %v712 = vshrl.u32 %v711, 7
    %v713 = vsub.s32 %v650, %v712
    %v714 = vrot.slane %v495, %v713
    %vm715 = vcmask 1041409
    %v716 = vsel %vm715, %v658, %v654
    %vm717 = vcmask 1042434
    %v718 = vsel %vm717, %v662, %v716
    %vm719 = vcmask 1043459
    %v720 = vsel %vm719, %v666, %v718
    %vm721 = vcmask 1044484
    %v722 = vsel %vm721, %v670, %v720
    %vm723 = vcmask 1045509
    %v724 = vsel %vm723, %v674, %v722
    %vm725 = vcmask 1046534
    %v726 = vsel %vm725, %v678, %v724
    %vm727 = vcmask 1047559
    %v728 = vsel %vm727, %v682, %v726
    %v729 = vsel %vm715, %v690, %v686
    %v730 = vsel %vm717, %v694, %v729
    %v731 = vsel %vm719, %v698, %v730
    %v732 = vsel %vm721, %v702, %v731
    %v733 = vsel %vm723, %v706, %v732
    %v734 = vsel %vm725, %v710, %v733
    %v735 = vsel %vm727, %v714, %v734
    %v738 = vadd.f32 %v509, %v728
    %v739 = vadd.f32 %v512, %v735
    %v740 = vstv %s632
    %v741 = vmul.f32 %v740, %v738
    %v742 = vmul.f32 %v740, %v739
    %v745 = vlaneseq
    %v746 = vshrl.u32 %v745, 7
    %v747 = vsub.s32 0, %v746
    %v748 = vrot.slane %v741, %v747
    %750 = vbcast.lane.b32.xlu0 %v748, 256
    %v751 = vpop.permute.xlu0 %750
    %v752 = vlaneseq
    %v753 = vshrl.u32 %v752, 7
    %v754 = vsub.s32 1, %v753
    %v755 = vrot.slane %v741, %v754
    %757 = vbcast.lane.b32.xlu0 %v755, 256
    %v758 = vpop.permute.xlu0 %757
    %v759 = vlaneseq
    %v760 = vshrl.u32 %v759, 7
    %v761 = vsub.s32 2, %v760
    %v762 = vrot.slane %v741, %v761
    %764 = vbcast.lane.b32.xlu0 %v762, 256
    %v765 = vpop.permute.xlu0 %764
    %v766 = vlaneseq
    %v767 = vshrl.u32 %v766, 7
    %v768 = vsub.s32 3, %v767
    %v769 = vrot.slane %v741, %v768
    %771 = vbcast.lane.b32.xlu0 %v769, 256
    %v772 = vpop.permute.xlu0 %771
    %v773 = vlaneseq
    %v774 = vshrl.u32 %v773, 7
    %v775 = vsub.s32 4, %v774
    %v776 = vrot.slane %v741, %v775
    %778 = vbcast.lane.b32.xlu0 %v776, 256
    %v779 = vpop.permute.xlu0 %778
    %v780 = vlaneseq
    %v781 = vshrl.u32 %v780, 7
    %v782 = vsub.s32 5, %v781
    %v783 = vrot.slane %v741, %v782
    %785 = vbcast.lane.b32.xlu0 %v783, 256
    %v786 = vpop.permute.xlu0 %785
    %v787 = vlaneseq
    %v788 = vshrl.u32 %v787, 7
    %v789 = vsub.s32 6, %v788
    %v790 = vrot.slane %v741, %v789
    %792 = vbcast.lane.b32.xlu0 %v790, 256
    %v793 = vpop.permute.xlu0 %792
    %v794 = vlaneseq
    %v795 = vshrl.u32 %v794, 7
    %v796 = vsub.s32 7, %v795
    %v797 = vrot.slane %v741, %v796
    %799 = vbcast.lane.b32.xlu0 %v797, 256
    %v800 = vpop.permute.xlu0 %799
    %v801 = vlaneseq
    %v802 = vshrl.u32 %v801, 7
    %v803 = vsub.s32 0, %v802
    %v804 = vrot.slane %v742, %v803
    %806 = vbcast.lane.b32.xlu0 %v804, 256
    %v807 = vpop.permute.xlu0 %806
    %v808 = vlaneseq
    %v809 = vshrl.u32 %v808, 7
    %v810 = vsub.s32 1, %v809
    %v811 = vrot.slane %v742, %v810
    %813 = vbcast.lane.b32.xlu0 %v811, 256
    %v814 = vpop.permute.xlu0 %813
    %v815 = vlaneseq
    %v816 = vshrl.u32 %v815, 7
    %v817 = vsub.s32 2, %v816
    %v818 = vrot.slane %v742, %v817
    %820 = vbcast.lane.b32.xlu0 %v818, 256
    %v821 = vpop.permute.xlu0 %820
    %v822 = vlaneseq
    %v823 = vshrl.u32 %v822, 7
    %v824 = vsub.s32 3, %v823
    %v825 = vrot.slane %v742, %v824
    %827 = vbcast.lane.b32.xlu0 %v825, 256
    %v828 = vpop.permute.xlu0 %827
    %v829 = vlaneseq
    %v830 = vshrl.u32 %v829, 7
    %v831 = vsub.s32 4, %v830
    %v832 = vrot.slane %v742, %v831
    %834 = vbcast.lane.b32.xlu0 %v832, 256
    %v835 = vpop.permute.xlu0 %834
    %v836 = vlaneseq
    %v837 = vshrl.u32 %v836, 7
    %v838 = vsub.s32 5, %v837
    %v839 = vrot.slane %v742, %v838
    %841 = vbcast.lane.b32.xlu0 %v839, 256
    %v842 = vpop.permute.xlu0 %841
    %v843 = vlaneseq
    %v844 = vshrl.u32 %v843, 7
    %v845 = vsub.s32 6, %v844
    %v846 = vrot.slane %v742, %v845
    %848 = vbcast.lane.b32.xlu0 %v846, 256
    %v849 = vpop.permute.xlu0 %848
    %v850 = vlaneseq
    %v851 = vshrl.u32 %v850, 7
    %v852 = vsub.s32 7, %v851
    %v853 = vrot.slane %v742, %v852
    %855 = vbcast.lane.b32.xlu0 %v853, 256
    %v856 = vpop.permute.xlu0 %855
    %v873 = vsub.f32 %v616, %v751
    %v874 = vsub.f32 %v617, %v758
    %v875 = vsub.f32 %v618, %v765
    %v876 = vsub.f32 %v619, %v772
    %v877 = vsub.f32 %v620, %v779
    %v878 = vsub.f32 %v621, %v786
    %v879 = vsub.f32 %v622, %v793
    %v880 = vsub.f32 %v623, %v800
    %v881 = vsub.f32 %v624, %v807
    %v882 = vsub.f32 %v625, %v814
    %v883 = vsub.f32 %v626, %v821
    %v884 = vsub.f32 %v627, %v828
    %v885 = vsub.f32 %v628, %v835
    %v886 = vsub.f32 %v629, %v842
    %v887 = vsub.f32 %v630, %v849
    %v888 = vsub.f32 %v631, %v856
    %v891 = vlaneseq
    %v892 = vshrl.u32 %v891, 7
    %v893 = vsub.s32 0, %v892
    %v894 = vrot.slane %v113, %v893
    %896 = vbcast.lane.b32.xlu0 %v894, 256
    %v897 = vpop.permute.xlu0 %896
    %v898 = vlaneseq
    %v899 = vshrl.u32 %v898, 7
    %v900 = vsub.s32 1, %v899
    %v901 = vrot.slane %v113, %v900
    %903 = vbcast.lane.b32.xlu0 %v901, 256
    %v904 = vpop.permute.xlu0 %903
    %v905 = vlaneseq
    %v906 = vshrl.u32 %v905, 7
    %v907 = vsub.s32 2, %v906
    %v908 = vrot.slane %v113, %v907
    %910 = vbcast.lane.b32.xlu0 %v908, 256
    %v911 = vpop.permute.xlu0 %910
    %v912 = vlaneseq
    %v913 = vshrl.u32 %v912, 7
    %v914 = vsub.s32 3, %v913
    %v915 = vrot.slane %v113, %v914
    %917 = vbcast.lane.b32.xlu0 %v915, 256
    %v918 = vpop.permute.xlu0 %917
    %v919 = vlaneseq
    %v920 = vshrl.u32 %v919, 7
    %v921 = vsub.s32 4, %v920
    %v922 = vrot.slane %v113, %v921
    %924 = vbcast.lane.b32.xlu0 %v922, 256
    %v925 = vpop.permute.xlu0 %924
    %v926 = vlaneseq
    %v927 = vshrl.u32 %v926, 7
    %v928 = vsub.s32 5, %v927
    %v929 = vrot.slane %v113, %v928
    %931 = vbcast.lane.b32.xlu0 %v929, 256
    %v932 = vpop.permute.xlu0 %931
    %v933 = vlaneseq
    %v934 = vshrl.u32 %v933, 7
    %v935 = vsub.s32 6, %v934
    %v936 = vrot.slane %v113, %v935
    %938 = vbcast.lane.b32.xlu0 %v936, 256
    %v939 = vpop.permute.xlu0 %938
    %v940 = vlaneseq
    %v941 = vshrl.u32 %v940, 7
    %v942 = vsub.s32 7, %v941
    %v943 = vrot.slane %v113, %v942
    %945 = vbcast.lane.b32.xlu0 %v943, 256
    %v946 = vpop.permute.xlu0 %945
    %v947 = vlaneseq
    %v948 = vshrl.u32 %v947, 7
    %v949 = vsub.s32 0, %v948
    %v950 = vrot.slane %v114, %v949
    %952 = vbcast.lane.b32.xlu0 %v950, 256
    %v953 = vpop.permute.xlu0 %952
    %v954 = vlaneseq
    %v955 = vshrl.u32 %v954, 7
    %v956 = vsub.s32 1, %v955
    %v957 = vrot.slane %v114, %v956
    %959 = vbcast.lane.b32.xlu0 %v957, 256
    %v960 = vpop.permute.xlu0 %959
    %v961 = vlaneseq
    %v962 = vshrl.u32 %v961, 7
    %v963 = vsub.s32 2, %v962
    %v964 = vrot.slane %v114, %v963
    %966 = vbcast.lane.b32.xlu0 %v964, 256
    %v967 = vpop.permute.xlu0 %966
    %v968 = vlaneseq
    %v969 = vshrl.u32 %v968, 7
    %v970 = vsub.s32 3, %v969
    %v971 = vrot.slane %v114, %v970
    %973 = vbcast.lane.b32.xlu0 %v971, 256
    %v974 = vpop.permute.xlu0 %973
    %v975 = vlaneseq
    %v976 = vshrl.u32 %v975, 7
    %v977 = vsub.s32 4, %v976
    %v978 = vrot.slane %v114, %v977
    %980 = vbcast.lane.b32.xlu0 %v978, 256
    %v981 = vpop.permute.xlu0 %980
    %v982 = vlaneseq
    %v983 = vshrl.u32 %v982, 7
    %v984 = vsub.s32 5, %v983
    %v985 = vrot.slane %v114, %v984
    %987 = vbcast.lane.b32.xlu0 %v985, 256
    %v988 = vpop.permute.xlu0 %987
    %v989 = vlaneseq
    %v990 = vshrl.u32 %v989, 7
    %v991 = vsub.s32 6, %v990
    %v992 = vrot.slane %v114, %v991
    %994 = vbcast.lane.b32.xlu0 %v992, 256
    %v995 = vpop.permute.xlu0 %994
    %v996 = vlaneseq
    %v997 = vshrl.u32 %v996, 7
    %v998 = vsub.s32 7, %v997
    %v999 = vrot.slane %v114, %v998
    %1001 = vbcast.lane.b32.xlu0 %v999, 256
    %v1002 = vpop.permute.xlu0 %1001
    %v1019 = vadd.f32 %v873, %v897
    %v1020 = vadd.f32 %v874, %v904
    %v1021 = vadd.f32 %v875, %v911
    %v1022 = vadd.f32 %v876, %v918
    %v1023 = vadd.f32 %v877, %v925
    %v1024 = vadd.f32 %v878, %v932
    %v1025 = vadd.f32 %v879, %v939
    %v1026 = vadd.f32 %v880, %v946
    %v1027 = vadd.f32 %v881, %v953
    %v1028 = vadd.f32 %v882, %v960
    %v1029 = vadd.f32 %v883, %v967
    %v1030 = vadd.f32 %v884, %v974
    %v1031 = vadd.f32 %v885, %v981
    %v1032 = vadd.f32 %v886, %v988
    %v1033 = vadd.f32 %v887, %v995
    %v1034 = vadd.f32 %v888, %v1002
    %1051 = vset.pattern.permute.xlu0 0
    %1052 = vperm.xlu0 %1051, %v1019
    %v1053 = vpop.permute.xlu0 %1052
    %1054 = vset.pattern.permute.xlu0 0
    %1055 = vperm.xlu0 %1054, %v1020
    %v1056 = vpop.permute.xlu0 %1055
    %1057 = vset.pattern.permute.xlu0 0
    %1058 = vperm.xlu0 %1057, %v1021
    %v1059 = vpop.permute.xlu0 %1058
    %1060 = vset.pattern.permute.xlu0 0
    %1061 = vperm.xlu0 %1060, %v1022
    %v1062 = vpop.permute.xlu0 %1061
    %1063 = vset.pattern.permute.xlu0 0
    %1064 = vperm.xlu0 %1063, %v1023
    %v1065 = vpop.permute.xlu0 %1064
    %1066 = vset.pattern.permute.xlu0 0
    %1067 = vperm.xlu0 %1066, %v1024
    %v1068 = vpop.permute.xlu0 %1067
    %1069 = vset.pattern.permute.xlu0 0
    %1070 = vperm.xlu0 %1069, %v1025
    %v1071 = vpop.permute.xlu0 %1070
    %1072 = vset.pattern.permute.xlu0 0
    %1073 = vperm.xlu0 %1072, %v1026
    %v1074 = vpop.permute.xlu0 %1073
    %1075 = vset.pattern.permute.xlu0 0
    %1076 = vperm.xlu0 %1075, %v1027
    %v1077 = vpop.permute.xlu0 %1076
    %1078 = vset.pattern.permute.xlu0 0
    %1079 = vperm.xlu0 %1078, %v1028
    %v1080 = vpop.permute.xlu0 %1079
    %1081 = vset.pattern.permute.xlu0 0
    %1082 = vperm.xlu0 %1081, %v1029
    %v1083 = vpop.permute.xlu0 %1082
    %1084 = vset.pattern.permute.xlu0 0
    %1085 = vperm.xlu0 %1084, %v1030
    %v1086 = vpop.permute.xlu0 %1085
    %1087 = vset.pattern.permute.xlu0 0
    %1088 = vperm.xlu0 %1087, %v1031
    %v1089 = vpop.permute.xlu0 %1088
    %1090 = vset.pattern.permute.xlu0 0
    %1091 = vperm.xlu0 %1090, %v1032
    %v1092 = vpop.permute.xlu0 %1091
    %1093 = vset.pattern.permute.xlu0 0
    %1094 = vperm.xlu0 %1093, %v1033
    %v1095 = vpop.permute.xlu0 %1094
    %1096 = vset.pattern.permute.xlu0 0
    %1097 = vperm.xlu0 %1096, %v1034
    %v1098 = vpop.permute.xlu0 %1097
    %v1099 = vlaneseq
    %v1100 = vshrl.u32 %v1099, 7
    %v1101 = vsub.s32 %v650, %v1100
    %v1102 = vrot.slane %v1053, %v1101
    %v1103 = vlaneseq
    %v1104 = vshrl.u32 %v1103, 7
    %v1105 = vsub.s32 %v650, %v1104
    %v1106 = vrot.slane %v1056, %v1105
    %v1107 = vlaneseq
    %v1108 = vshrl.u32 %v1107, 7
    %v1109 = vsub.s32 %v650, %v1108
    %v1110 = vrot.slane %v1059, %v1109
    %v1111 = vlaneseq
    %v1112 = vshrl.u32 %v1111, 7
    %v1113 = vsub.s32 %v650, %v1112
    %v1114 = vrot.slane %v1062, %v1113
    %v1115 = vlaneseq
    %v1116 = vshrl.u32 %v1115, 7
    %v1117 = vsub.s32 %v650, %v1116
    %v1118 = vrot.slane %v1065, %v1117
    %v1119 = vlaneseq
    %v1120 = vshrl.u32 %v1119, 7
    %v1121 = vsub.s32 %v650, %v1120
    %v1122 = vrot.slane %v1068, %v1121
    %v1123 = vlaneseq
    %v1124 = vshrl.u32 %v1123, 7
    %v1125 = vsub.s32 %v650, %v1124
    %v1126 = vrot.slane %v1071, %v1125
    %v1127 = vlaneseq
    %v1128 = vshrl.u32 %v1127, 7
    %v1129 = vsub.s32 %v650, %v1128
    %v1130 = vrot.slane %v1074, %v1129
    %v1131 = vlaneseq
    %v1132 = vshrl.u32 %v1131, 7
    %v1133 = vsub.s32 %v650, %v1132
    %v1134 = vrot.slane %v1077, %v1133
    %v1135 = vlaneseq
    %v1136 = vshrl.u32 %v1135, 7
    %v1137 = vsub.s32 %v650, %v1136
    %v1138 = vrot.slane %v1080, %v1137
    %v1139 = vlaneseq
    %v1140 = vshrl.u32 %v1139, 7
    %v1141 = vsub.s32 %v650, %v1140
    %v1142 = vrot.slane %v1083, %v1141
    %v1143 = vlaneseq
    %v1144 = vshrl.u32 %v1143, 7
    %v1145 = vsub.s32 %v650, %v1144
    %v1146 = vrot.slane %v1086, %v1145
    %v1147 = vlaneseq
    %v1148 = vshrl.u32 %v1147, 7
    %v1149 = vsub.s32 %v650, %v1148
    %v1150 = vrot.slane %v1089, %v1149
    %v1151 = vlaneseq
    %v1152 = vshrl.u32 %v1151, 7
    %v1153 = vsub.s32 %v650, %v1152
    %v1154 = vrot.slane %v1092, %v1153
    %v1155 = vlaneseq
    %v1156 = vshrl.u32 %v1155, 7
    %v1157 = vsub.s32 %v650, %v1156
    %v1158 = vrot.slane %v1095, %v1157
    %v1159 = vlaneseq
    %v1160 = vshrl.u32 %v1159, 7
    %v1161 = vsub.s32 %v650, %v1160
    %v1162 = vrot.slane %v1098, %v1161
    %v1163 = vsel %vm715, %v1106, %v1102
    %v1164 = vsel %vm717, %v1110, %v1163
    %v1165 = vsel %vm719, %v1114, %v1164
    %v1166 = vsel %vm721, %v1118, %v1165
    %v1167 = vsel %vm723, %v1122, %v1166
    %v1168 = vsel %vm725, %v1126, %v1167
    %v1169 = vsel %vm727, %v1130, %v1168
    %v1170 = vsel %vm715, %v1138, %v1134
    %v1171 = vsel %vm717, %v1142, %v1170
    %v1172 = vsel %vm719, %v1146, %v1171
    %v1173 = vsel %vm721, %v1150, %v1172
    %v1174 = vsel %vm723, %v1154, %v1173
    %v1175 = vsel %vm725, %v1158, %v1174
    %v1176 = vsel %vm727, %v1162, %v1175
    %vm1179 = vcmask 31744
    %v1180 = vsel %vm1179, %v1169, -inf
    %1181 = vmax.xlane.f32.xlu0 %v1180
    %v1182 = vpop.xlane.xlu0 %1181
    %v1183 = vsel %vm1179, %v1176, -inf
    %1184 = vmax.xlane.f32.xlu0 %v1183
    %v1185 = vpop.xlane.xlu0 %1184
    %v1188 = vlaneseq
    %v1189 = vshrl.u32 %v1188, 7
    %v1190 = vsub.s32 0, %v1189
    %v1191 = vrot.slane %v1182, %v1190
    %v1192 = vlaneseq
    %v1193 = vshrl.u32 %v1192, 7
    %v1194 = vsub.s32 1, %v1193
    %v1195 = vrot.slane %v1182, %v1194
    %v1196 = vlaneseq
    %v1197 = vshrl.u32 %v1196, 7
    %v1198 = vsub.s32 2, %v1197
    %v1199 = vrot.slane %v1182, %v1198
    %v1200 = vlaneseq
    %v1201 = vshrl.u32 %v1200, 7
    %v1202 = vsub.s32 3, %v1201
    %v1203 = vrot.slane %v1182, %v1202
    %v1204 = vlaneseq
    %v1205 = vshrl.u32 %v1204, 7
    %v1206 = vsub.s32 4, %v1205
    %v1207 = vrot.slane %v1182, %v1206
    %v1208 = vlaneseq
    %v1209 = vshrl.u32 %v1208, 7
    %v1210 = vsub.s32 5, %v1209
    %v1211 = vrot.slane %v1182, %v1210
    %v1212 = vlaneseq
    %v1213 = vshrl.u32 %v1212, 7
    %v1214 = vsub.s32 6, %v1213
    %v1215 = vrot.slane %v1182, %v1214
    %v1216 = vlaneseq
    %v1217 = vshrl.u32 %v1216, 7
    %v1218 = vsub.s32 7, %v1217
    %v1219 = vrot.slane %v1182, %v1218
    %v1220 = vlaneseq
    %v1221 = vshrl.u32 %v1220, 7
    %v1222 = vsub.s32 0, %v1221
    %v1223 = vrot.slane %v1185, %v1222
    %v1224 = vlaneseq
    %v1225 = vshrl.u32 %v1224, 7
    %v1226 = vsub.s32 1, %v1225
    %v1227 = vrot.slane %v1185, %v1226
    %v1228 = vlaneseq
    %v1229 = vshrl.u32 %v1228, 7
    %v1230 = vsub.s32 2, %v1229
    %v1231 = vrot.slane %v1185, %v1230
    %v1232 = vlaneseq
    %v1233 = vshrl.u32 %v1232, 7
    %v1234 = vsub.s32 3, %v1233
    %v1235 = vrot.slane %v1185, %v1234
    %v1236 = vlaneseq
    %v1237 = vshrl.u32 %v1236, 7
    %v1238 = vsub.s32 4, %v1237
    %v1239 = vrot.slane %v1185, %v1238
    %v1240 = vlaneseq
    %v1241 = vshrl.u32 %v1240, 7
    %v1242 = vsub.s32 5, %v1241
    %v1243 = vrot.slane %v1185, %v1242
    %v1244 = vlaneseq
    %v1245 = vshrl.u32 %v1244, 7
    %v1246 = vsub.s32 6, %v1245
    %v1247 = vrot.slane %v1185, %v1246
    %v1248 = vlaneseq
    %v1249 = vshrl.u32 %v1248, 7
    %v1250 = vsub.s32 7, %v1249
    %v1251 = vrot.slane %v1185, %v1250
    %v1268 = vsub.f32 %v1019, %v1191
    %v1269 = vsub.f32 %v1020, %v1195
    %v1270 = vsub.f32 %v1021, %v1199
    %v1271 = vsub.f32 %v1022, %v1203
    %v1272 = vsub.f32 %v1023, %v1207
    %v1273 = vsub.f32 %v1024, %v1211
    %v1274 = vsub.f32 %v1025, %v1215
    %v1275 = vsub.f32 %v1026, %v1219
    %v1276 = vsub.f32 %v1027, %v1223
    %v1277 = vsub.f32 %v1028, %v1227
    %v1278 = vsub.f32 %v1029, %v1231
    %v1279 = vsub.f32 %v1030, %v1235
    %v1280 = vsub.f32 %v1031, %v1239
    %v1281 = vsub.f32 %v1032, %v1243
    %v1282 = vsub.f32 %v1033, %v1247
    %v1283 = vsub.f32 %v1034, %v1251
    %v1284 = vmul.f32 %v1268, 1.442695
    %v1285 = vpow.pop %v1284
    %v1286 = vmul.f32 %v1269, 1.442695
    %v1287 = vpow.pop %v1286
    %v1288 = vmul.f32 %v1270, 1.442695
    %v1289 = vpow.pop %v1288
    %v1290 = vmul.f32 %v1271, 1.442695
    %v1291 = vpow.pop %v1290
    %v1292 = vmul.f32 %v1272, 1.442695
    %v1293 = vpow.pop %v1292
    %v1294 = vmul.f32 %v1273, 1.442695
    %v1295 = vpow.pop %v1294
    %v1296 = vmul.f32 %v1274, 1.442695
    %v1297 = vpow.pop %v1296
    %v1298 = vmul.f32 %v1275, 1.442695
    %v1299 = vpow.pop %v1298
    %v1300 = vmul.f32 %v1276, 1.442695
    %v1301 = vpow.pop %v1300
    %v1302 = vmul.f32 %v1277, 1.442695
    %v1303 = vpow.pop %v1302
    %v1304 = vmul.f32 %v1278, 1.442695
    %v1305 = vpow.pop %v1304
    %v1306 = vmul.f32 %v1279, 1.442695
    %v1307 = vpow.pop %v1306
    %v1308 = vmul.f32 %v1280, 1.442695
    %v1309 = vpow.pop %v1308
    %v1310 = vmul.f32 %v1281, 1.442695
    %v1311 = vpow.pop %v1310
    %v1312 = vmul.f32 %v1282, 1.442695
    %v1313 = vpow.pop %v1312
    %v1314 = vmul.f32 %v1283, 1.442695
    %v1315 = vpow.pop %v1314
    %1332 = vset.pattern.permute.xlu0 0
    %1333 = vperm.xlu0 %1332, %v1285
    %v1334 = vpop.permute.xlu0 %1333
    %1335 = vset.pattern.permute.xlu0 0
    %1336 = vperm.xlu0 %1335, %v1287
    %v1337 = vpop.permute.xlu0 %1336
    %1338 = vset.pattern.permute.xlu0 0
    %1339 = vperm.xlu0 %1338, %v1289
    %v1340 = vpop.permute.xlu0 %1339
    %1341 = vset.pattern.permute.xlu0 0
    %1342 = vperm.xlu0 %1341, %v1291
    %v1343 = vpop.permute.xlu0 %1342
    %1344 = vset.pattern.permute.xlu0 0
    %1345 = vperm.xlu0 %1344, %v1293
    %v1346 = vpop.permute.xlu0 %1345
    %1347 = vset.pattern.permute.xlu0 0
    %1348 = vperm.xlu0 %1347, %v1295
    %v1349 = vpop.permute.xlu0 %1348
    %1350 = vset.pattern.permute.xlu0 0
    %1351 = vperm.xlu0 %1350, %v1297
    %v1352 = vpop.permute.xlu0 %1351
    %1353 = vset.pattern.permute.xlu0 0
    %1354 = vperm.xlu0 %1353, %v1299
    %v1355 = vpop.permute.xlu0 %1354
    %1356 = vset.pattern.permute.xlu0 0
    %1357 = vperm.xlu0 %1356, %v1301
    %v1358 = vpop.permute.xlu0 %1357
    %1359 = vset.pattern.permute.xlu0 0
    %1360 = vperm.xlu0 %1359, %v1303
    %v1361 = vpop.permute.xlu0 %1360
    %1362 = vset.pattern.permute.xlu0 0
    %1363 = vperm.xlu0 %1362, %v1305
    %v1364 = vpop.permute.xlu0 %1363
    %1365 = vset.pattern.permute.xlu0 0
    %1366 = vperm.xlu0 %1365, %v1307
    %v1367 = vpop.permute.xlu0 %1366
    %1368 = vset.pattern.permute.xlu0 0
    %1369 = vperm.xlu0 %1368, %v1309
    %v1370 = vpop.permute.xlu0 %1369
    %1371 = vset.pattern.permute.xlu0 0
    %1372 = vperm.xlu0 %1371, %v1311
    %v1373 = vpop.permute.xlu0 %1372
    %1374 = vset.pattern.permute.xlu0 0
    %1375 = vperm.xlu0 %1374, %v1313
    %v1376 = vpop.permute.xlu0 %1375
    %1377 = vset.pattern.permute.xlu0 0
    %1378 = vperm.xlu0 %1377, %v1315
    %v1379 = vpop.permute.xlu0 %1378
    %v1380 = vlaneseq
    %v1381 = vshrl.u32 %v1380, 7
    %v1382 = vsub.s32 %v650, %v1381
    %v1383 = vrot.slane %v1334, %v1382
    %v1384 = vlaneseq
    %v1385 = vshrl.u32 %v1384, 7
    %v1386 = vsub.s32 %v650, %v1385
    %v1387 = vrot.slane %v1337, %v1386
    %v1388 = vlaneseq
    %v1389 = vshrl.u32 %v1388, 7
    %v1390 = vsub.s32 %v650, %v1389
    %v1391 = vrot.slane %v1340, %v1390
    %v1392 = vlaneseq
    %v1393 = vshrl.u32 %v1392, 7
    %v1394 = vsub.s32 %v650, %v1393
    %v1395 = vrot.slane %v1343, %v1394
    %v1396 = vlaneseq
    %v1397 = vshrl.u32 %v1396, 7
    %v1398 = vsub.s32 %v650, %v1397
    %v1399 = vrot.slane %v1346, %v1398
    %v1400 = vlaneseq
    %v1401 = vshrl.u32 %v1400, 7
    %v1402 = vsub.s32 %v650, %v1401
    %v1403 = vrot.slane %v1349, %v1402
    %v1404 = vlaneseq
    %v1405 = vshrl.u32 %v1404, 7
    %v1406 = vsub.s32 %v650, %v1405
    %v1407 = vrot.slane %v1352, %v1406
    %v1408 = vlaneseq
    %v1409 = vshrl.u32 %v1408, 7
    %v1410 = vsub.s32 %v650, %v1409
    %v1411 = vrot.slane %v1355, %v1410
    %v1412 = vlaneseq
    %v1413 = vshrl.u32 %v1412, 7
    %v1414 = vsub.s32 %v650, %v1413
    %v1415 = vrot.slane %v1358, %v1414
    %v1416 = vlaneseq
    %v1417 = vshrl.u32 %v1416, 7
    %v1418 = vsub.s32 %v650, %v1417
    %v1419 = vrot.slane %v1361, %v1418
    %v1420 = vlaneseq
    %v1421 = vshrl.u32 %v1420, 7
    %v1422 = vsub.s32 %v650, %v1421
    %v1423 = vrot.slane %v1364, %v1422
    %v1424 = vlaneseq
    %v1425 = vshrl.u32 %v1424, 7
    %v1426 = vsub.s32 %v650, %v1425
    %v1427 = vrot.slane %v1367, %v1426
    %v1428 = vlaneseq
    %v1429 = vshrl.u32 %v1428, 7
    %v1430 = vsub.s32 %v650, %v1429
    %v1431 = vrot.slane %v1370, %v1430
    %v1432 = vlaneseq
    %v1433 = vshrl.u32 %v1432, 7
    %v1434 = vsub.s32 %v650, %v1433
    %v1435 = vrot.slane %v1373, %v1434
    %v1436 = vlaneseq
    %v1437 = vshrl.u32 %v1436, 7
    %v1438 = vsub.s32 %v650, %v1437
    %v1439 = vrot.slane %v1376, %v1438
    %v1440 = vlaneseq
    %v1441 = vshrl.u32 %v1440, 7
    %v1442 = vsub.s32 %v650, %v1441
    %v1443 = vrot.slane %v1379, %v1442
    %v1444 = vsel %vm715, %v1387, %v1383
    %v1445 = vsel %vm717, %v1391, %v1444
    %v1446 = vsel %vm719, %v1395, %v1445
    %v1447 = vsel %vm721, %v1399, %v1446
    %v1448 = vsel %vm723, %v1403, %v1447
    %v1449 = vsel %vm725, %v1407, %v1448
    %v1450 = vsel %vm727, %v1411, %v1449
    %v1451 = vsel %vm715, %v1419, %v1415
    %v1452 = vsel %vm717, %v1423, %v1451
    %v1453 = vsel %vm719, %v1427, %v1452
    %v1454 = vsel %vm721, %v1431, %v1453
    %v1455 = vsel %vm723, %v1435, %v1454
    %v1456 = vsel %vm725, %v1439, %v1455
    %v1457 = vsel %vm727, %v1443, %v1456
    %v1460 = vsel %vm1179, %v1450, 0.0
    %1461 = vadd.xlane.f32.xlu0 %v1460
    %v1462 = vpop.xlane.xlu0 %1461
    %v1463 = vsel %vm1179, %v1457, 0.0
    %1464 = vadd.xlane.f32.xlu0 %v1463
    %v1465 = vpop.xlane.xlu0 %1464
    %v1466 = vrcp.pop %v1462
    %v1467 = vrcp.pop %v1465
    %v1470 = vlaneseq
    %v1471 = vshrl.u32 %v1470, 7
    %v1472 = vsub.s32 0, %v1471
    %v1473 = vrot.slane %v1466, %v1472
    %v1474 = vlaneseq
    %v1475 = vshrl.u32 %v1474, 7
    %v1476 = vsub.s32 1, %v1475
    %v1477 = vrot.slane %v1466, %v1476
    %v1478 = vlaneseq
    %v1479 = vshrl.u32 %v1478, 7
    %v1480 = vsub.s32 2, %v1479
    %v1481 = vrot.slane %v1466, %v1480
    %v1482 = vlaneseq
    %v1483 = vshrl.u32 %v1482, 7
    %v1484 = vsub.s32 3, %v1483
    %v1485 = vrot.slane %v1466, %v1484
    %v1486 = vlaneseq
    %v1487 = vshrl.u32 %v1486, 7
    %v1488 = vsub.s32 4, %v1487
    %v1489 = vrot.slane %v1466, %v1488
    %v1490 = vlaneseq
    %v1491 = vshrl.u32 %v1490, 7
    %v1492 = vsub.s32 5, %v1491
    %v1493 = vrot.slane %v1466, %v1492
    %v1494 = vlaneseq
    %v1495 = vshrl.u32 %v1494, 7
    %v1496 = vsub.s32 6, %v1495
    %v1497 = vrot.slane %v1466, %v1496
    %v1498 = vlaneseq
    %v1499 = vshrl.u32 %v1498, 7
    %v1500 = vsub.s32 7, %v1499
    %v1501 = vrot.slane %v1466, %v1500
    %v1502 = vlaneseq
    %v1503 = vshrl.u32 %v1502, 7
    %v1504 = vsub.s32 0, %v1503
    %v1505 = vrot.slane %v1467, %v1504
    %v1506 = vlaneseq
    %v1507 = vshrl.u32 %v1506, 7
    %v1508 = vsub.s32 1, %v1507
    %v1509 = vrot.slane %v1467, %v1508
    %v1510 = vlaneseq
    %v1511 = vshrl.u32 %v1510, 7
    %v1512 = vsub.s32 2, %v1511
    %v1513 = vrot.slane %v1467, %v1512
    %v1514 = vlaneseq
    %v1515 = vshrl.u32 %v1514, 7
    %v1516 = vsub.s32 3, %v1515
    %v1517 = vrot.slane %v1467, %v1516
    %v1518 = vlaneseq
    %v1519 = vshrl.u32 %v1518, 7
    %v1520 = vsub.s32 4, %v1519
    %v1521 = vrot.slane %v1467, %v1520
    %v1522 = vlaneseq
    %v1523 = vshrl.u32 %v1522, 7
    %v1524 = vsub.s32 5, %v1523
    %v1525 = vrot.slane %v1467, %v1524
    %v1526 = vlaneseq
    %v1527 = vshrl.u32 %v1526, 7
    %v1528 = vsub.s32 6, %v1527
    %v1529 = vrot.slane %v1467, %v1528
    %v1530 = vlaneseq
    %v1531 = vshrl.u32 %v1530, 7
    %v1532 = vsub.s32 7, %v1531
    %v1533 = vrot.slane %v1467, %v1532
    %v1550 = vmul.f32 %v1285, %v1473
    %v1551 = vmul.f32 %v1287, %v1477
    %v1552 = vmul.f32 %v1289, %v1481
    %v1553 = vmul.f32 %v1291, %v1485
    %v1554 = vmul.f32 %v1293, %v1489
    %v1555 = vmul.f32 %v1295, %v1493
    %v1556 = vmul.f32 %v1297, %v1497
    %v1557 = vmul.f32 %v1299, %v1501
    %v1558 = vmul.f32 %v1301, %v1505
    %v1559 = vmul.f32 %v1303, %v1509
    %v1560 = vmul.f32 %v1305, %v1513
    %v1561 = vmul.f32 %v1307, %v1517
    %v1562 = vmul.f32 %v1309, %v1521
    %v1563 = vmul.f32 %v1311, %v1525
    %v1564 = vmul.f32 %v1313, %v1529
    %v1565 = vmul.f32 %v1315, %v1533
    %1567 = vset.pattern.permute.xlu0 0
    %1568 = vperm.xlu0 %1567, %v1550
    %v1569 = vpop.permute.xlu0 %1568
    %1572 = vset.pattern.permute.xlu0 0
    %1573 = vperm.xlu0 %1572, %v1551
    %v1574 = vpop.permute.xlu0 %1573
    %1577 = vset.pattern.permute.xlu0 0
    %1578 = vperm.xlu0 %1577, %v1552
    %v1579 = vpop.permute.xlu0 %1578
    %1582 = vset.pattern.permute.xlu0 0
    %1583 = vperm.xlu0 %1582, %v1553
    %v1584 = vpop.permute.xlu0 %1583
    %1587 = vset.pattern.permute.xlu0 0
    %1588 = vperm.xlu0 %1587, %v1554
    %v1589 = vpop.permute.xlu0 %1588
    %1592 = vset.pattern.permute.xlu0 0
    %1593 = vperm.xlu0 %1592, %v1555
    %v1594 = vpop.permute.xlu0 %1593
    %1597 = vset.pattern.permute.xlu0 0
    %1598 = vperm.xlu0 %1597, %v1556
    %v1599 = vpop.permute.xlu0 %1598
    %1602 = vset.pattern.permute.xlu0 0
    %1603 = vperm.xlu0 %1602, %v1557
    %v1604 = vpop.permute.xlu0 %1603
    %1607 = vset.pattern.permute.xlu0 0
    %1608 = vperm.xlu0 %1607, %v1558
    %v1609 = vpop.permute.xlu0 %1608
    %1612 = vset.pattern.permute.xlu0 0
    %1613 = vperm.xlu0 %1612, %v1559
    %v1614 = vpop.permute.xlu0 %1613
    %1617 = vset.pattern.permute.xlu0 0
    %1618 = vperm.xlu0 %1617, %v1560
    %v1619 = vpop.permute.xlu0 %1618
    %1622 = vset.pattern.permute.xlu0 0
    %1623 = vperm.xlu0 %1622, %v1561
    %v1624 = vpop.permute.xlu0 %1623
    %1627 = vset.pattern.permute.xlu0 0
    %1628 = vperm.xlu0 %1627, %v1562
    %v1629 = vpop.permute.xlu0 %1628
    %1632 = vset.pattern.permute.xlu0 0
    %1633 = vperm.xlu0 %1632, %v1563
    %v1634 = vpop.permute.xlu0 %1633
    %1637 = vset.pattern.permute.xlu0 0
    %1638 = vperm.xlu0 %1637, %v1564
    %v1639 = vpop.permute.xlu0 %1638
    %1642 = vset.pattern.permute.xlu0 0
    %1643 = vperm.xlu0 %1642, %v1565
    %v1644 = vpop.permute.xlu0 %1643
    %1662 = vrot.lane.b32.xlu0 %v65, 100
    %v1663 = vpop.permute.xlu0 %1662
    %1664 = vrot.lane.b32.xlu0 %v66, 100
    %v1665 = vpop.permute.xlu0 %1664
    %1666 = vrot.lane.b32.xlu0 %v67, 100
    %v1667 = vpop.permute.xlu0 %1666
    %1668 = vrot.lane.b32.xlu0 %v68, 100
    %v1669 = vpop.permute.xlu0 %1668
    %1670 = vrot.lane.b32.xlu0 %v69, 100
    %v1671 = vpop.permute.xlu0 %1670
    %1672 = vrot.lane.b32.xlu0 %v70, 100
    %v1673 = vpop.permute.xlu0 %1672
    %1674 = vrot.lane.b32.xlu0 %v71, 100
    %v1675 = vpop.permute.xlu0 %1674
    %1676 = vrot.lane.b32.xlu0 %v72, 100
    %v1677 = vpop.permute.xlu0 %1676
    %1678 = vrot.lane.b32.xlu0 %v73, 100
    %v1679 = vpop.permute.xlu0 %1678
    %1680 = vrot.lane.b32.xlu0 %v74, 100
    %v1681 = vpop.permute.xlu0 %1680
    %1682 = vrot.lane.b32.xlu0 %v75, 100
    %v1683 = vpop.permute.xlu0 %1682
    %1684 = vrot.lane.b32.xlu0 %v76, 100
    %v1685 = vpop.permute.xlu0 %1684
    %1686 = vrot.lane.b32.xlu0 %v77, 100
    %v1687 = vpop.permute.xlu0 %1686
    %1688 = vrot.lane.b32.xlu0 %v78, 100
    %v1689 = vpop.permute.xlu0 %1688
    %1690 = vrot.lane.b32.xlu0 %v79, 100
    %v1691 = vpop.permute.xlu0 %1690
    %1692 = vrot.lane.b32.xlu0 %v80, 100
    %v1693 = vpop.permute.xlu0 %1692
    %v1710 = vmul.f32 %v1569, %v1663
    %v1711 = vmul.f32 %v1574, %v1665
    %v1712 = vmul.f32 %v1579, %v1667
    %v1713 = vmul.f32 %v1584, %v1669
    %v1714 = vmul.f32 %v1589, %v1671
    %v1715 = vmul.f32 %v1594, %v1673
    %v1716 = vmul.f32 %v1599, %v1675
    %v1717 = vmul.f32 %v1604, %v1677
    %v1718 = vmul.f32 %v1609, %v1679
    %v1719 = vmul.f32 %v1614, %v1681
    %v1720 = vmul.f32 %v1619, %v1683
    %v1721 = vmul.f32 %v1624, %v1685
    %v1722 = vmul.f32 %v1629, %v1687
    %v1723 = vmul.f32 %v1634, %v1689
    %v1724 = vmul.f32 %v1639, %v1691
    %v1725 = vmul.f32 %v1644, %v1693
    %vm1726 = vcmask 322560
    %v1727 = vsel %vm1726, %v1710, 0.0
    %v1728 = vrot.slane %v1727, 4
    %v1729 = vadd.f32 %v1727, %v1728
    %v1730 = vrot.slane %v1729, 2
    %v1731 = vadd.f32 %v1729, %v1730
    %v1732 = vrot.slane %v1731, 1
    %v1733 = vadd.f32 %v1731, %v1732
    %v1734 = vsel %vm1726, %v1711, 0.0
    %v1735 = vrot.slane %v1734, 4
    %v1736 = vadd.f32 %v1734, %v1735
    %v1737 = vrot.slane %v1736, 2
    %v1738 = vadd.f32 %v1736, %v1737
    %v1739 = vrot.slane %v1738, 1
    %v1740 = vadd.f32 %v1738, %v1739
    %v1741 = vsel %vm1726, %v1712, 0.0
    %v1742 = vrot.slane %v1741, 4
    %v1743 = vadd.f32 %v1741, %v1742
    %v1744 = vrot.slane %v1743, 2
    %v1745 = vadd.f32 %v1743, %v1744
    %v1746 = vrot.slane %v1745, 1
    %v1747 = vadd.f32 %v1745, %v1746
    %v1748 = vsel %vm1726, %v1713, 0.0
    %v1749 = vrot.slane %v1748, 4
    %v1750 = vadd.f32 %v1748, %v1749
    %v1751 = vrot.slane %v1750, 2
    %v1752 = vadd.f32 %v1750, %v1751
    %v1753 = vrot.slane %v1752, 1
    %v1754 = vadd.f32 %v1752, %v1753
    %v1755 = vsel %vm1726, %v1714, 0.0
    %v1756 = vrot.slane %v1755, 4
    %v1757 = vadd.f32 %v1755, %v1756
    %v1758 = vrot.slane %v1757, 2
    %v1759 = vadd.f32 %v1757, %v1758
    %v1760 = vrot.slane %v1759, 1
    %v1761 = vadd.f32 %v1759, %v1760
    %v1762 = vsel %vm1726, %v1715, 0.0
    %v1763 = vrot.slane %v1762, 4
    %v1764 = vadd.f32 %v1762, %v1763
    %v1765 = vrot.slane %v1764, 2
    %v1766 = vadd.f32 %v1764, %v1765
    %v1767 = vrot.slane %v1766, 1
    %v1768 = vadd.f32 %v1766, %v1767
    %v1769 = vsel %vm1726, %v1716, 0.0
    %v1770 = vrot.slane %v1769, 4
    %v1771 = vadd.f32 %v1769, %v1770
    %v1772 = vrot.slane %v1771, 2
    %v1773 = vadd.f32 %v1771, %v1772
    %v1774 = vrot.slane %v1773, 1
    %v1775 = vadd.f32 %v1773, %v1774
    %v1776 = vsel %vm1726, %v1717, 0.0
    %v1777 = vrot.slane %v1776, 4
    %v1778 = vadd.f32 %v1776, %v1777
    %v1779 = vrot.slane %v1778, 2
    %v1780 = vadd.f32 %v1778, %v1779
    %v1781 = vrot.slane %v1780, 1
    %v1782 = vadd.f32 %v1780, %v1781
    %v1783 = vsel %vm1726, %v1718, 0.0
    %v1784 = vrot.slane %v1783, 4
    %v1785 = vadd.f32 %v1783, %v1784
    %v1786 = vrot.slane %v1785, 2
    %v1787 = vadd.f32 %v1785, %v1786
    %v1788 = vrot.slane %v1787, 1
    %v1789 = vadd.f32 %v1787, %v1788
    %v1790 = vsel %vm1726, %v1719, 0.0
    %v1791 = vrot.slane %v1790, 4
    %v1792 = vadd.f32 %v1790, %v1791
    %v1793 = vrot.slane %v1792, 2
    %v1794 = vadd.f32 %v1792, %v1793
    %v1795 = vrot.slane %v1794, 1
    %v1796 = vadd.f32 %v1794, %v1795
    %v1797 = vsel %vm1726, %v1720, 0.0
    %v1798 = vrot.slane %v1797, 4
    %v1799 = vadd.f32 %v1797, %v1798
    %v1800 = vrot.slane %v1799, 2
    %v1801 = vadd.f32 %v1799, %v1800
    %v1802 = vrot.slane %v1801, 1
    %v1803 = vadd.f32 %v1801, %v1802
    %v1804 = vsel %vm1726, %v1721, 0.0
    %v1805 = vrot.slane %v1804, 4
    %v1806 = vadd.f32 %v1804, %v1805
    %v1807 = vrot.slane %v1806, 2
    %v1808 = vadd.f32 %v1806, %v1807
    %v1809 = vrot.slane %v1808, 1
    %v1810 = vadd.f32 %v1808, %v1809
    %v1811 = vsel %vm1726, %v1722, 0.0
    %v1812 = vrot.slane %v1811, 4
    %v1813 = vadd.f32 %v1811, %v1812
    %v1814 = vrot.slane %v1813, 2
    %v1815 = vadd.f32 %v1813, %v1814
    %v1816 = vrot.slane %v1815, 1
    %v1817 = vadd.f32 %v1815, %v1816
    %v1818 = vsel %vm1726, %v1723, 0.0
    %v1819 = vrot.slane %v1818, 4
    %v1820 = vadd.f32 %v1818, %v1819
    %v1821 = vrot.slane %v1820, 2
    %v1822 = vadd.f32 %v1820, %v1821
    %v1823 = vrot.slane %v1822, 1
    %v1824 = vadd.f32 %v1822, %v1823
    %v1825 = vsel %vm1726, %v1724, 0.0
    %v1826 = vrot.slane %v1825, 4
    %v1827 = vadd.f32 %v1825, %v1826
    %v1828 = vrot.slane %v1827, 2
    %v1829 = vadd.f32 %v1827, %v1828
    %v1830 = vrot.slane %v1829, 1
    %v1831 = vadd.f32 %v1829, %v1830
    %v1832 = vsel %vm1726, %v1725, 0.0
    %v1833 = vrot.slane %v1832, 4
    %v1834 = vadd.f32 %v1832, %v1833
    %v1835 = vrot.slane %v1834, 2
    %v1836 = vadd.f32 %v1834, %v1835
    %v1837 = vrot.slane %v1836, 1
    %v1838 = vadd.f32 %v1836, %v1837
    %v1839 = vmul.f32 %v1569, %v97
    %v1840 = vmul.f32 %v1574, %v98
    %v1841 = vmul.f32 %v1579, %v99
    %v1842 = vmul.f32 %v1584, %v100
    %v1843 = vmul.f32 %v1589, %v101
    %v1844 = vmul.f32 %v1594, %v102
    %v1845 = vmul.f32 %v1599, %v103
    %v1846 = vmul.f32 %v1604, %v104
    %v1847 = vmul.f32 %v1609, %v105
    %v1848 = vmul.f32 %v1614, %v106
    %v1849 = vmul.f32 %v1619, %v107
    %v1850 = vmul.f32 %v1624, %v108
    %v1851 = vmul.f32 %v1629, %v109
    %v1852 = vmul.f32 %v1634, %v110
    %v1853 = vmul.f32 %v1639, %v111
    %v1854 = vmul.f32 %v1644, %v112
    %v1855 = vsel %vm534, %v1839, 0.0
    %v1856 = vrot.slane %v1855, 4
    %v1857 = vadd.f32 %v1855, %v1856
    %v1858 = vrot.slane %v1857, 2
    %v1859 = vadd.f32 %v1857, %v1858
    %v1860 = vrot.slane %v1859, 1
    %v1861 = vadd.f32 %v1859, %v1860
    %v1862 = vsel %vm534, %v1840, 0.0
    %v1863 = vrot.slane %v1862, 4
    %v1864 = vadd.f32 %v1862, %v1863
    %v1865 = vrot.slane %v1864, 2
    %v1866 = vadd.f32 %v1864, %v1865
    %v1867 = vrot.slane %v1866, 1
    %v1868 = vadd.f32 %v1866, %v1867
    %v1869 = vsel %vm534, %v1841, 0.0
    %v1870 = vrot.slane %v1869, 4
    %v1871 = vadd.f32 %v1869, %v1870
    %v1872 = vrot.slane %v1871, 2
    %v1873 = vadd.f32 %v1871, %v1872
    %v1874 = vrot.slane %v1873, 1
    %v1875 = vadd.f32 %v1873, %v1874
    %v1876 = vsel %vm534, %v1842, 0.0
    %v1877 = vrot.slane %v1876, 4
    %v1878 = vadd.f32 %v1876, %v1877
    %v1879 = vrot.slane %v1878, 2
    %v1880 = vadd.f32 %v1878, %v1879
    %v1881 = vrot.slane %v1880, 1
    %v1882 = vadd.f32 %v1880, %v1881
    %v1883 = vsel %vm534, %v1843, 0.0
    %v1884 = vrot.slane %v1883, 4
    %v1885 = vadd.f32 %v1883, %v1884
    %v1886 = vrot.slane %v1885, 2
    %v1887 = vadd.f32 %v1885, %v1886
    %v1888 = vrot.slane %v1887, 1
    %v1889 = vadd.f32 %v1887, %v1888
    %v1890 = vsel %vm534, %v1844, 0.0
    %v1891 = vrot.slane %v1890, 4
    %v1892 = vadd.f32 %v1890, %v1891
    %v1893 = vrot.slane %v1892, 2
    %v1894 = vadd.f32 %v1892, %v1893
    %v1895 = vrot.slane %v1894, 1
    %v1896 = vadd.f32 %v1894, %v1895
    %v1897 = vsel %vm534, %v1845, 0.0
    %v1898 = vrot.slane %v1897, 4
    %v1899 = vadd.f32 %v1897, %v1898
    %v1900 = vrot.slane %v1899, 2
    %v1901 = vadd.f32 %v1899, %v1900
    %v1902 = vrot.slane %v1901, 1
    %v1903 = vadd.f32 %v1901, %v1902
    %v1904 = vsel %vm534, %v1846, 0.0
    %v1905 = vrot.slane %v1904, 4
    %v1906 = vadd.f32 %v1904, %v1905
    %v1907 = vrot.slane %v1906, 2
    %v1908 = vadd.f32 %v1906, %v1907
    %v1909 = vrot.slane %v1908, 1
    %v1910 = vadd.f32 %v1908, %v1909
    %v1911 = vsel %vm534, %v1847, 0.0
    %v1912 = vrot.slane %v1911, 4
    %v1913 = vadd.f32 %v1911, %v1912
    %v1914 = vrot.slane %v1913, 2
    %v1915 = vadd.f32 %v1913, %v1914
    %v1916 = vrot.slane %v1915, 1
    %v1917 = vadd.f32 %v1915, %v1916
    %v1918 = vsel %vm534, %v1848, 0.0
    %v1919 = vrot.slane %v1918, 4
    %v1920 = vadd.f32 %v1918, %v1919
    %v1921 = vrot.slane %v1920, 2
    %v1922 = vadd.f32 %v1920, %v1921
    %v1923 = vrot.slane %v1922, 1
    %v1924 = vadd.f32 %v1922, %v1923
    %v1925 = vsel %vm534, %v1849, 0.0
    %v1926 = vrot.slane %v1925, 4
    %v1927 = vadd.f32 %v1925, %v1926
    %v1928 = vrot.slane %v1927, 2
    %v1929 = vadd.f32 %v1927, %v1928
    %v1930 = vrot.slane %v1929, 1
    %v1931 = vadd.f32 %v1929, %v1930
    %v1932 = vsel %vm534, %v1850, 0.0
    %v1933 = vrot.slane %v1932, 4
    %v1934 = vadd.f32 %v1932, %v1933
    %v1935 = vrot.slane %v1934, 2
    %v1936 = vadd.f32 %v1934, %v1935
    %v1937 = vrot.slane %v1936, 1
    %v1938 = vadd.f32 %v1936, %v1937
    %v1939 = vsel %vm534, %v1851, 0.0
    %v1940 = vrot.slane %v1939, 4
    %v1941 = vadd.f32 %v1939, %v1940
    %v1942 = vrot.slane %v1941, 2
    %v1943 = vadd.f32 %v1941, %v1942
    %v1944 = vrot.slane %v1943, 1
    %v1945 = vadd.f32 %v1943, %v1944
    %v1946 = vsel %vm534, %v1852, 0.0
    %v1947 = vrot.slane %v1946, 4
    %v1948 = vadd.f32 %v1946, %v1947
    %v1949 = vrot.slane %v1948, 2
    %v1950 = vadd.f32 %v1948, %v1949
    %v1951 = vrot.slane %v1950, 1
    %v1952 = vadd.f32 %v1950, %v1951
    %v1953 = vsel %vm534, %v1853, 0.0
    %v1954 = vrot.slane %v1953, 4
    %v1955 = vadd.f32 %v1953, %v1954
    %v1956 = vrot.slane %v1955, 2
    %v1957 = vadd.f32 %v1955, %v1956
    %v1958 = vrot.slane %v1957, 1
    %v1959 = vadd.f32 %v1957, %v1958
    %v1960 = vsel %vm534, %v1854, 0.0
    %v1961 = vrot.slane %v1960, 4
    %v1962 = vadd.f32 %v1960, %v1961
    %v1963 = vrot.slane %v1962, 2
    %v1964 = vadd.f32 %v1962, %v1963
    %v1965 = vrot.slane %v1964, 1
    %v1966 = vadd.f32 %v1964, %v1965
    %1968 = vset.pattern.permute.xlu0 37
    %1969 = vperm.xlu0 %1968, %v47
    %v1970 = vpop.permute.xlu0 %1969
    %1972 = vset.pattern.permute.xlu0 37
    %1973 = vperm.xlu0 %1972, %v48
    %v1974 = vpop.permute.xlu0 %1973
    %v1975 = vrot.slane %v1970, 1
    %v1976 = vrot.slane %v1970, 2
    %v1977 = vrot.slane %v1970, 3
    %v1978 = vrot.slane %v1970, 4
    %v1979 = vrot.slane %v1970, 5
    %v1980 = vrot.slane %v1970, 6
    %v1981 = vrot.slane %v1970, 7
    %v1982 = vrot.slane %v1974, 1
    %v1983 = vrot.slane %v1974, 2
    %v1984 = vrot.slane %v1974, 3
    %v1985 = vrot.slane %v1974, 4
    %v1986 = vrot.slane %v1974, 5
    %v1987 = vrot.slane %v1974, 6
    %v1988 = vrot.slane %v1974, 7
    %v2005 = vsub.f32 %v1733, %v1970
    %v2006 = vsub.f32 %v1740, %v1975
    %v2007 = vsub.f32 %v1747, %v1976
    %v2008 = vsub.f32 %v1754, %v1977
    %v2009 = vsub.f32 %v1761, %v1978
    %v2010 = vsub.f32 %v1768, %v1979
    %v2011 = vsub.f32 %v1775, %v1980
    %v2012 = vsub.f32 %v1782, %v1981
    %v2013 = vsub.f32 %v1789, %v1974
    %v2014 = vsub.f32 %v1796, %v1982
    %v2015 = vsub.f32 %v1803, %v1983
    %v2016 = vsub.f32 %v1810, %v1984
    %v2017 = vsub.f32 %v1817, %v1985
    %v2018 = vsub.f32 %v1824, %v1986
    %v2019 = vsub.f32 %v1831, %v1987
    %v2020 = vsub.f32 %v1838, %v1988
    %2021 = vset.pattern.permute.xlu0 38
    %2022 = vperm.xlu0 %2021, %v47
    %v2023 = vpop.permute.xlu0 %2022
    %2024 = vset.pattern.permute.xlu0 38
    %2025 = vperm.xlu0 %2024, %v48
    %v2026 = vpop.permute.xlu0 %2025
    %v2027 = vrot.slane %v2023, 1
    %v2028 = vrot.slane %v2023, 2
    %v2029 = vrot.slane %v2023, 3
    %v2030 = vrot.slane %v2023, 4
    %v2031 = vrot.slane %v2023, 5
    %v2032 = vrot.slane %v2023, 6
    %v2033 = vrot.slane %v2023, 7
    %v2034 = vrot.slane %v2026, 1
    %v2035 = vrot.slane %v2026, 2
    %v2036 = vrot.slane %v2026, 3
    %v2037 = vrot.slane %v2026, 4
    %v2038 = vrot.slane %v2026, 5
    %v2039 = vrot.slane %v2026, 6
    %v2040 = vrot.slane %v2026, 7
    %v2057 = vsub.f32 %v1733, %v2023
    %v2058 = vsub.f32 %v1740, %v2027
    %v2059 = vsub.f32 %v1747, %v2028
    %v2060 = vsub.f32 %v1754, %v2029
    %v2061 = vsub.f32 %v1761, %v2030
    %v2062 = vsub.f32 %v1768, %v2031
    %v2063 = vsub.f32 %v1775, %v2032
    %v2064 = vsub.f32 %v1782, %v2033
    %v2065 = vsub.f32 %v1789, %v2026
    %v2066 = vsub.f32 %v1796, %v2034
    %v2067 = vsub.f32 %v1803, %v2035
    %v2068 = vsub.f32 %v1810, %v2036
    %v2069 = vsub.f32 %v1817, %v2037
    %v2070 = vsub.f32 %v1824, %v2038
    %v2071 = vsub.f32 %v1831, %v2039
    %v2072 = vsub.f32 %v1838, %v2040
    %2073 = vset.pattern.permute.xlu0 39
    %2074 = vperm.xlu0 %2073, %v47
    %v2075 = vpop.permute.xlu0 %2074
    %2076 = vset.pattern.permute.xlu0 39
    %2077 = vperm.xlu0 %2076, %v48
    %v2078 = vpop.permute.xlu0 %2077
    %v2079 = vrot.slane %v2075, 1
    %v2080 = vrot.slane %v2075, 2
    %v2081 = vrot.slane %v2075, 3
    %v2082 = vrot.slane %v2075, 4
    %v2083 = vrot.slane %v2075, 5
    %v2084 = vrot.slane %v2075, 6
    %v2085 = vrot.slane %v2075, 7
    %v2086 = vrot.slane %v2078, 1
    %v2087 = vrot.slane %v2078, 2
    %v2088 = vrot.slane %v2078, 3
    %v2089 = vrot.slane %v2078, 4
    %v2090 = vrot.slane %v2078, 5
    %v2091 = vrot.slane %v2078, 6
    %v2092 = vrot.slane %v2078, 7
    %v2109 = vsub.f32 %v1733, %v2075
    %v2110 = vsub.f32 %v1740, %v2079
    %v2111 = vsub.f32 %v1747, %v2080
    %v2112 = vsub.f32 %v1754, %v2081
    %v2113 = vsub.f32 %v1761, %v2082
    %v2114 = vsub.f32 %v1768, %v2083
    %v2115 = vsub.f32 %v1775, %v2084
    %v2116 = vsub.f32 %v1782, %v2085
    %v2117 = vsub.f32 %v1789, %v2078
    %v2118 = vsub.f32 %v1796, %v2086
    %v2119 = vsub.f32 %v1803, %v2087
    %v2120 = vsub.f32 %v1810, %v2088
    %v2121 = vsub.f32 %v1817, %v2089
    %v2122 = vsub.f32 %v1824, %v2090
    %v2123 = vsub.f32 %v1831, %v2091
    %v2124 = vsub.f32 %v1838, %v2092
    %2125 = vset.pattern.permute.xlu0 28
    %2126 = vperm.xlu0 %2125, %v47
    %v2127 = vpop.permute.xlu0 %2126
    %2129 = vset.pattern.permute.xlu0 28
    %2130 = vperm.xlu0 %2129, %v48
    %v2131 = vpop.permute.xlu0 %2130
    %v2149 = vrot.slane %v2006, 7
    %v2150 = vsel %vm715, %v2149, %v2005
    %v2151 = vrot.slane %v2007, 6
    %v2152 = vsel %vm717, %v2151, %v2150
    %v2153 = vrot.slane %v2008, 5
    %v2154 = vsel %vm719, %v2153, %v2152
    %v2155 = vrot.slane %v2009, 4
    %v2156 = vsel %vm721, %v2155, %v2154
    %v2157 = vrot.slane %v2010, 3
    %v2158 = vsel %vm723, %v2157, %v2156
    %v2159 = vrot.slane %v2011, 2
    %v2160 = vsel %vm725, %v2159, %v2158
    %v2161 = vrot.slane %v2012, 1
    %v2162 = vsel %vm727, %v2161, %v2160
    %v2163 = vrot.slane %v2014, 7
    %v2164 = vsel %vm715, %v2163, %v2013
    %v2165 = vrot.slane %v2015, 6
    %v2166 = vsel %vm717, %v2165, %v2164
    %v2167 = vrot.slane %v2016, 5
    %v2168 = vsel %vm719, %v2167, %v2166
    %v2169 = vrot.slane %v2017, 4
    %v2170 = vsel %vm721, %v2169, %v2168
    %v2171 = vrot.slane %v2018, 3
    %v2172 = vsel %vm723, %v2171, %v2170
    %v2173 = vrot.slane %v2019, 2
    %v2174 = vsel %vm725, %v2173, %v2172
    %v2175 = vrot.slane %v2020, 1
    %v2176 = vsel %vm727, %v2175, %v2174
    %2177 = vrot.lane.b32.xlu0 %v2162, 112
    %v2178 = vpop.permute.xlu0 %2177
    %2179 = vrot.lane.b32.xlu0 %v2176, 112
    %v2180 = vpop.permute.xlu0 %2179
    %v2183 = vmul.f32 %v2127, %v2178
    %v2184 = vmul.f32 %v2131, %v2180
    %2185 = vset.pattern.permute.xlu0 31
    %2186 = vperm.xlu0 %2185, %v47
    %v2187 = vpop.permute.xlu0 %2186
    %2189 = vset.pattern.permute.xlu0 31
    %2190 = vperm.xlu0 %2189, %v48
    %v2191 = vpop.permute.xlu0 %2190
    %v2209 = vrot.slane %v2058, 7
    %v2210 = vsel %vm715, %v2209, %v2057
    %v2211 = vrot.slane %v2059, 6
    %v2212 = vsel %vm717, %v2211, %v2210
    %v2213 = vrot.slane %v2060, 5
    %v2214 = vsel %vm719, %v2213, %v2212
    %v2215 = vrot.slane %v2061, 4
    %v2216 = vsel %vm721, %v2215, %v2214
    %v2217 = vrot.slane %v2062, 3
    %v2218 = vsel %vm723, %v2217, %v2216
    %v2219 = vrot.slane %v2063, 2
    %v2220 = vsel %vm725, %v2219, %v2218
    %v2221 = vrot.slane %v2064, 1
    %v2222 = vsel %vm727, %v2221, %v2220
    %v2223 = vrot.slane %v2066, 7
    %v2224 = vsel %vm715, %v2223, %v2065
    %v2225 = vrot.slane %v2067, 6
    %v2226 = vsel %vm717, %v2225, %v2224
    %v2227 = vrot.slane %v2068, 5
    %v2228 = vsel %vm719, %v2227, %v2226
    %v2229 = vrot.slane %v2069, 4
    %v2230 = vsel %vm721, %v2229, %v2228
    %v2231 = vrot.slane %v2070, 3
    %v2232 = vsel %vm723, %v2231, %v2230
    %v2233 = vrot.slane %v2071, 2
    %v2234 = vsel %vm725, %v2233, %v2232
    %v2235 = vrot.slane %v2072, 1
    %v2236 = vsel %vm727, %v2235, %v2234
    %2237 = vrot.lane.b32.xlu0 %v2222, 104
    %v2238 = vpop.permute.xlu0 %2237
    %2239 = vrot.lane.b32.xlu0 %v2236, 104
    %v2240 = vpop.permute.xlu0 %2239
    %v2243 = vmul.f32 %v2187, %v2238
    %v2244 = vmul.f32 %v2191, %v2240
    %v2245 = vadd.f32 %v2183, %v2243
    %v2246 = vadd.f32 %v2184, %v2244
    %2247 = vset.pattern.permute.xlu0 34
    %2248 = vperm.xlu0 %2247, %v47
    %v2249 = vpop.permute.xlu0 %2248
    %2251 = vset.pattern.permute.xlu0 34
    %2252 = vperm.xlu0 %2251, %v48
    %v2253 = vpop.permute.xlu0 %2252
    %v2271 = vrot.slane %v2110, 7
    %v2272 = vsel %vm715, %v2271, %v2109
    %v2273 = vrot.slane %v2111, 6
    %v2274 = vsel %vm717, %v2273, %v2272
    %v2275 = vrot.slane %v2112, 5
    %v2276 = vsel %vm719, %v2275, %v2274
    %v2277 = vrot.slane %v2113, 4
    %v2278 = vsel %vm721, %v2277, %v2276
    %v2279 = vrot.slane %v2114, 3
    %v2280 = vsel %vm723, %v2279, %v2278
    %v2281 = vrot.slane %v2115, 2
    %v2282 = vsel %vm725, %v2281, %v2280
    %v2283 = vrot.slane %v2116, 1
    %v2284 = vsel %vm727, %v2283, %v2282
    %v2285 = vrot.slane %v2118, 7
    %v2286 = vsel %vm715, %v2285, %v2117
    %v2287 = vrot.slane %v2119, 6
    %v2288 = vsel %vm717, %v2287, %v2286
    %v2289 = vrot.slane %v2120, 5
    %v2290 = vsel %vm719, %v2289, %v2288
    %v2291 = vrot.slane %v2121, 4
    %v2292 = vsel %vm721, %v2291, %v2290
    %v2293 = vrot.slane %v2122, 3
    %v2294 = vsel %vm723, %v2293, %v2292
    %v2295 = vrot.slane %v2123, 2
    %v2296 = vsel %vm725, %v2295, %v2294
    %v2297 = vrot.slane %v2124, 1
    %v2298 = vsel %vm727, %v2297, %v2296
    %2299 = vrot.lane.b32.xlu0 %v2284, 96
    %v2300 = vpop.permute.xlu0 %2299
    %2301 = vrot.lane.b32.xlu0 %v2298, 96
    %v2302 = vpop.permute.xlu0 %2301
    %v2305 = vmul.f32 %v2249, %v2300
    %v2306 = vmul.f32 %v2253, %v2302
    %v2307 = vadd.f32 %v2245, %v2305
    %v2308 = vadd.f32 %v2246, %v2306
    %2309 = vset.pattern.permute.xlu0 29
    %2310 = vperm.xlu0 %2309, %v47
    %v2311 = vpop.permute.xlu0 %2310
    %2313 = vset.pattern.permute.xlu0 29
    %2314 = vperm.xlu0 %2313, %v48
    %v2315 = vpop.permute.xlu0 %2314
    %v2317 = vmul.f32 %v2311, %v2178
    %v2318 = vmul.f32 %v2315, %v2180
    %2319 = vset.pattern.permute.xlu0 32
    %2320 = vperm.xlu0 %2319, %v47
    %v2321 = vpop.permute.xlu0 %2320
    %2323 = vset.pattern.permute.xlu0 32
    %2324 = vperm.xlu0 %2323, %v48
    %v2325 = vpop.permute.xlu0 %2324
    %v2327 = vmul.f32 %v2321, %v2238
    %v2328 = vmul.f32 %v2325, %v2240
    %v2329 = vadd.f32 %v2317, %v2327
    %v2330 = vadd.f32 %v2318, %v2328
    %2331 = vset.pattern.permute.xlu0 35
    %2332 = vperm.xlu0 %2331, %v47
    %v2333 = vpop.permute.xlu0 %2332
    %2335 = vset.pattern.permute.xlu0 35
    %2336 = vperm.xlu0 %2335, %v48
    %v2337 = vpop.permute.xlu0 %2336
    %v2339 = vmul.f32 %v2333, %v2300
    %v2340 = vmul.f32 %v2337, %v2302
    %v2341 = vadd.f32 %v2329, %v2339
    %v2342 = vadd.f32 %v2330, %v2340
    %2343 = vset.pattern.permute.xlu0 30
    %2344 = vperm.xlu0 %2343, %v47
    %v2345 = vpop.permute.xlu0 %2344
    %2347 = vset.pattern.permute.xlu0 30
    %2348 = vperm.xlu0 %2347, %v48
    %v2349 = vpop.permute.xlu0 %2348
    %v2351 = vmul.f32 %v2345, %v2178
    %v2352 = vmul.f32 %v2349, %v2180
    %2353 = vset.pattern.permute.xlu0 33
    %2354 = vperm.xlu0 %2353, %v47
    %v2355 = vpop.permute.xlu0 %2354
    %2357 = vset.pattern.permute.xlu0 33
    %2358 = vperm.xlu0 %2357, %v48
    %v2359 = vpop.permute.xlu0 %2358
    %v2361 = vmul.f32 %v2355, %v2238
    %v2362 = vmul.f32 %v2359, %v2240
    %v2363 = vadd.f32 %v2351, %v2361
    %v2364 = vadd.f32 %v2352, %v2362
    %2365 = vset.pattern.permute.xlu0 36
    %2366 = vperm.xlu0 %2365, %v47
    %v2367 = vpop.permute.xlu0 %2366
    %2369 = vset.pattern.permute.xlu0 36
    %2370 = vperm.xlu0 %2369, %v48
    %v2371 = vpop.permute.xlu0 %2370
    %v2373 = vmul.f32 %v2367, %v2300
    %v2374 = vmul.f32 %v2371, %v2302
    %v2375 = vadd.f32 %v2363, %v2373
    %v2376 = vadd.f32 %v2364, %v2374
    %v2377 = vmul.f32 %v2307, %v2307
    %v2378 = vmul.f32 %v2308, %v2308
    %v2379 = vmul.f32 %v2341, %v2341
    %v2380 = vmul.f32 %v2342, %v2342
    %v2381 = vadd.f32 %v2377, %v2379
    %v2382 = vadd.f32 %v2378, %v2380
    %v2383 = vmul.f32 %v2375, %v2375
    %v2384 = vmul.f32 %v2376, %v2376
    %v2385 = vadd.f32 %v2381, %v2383
    %v2386 = vadd.f32 %v2382, %v2384
    %v2387 = vadd.f32 %v2385, 1e-08
    %v2388 = vadd.f32 %v2386, 1e-08
    %v2389 = vrsqrt.pop %v2387
    %v2390 = vmul.f32 %v2387, %v2389
    %vm2391 = vcmp.eq.f32.partialorder %v2387, inf
    %v2392 = vsel %vm2391, %v2387, %v2390
    %vm2393 = vcmp.eq.f32.partialorder %v2387, 0.0
    %v2394 = vand.u32 %v2387, 2147483648
    %v2395 = vsel %vm2393, %v2394, %v2392
    %v2396 = vrsqrt.pop %v2388
    %v2397 = vmul.f32 %v2388, %v2396
    %vm2398 = vcmp.eq.f32.partialorder %v2388, inf
    %v2399 = vsel %vm2398, %v2388, %v2397
    %vm2400 = vcmp.eq.f32.partialorder %v2388, 0.0
    %v2401 = vand.u32 %v2388, 2147483648
    %v2402 = vsel %vm2400, %v2401, %v2399
    %v2403 = vld [vmem:[%s6] sm:$0xff]
    %v2404 = vld [vmem:[%s6 + $0x8] sm:$0xff]
    %v2405 = vld [vmem:[%s6 + $0x10] sm:$0xff]
    %v2406 = vld [vmem:[%s6 + $0x18] sm:$0xff]
    %v2407 = vld [vmem:[%s6 + $0x20] sm:$0xff]
    %v2408 = vld [vmem:[%s6 + $0x28] sm:$0xff]
    %v2409 = vld [vmem:[%s6 + $0x30] sm:$0xff]
    %v2410 = vld [vmem:[%s6 + $0x38] sm:$0xff]
    %v2411 = vld [vmem:[%s5 + $0x2] sm:$0x1]
    %vm2412 = vcmask 64512
    %v2414 = vsel %vm2412, %v2307, 0
    %v2417 = vsel %vm2412, %v2308, 0
    %2419 = vmatprep.subr.mxu0 0.0
    %2420 = vmatpush1.msra.mxu0 %v2405
    %2421 = vmatprep.subr.mxu0 0.0
    %2422 = vmatpush1.msra.mxu0 0.0
    %2423 = vmatprep.subr.mxu0 0.0
    %2424 = vmatpush1.msra.mxu0 0.0
    %2425 = vmatprep.subr.mxu0 0.0
    %2426 = vmatpush1.msra.mxu0 0.0
    %2427 = vmatprep.subr.mxu0 0.0
    %2428 = vmatpush1.msra.mxu0 0.0
    %2429 = vmatprep.subr.mxu0 0.0
    %2430 = vmatpush1.msra.mxu0 0.0
    %2431 = vmatprep.subr.mxu0 0.0
    %2432 = vmatpush1.msra.mxu0 0.0
    %2433 = vmatprep.subr.mxu0 0.0
    %2434 = vmatpush1.msra.mxu0 0.0
    %2435 = vmatprep.subr.mxu0 0.0
    %2436 = vmatpush1.msra.mxu0 0.0
    %2437 = vmatprep.subr.mxu0 0.0
    %2438 = vmatpush1.msra.mxu0 0.0
    %2439 = vmatprep.subr.mxu0 0.0
    %2440 = vmatpush1.msra.mxu0 0.0
    %2441 = vmatprep.subr.mxu0 0.0
    %2442 = vmatpush1.msra.mxu0 0.0
    %2443 = vmatprep.subr.mxu0 0.0
    %2444 = vmatpush1.msra.mxu0 0.0
    %2445 = vmatprep.subr.mxu0 0.0
    %2446 = vmatpush1.msra.mxu0 0.0
    %2447 = vmatprep.subr.mxu0 0.0
    %2448 = vmatpush1.msra.mxu0 0.0
    %2449 = vmatprep.subr.mxu0 0.0
    %2450 = vmatpush1.msra.mxu0 0.0
    %2451 = vmatprep.subr.mxu0 0.0
    %2452 = vmatpush1.msra.mxu0 0.0
    %2453 = vmatprep.subr.mxu0 0.0
    %2454 = vmatpush1.msra.mxu0 0.0
    %2455 = vmatprep.subr.mxu0 0.0
    %2456 = vmatpush1.msra.mxu0 0.0
    %2457 = vmatprep.subr.mxu0 0.0
    %2458 = vmatpush1.msra.mxu0 0.0
    %2459 = vmatprep.subr.mxu0 0.0
    %2460 = vmatpush1.msra.mxu0 0.0
    %2461 = vmatprep.subr.mxu0 0.0
    %2462 = vmatpush1.msra.mxu0 0.0
    %2463 = vmatprep.subr.mxu0 0.0
    %2464 = vmatpush1.msra.mxu0 0.0
    %2465 = vmatprep.subr.mxu0 0.0
    %2466 = vmatpush1.msra.mxu0 0.0
    %2467 = vmatprep.subr.mxu0 0.0
    %2468 = vmatpush1.msra.mxu0 0.0
    %2469 = vmatprep.subr.mxu0 0.0
    %2470 = vmatpush1.msra.mxu0 0.0
    %2471 = vmatprep.subr.mxu0 0.0
    %2472 = vmatpush1.msra.mxu0 0.0
    %2473 = vmatprep.subr.mxu0 0.0
    %2474 = vmatpush1.msra.mxu0 0.0
    %2475 = vmatprep.subr.mxu0 0.0
    %2476 = vmatpush1.msra.mxu0 0.0
    %2477 = vmatprep.subr.mxu0 0.0
    %2478 = vmatpush1.msra.mxu0 0.0
    %2479 = vmatprep.subr.mxu0 0.0
    %2480 = vmatpush1.msra.mxu0 0.0
    %2481 = vmatprep.subr.mxu0 0.0
    %2482 = vmatpush1.msra.mxu0 0.0
    %2483 = vmatprep.mubr.f32.mxu0 0.0
    %2484 = vmatmul.mubr.f32.gmra.mrb[0].mxu0 %v2414
    %v2485 = vpop.f32.mrb[0].mxu0
    %v2486 = vadd.f32 0.0, %v2485
    %v2487 = vpop.f32.mrb[0].mxu0
    %2488 = vmatprep.mubr.f32.mxu0 0.0
    %2489 = vmatmul.mubr.f32.gmra.mrb[0].mxu0 %v2417
    %v2490 = vpop.f32.mrb[0].mxu0
    %v2491 = vadd.f32 0.0, %v2490
    %v2492 = vpop.f32.mrb[0].mxu0
    %2493 = vdwg.mxu0
    %v2510 = vsel %vm715, %v1740, %v1733
    %v2511 = vsel %vm717, %v1747, %v2510
    %v2512 = vsel %vm719, %v1754, %v2511
    %v2513 = vsel %vm721, %v1761, %v2512
    %v2514 = vsel %vm723, %v1768, %v2513
    %v2515 = vsel %vm725, %v1775, %v2514
    %v2516 = vsel %vm727, %v1782, %v2515
    %v2517 = vsel %vm715, %v1796, %v1789
    %v2518 = vsel %vm717, %v1803, %v2517
    %v2519 = vsel %vm719, %v1810, %v2518
    %v2520 = vsel %vm721, %v1817, %v2519
    %v2521 = vsel %vm723, %v1824, %v2520
    %v2522 = vsel %vm725, %v1831, %v2521
    %v2523 = vsel %vm727, %v1838, %v2522
    %vm2524 = vcmask 130048
    %v2525 = vsel %vm2524, %v2516, 0
    %v2527 = vsel %vm2524, %v2523, 0
    %2529 = vmatprep.subr.mxu0 0.0
    %2530 = vmatpush1.msra.mxu0 %v2403
    %2531 = vmatprep.subr.mxu0 0.0
    %2532 = vmatpush1.msra.mxu0 %v2404
    %2533 = vmatprep.subr.mxu0 0.0
    %2534 = vmatpush1.msra.mxu0 0.0
    %2535 = vmatprep.subr.mxu0 0.0
    %2536 = vmatpush1.msra.mxu0 0.0
    %2537 = vmatprep.subr.mxu0 0.0
    %2538 = vmatpush1.msra.mxu0 0.0
    %2539 = vmatprep.subr.mxu0 0.0
    %2540 = vmatpush1.msra.mxu0 0.0
    %2541 = vmatprep.subr.mxu0 0.0
    %2542 = vmatpush1.msra.mxu0 0.0
    %2543 = vmatprep.subr.mxu0 0.0
    %2544 = vmatpush1.msra.mxu0 0.0
    %2545 = vmatprep.subr.mxu0 0.0
    %2546 = vmatpush1.msra.mxu0 0.0
    %2547 = vmatprep.subr.mxu0 0.0
    %2548 = vmatpush1.msra.mxu0 0.0
    %2549 = vmatprep.subr.mxu0 0.0
    %2550 = vmatpush1.msra.mxu0 0.0
    %2551 = vmatprep.subr.mxu0 0.0
    %2552 = vmatpush1.msra.mxu0 0.0
    %2553 = vmatprep.subr.mxu0 0.0
    %2554 = vmatpush1.msra.mxu0 0.0
    %2555 = vmatprep.subr.mxu0 0.0
    %2556 = vmatpush1.msra.mxu0 0.0
    %2557 = vmatprep.subr.mxu0 0.0
    %2558 = vmatpush1.msra.mxu0 0.0
    %2559 = vmatprep.subr.mxu0 0.0
    %2560 = vmatpush1.msra.mxu0 0.0
    %2561 = vmatprep.subr.mxu0 0.0
    %2562 = vmatpush1.msra.mxu0 0.0
    %2563 = vmatprep.subr.mxu0 0.0
    %2564 = vmatpush1.msra.mxu0 0.0
    %2565 = vmatprep.subr.mxu0 0.0
    %2566 = vmatpush1.msra.mxu0 0.0
    %2567 = vmatprep.subr.mxu0 0.0
    %2568 = vmatpush1.msra.mxu0 0.0
    %2569 = vmatprep.subr.mxu0 0.0
    %2570 = vmatpush1.msra.mxu0 0.0
    %2571 = vmatprep.subr.mxu0 0.0
    %2572 = vmatpush1.msra.mxu0 0.0
    %2573 = vmatprep.subr.mxu0 0.0
    %2574 = vmatpush1.msra.mxu0 0.0
    %2575 = vmatprep.subr.mxu0 0.0
    %2576 = vmatpush1.msra.mxu0 0.0
    %2577 = vmatprep.subr.mxu0 0.0
    %2578 = vmatpush1.msra.mxu0 0.0
    %2579 = vmatprep.subr.mxu0 0.0
    %2580 = vmatpush1.msra.mxu0 0.0
    %2581 = vmatprep.subr.mxu0 0.0
    %2582 = vmatpush1.msra.mxu0 0.0
    %2583 = vmatprep.subr.mxu0 0.0
    %2584 = vmatpush1.msra.mxu0 0.0
    %2585 = vmatprep.subr.mxu0 0.0
    %2586 = vmatpush1.msra.mxu0 0.0
    %2587 = vmatprep.subr.mxu0 0.0
    %2588 = vmatpush1.msra.mxu0 0.0
    %2589 = vmatprep.subr.mxu0 0.0
    %2590 = vmatpush1.msra.mxu0 0.0
    %2591 = vmatprep.subr.mxu0 0.0
    %2592 = vmatpush1.msra.mxu0 0.0
    %2593 = vmatprep.mubr.f32.mxu0 0.0
    %2594 = vmatmul.mubr.f32.gmra.mrb[0].mxu0 %v2525
    %v2595 = vpop.f32.mrb[0].mxu0
    %v2596 = vadd.f32 %v2486, %v2595
    %v2597 = vpop.f32.mrb[0].mxu0
    %2598 = vmatprep.mubr.f32.mxu0 0.0
    %2599 = vmatmul.mubr.f32.gmra.mrb[0].mxu0 %v2527
    %v2600 = vpop.f32.mrb[0].mxu0
    %v2601 = vadd.f32 %v2491, %v2600
    %v2602 = vpop.f32.mrb[0].mxu0
    %2603 = vdwg.mxu0
    %v2605 = vsel %vm2412, %v2341, 0
    %v2608 = vsel %vm2412, %v2342, 0
    %2610 = vmatprep.subr.mxu0 0.0
    %2611 = vmatpush1.msra.mxu0 %v2406
    %2612 = vmatprep.subr.mxu0 0.0
    %2613 = vmatpush1.msra.mxu0 0.0
    %2614 = vmatprep.subr.mxu0 0.0
    %2615 = vmatpush1.msra.mxu0 0.0
    %2616 = vmatprep.subr.mxu0 0.0
    %2617 = vmatpush1.msra.mxu0 0.0
    %2618 = vmatprep.subr.mxu0 0.0
    %2619 = vmatpush1.msra.mxu0 0.0
    %2620 = vmatprep.subr.mxu0 0.0
    %2621 = vmatpush1.msra.mxu0 0.0
    %2622 = vmatprep.subr.mxu0 0.0
    %2623 = vmatpush1.msra.mxu0 0.0
    %2624 = vmatprep.subr.mxu0 0.0
    %2625 = vmatpush1.msra.mxu0 0.0
    %2626 = vmatprep.subr.mxu0 0.0
    %2627 = vmatpush1.msra.mxu0 0.0
    %2628 = vmatprep.subr.mxu0 0.0
    %2629 = vmatpush1.msra.mxu0 0.0
    %2630 = vmatprep.subr.mxu0 0.0
    %2631 = vmatpush1.msra.mxu0 0.0
    %2632 = vmatprep.subr.mxu0 0.0
    %2633 = vmatpush1.msra.mxu0 0.0
    %2634 = vmatprep.subr.mxu0 0.0
    %2635 = vmatpush1.msra.mxu0 0.0
    %2636 = vmatprep.subr.mxu0 0.0
    %2637 = vmatpush1.msra.mxu0 0.0
    %2638 = vmatprep.subr.mxu0 0.0
    %2639 = vmatpush1.msra.mxu0 0.0
    %2640 = vmatprep.subr.mxu0 0.0
    %2641 = vmatpush1.msra.mxu0 0.0
    %2642 = vmatprep.subr.mxu0 0.0
    %2643 = vmatpush1.msra.mxu0 0.0
    %2644 = vmatprep.subr.mxu0 0.0
    %2645 = vmatpush1.msra.mxu0 0.0
    %2646 = vmatprep.subr.mxu0 0.0
    %2647 = vmatpush1.msra.mxu0 0.0
    %2648 = vmatprep.subr.mxu0 0.0
    %2649 = vmatpush1.msra.mxu0 0.0
    %2650 = vmatprep.subr.mxu0 0.0
    %2651 = vmatpush1.msra.mxu0 0.0
    %2652 = vmatprep.subr.mxu0 0.0
    %2653 = vmatpush1.msra.mxu0 0.0
    %2654 = vmatprep.subr.mxu0 0.0
    %2655 = vmatpush1.msra.mxu0 0.0
    %2656 = vmatprep.subr.mxu0 0.0
    %2657 = vmatpush1.msra.mxu0 0.0
    %2658 = vmatprep.subr.mxu0 0.0
    %2659 = vmatpush1.msra.mxu0 0.0
    %2660 = vmatprep.subr.mxu0 0.0
    %2661 = vmatpush1.msra.mxu0 0.0
    %2662 = vmatprep.subr.mxu0 0.0
    %2663 = vmatpush1.msra.mxu0 0.0
    %2664 = vmatprep.subr.mxu0 0.0
    %2665 = vmatpush1.msra.mxu0 0.0
    %2666 = vmatprep.subr.mxu0 0.0
    %2667 = vmatpush1.msra.mxu0 0.0
    %2668 = vmatprep.subr.mxu0 0.0
    %2669 = vmatpush1.msra.mxu0 0.0
    %2670 = vmatprep.subr.mxu0 0.0
    %2671 = vmatpush1.msra.mxu0 0.0
    %2672 = vmatprep.subr.mxu0 0.0
    %2673 = vmatpush1.msra.mxu0 0.0
    %2674 = vmatprep.mubr.f32.mxu0 0.0
    %2675 = vmatmul.mubr.f32.gmra.mrb[0].mxu0 %v2605
    %v2676 = vpop.f32.mrb[0].mxu0
    %v2677 = vadd.f32 0.0, %v2676
    %v2678 = vpop.f32.mrb[0].mxu0
    %2679 = vmatprep.mubr.f32.mxu0 0.0
    %2680 = vmatmul.mubr.f32.gmra.mrb[0].mxu0 %v2608
    %v2681 = vpop.f32.mrb[0].mxu0
    %v2682 = vadd.f32 0.0, %v2681
    %v2683 = vpop.f32.mrb[0].mxu0
    %2684 = vdwg.mxu0
    %v2685 = vadd.f32 %v2596, %v2677
    %v2686 = vadd.f32 %v2601, %v2682
    %v2688 = vsel %vm2412, %v2375, 0
    %v2691 = vsel %vm2412, %v2376, 0
    %2693 = vmatprep.subr.mxu0 0.0
    %2694 = vmatpush1.msra.mxu0 %v2407
    %2695 = vmatprep.subr.mxu0 0.0
    %2696 = vmatpush1.msra.mxu0 0.0
    %2697 = vmatprep.subr.mxu0 0.0
    %2698 = vmatpush1.msra.mxu0 0.0
    %2699 = vmatprep.subr.mxu0 0.0
    %2700 = vmatpush1.msra.mxu0 0.0
    %2701 = vmatprep.subr.mxu0 0.0
    %2702 = vmatpush1.msra.mxu0 0.0
    %2703 = vmatprep.subr.mxu0 0.0
    %2704 = vmatpush1.msra.mxu0 0.0
    %2705 = vmatprep.subr.mxu0 0.0
    %2706 = vmatpush1.msra.mxu0 0.0
    %2707 = vmatprep.subr.mxu0 0.0
    %2708 = vmatpush1.msra.mxu0 0.0
    %2709 = vmatprep.subr.mxu0 0.0
    %2710 = vmatpush1.msra.mxu0 0.0
    %2711 = vmatprep.subr.mxu0 0.0
    %2712 = vmatpush1.msra.mxu0 0.0
    %2713 = vmatprep.subr.mxu0 0.0
    %2714 = vmatpush1.msra.mxu0 0.0
    %2715 = vmatprep.subr.mxu0 0.0
    %2716 = vmatpush1.msra.mxu0 0.0
    %2717 = vmatprep.subr.mxu0 0.0
    %2718 = vmatpush1.msra.mxu0 0.0
    %2719 = vmatprep.subr.mxu0 0.0
    %2720 = vmatpush1.msra.mxu0 0.0
    %2721 = vmatprep.subr.mxu0 0.0
    %2722 = vmatpush1.msra.mxu0 0.0
    %2723 = vmatprep.subr.mxu0 0.0
    %2724 = vmatpush1.msra.mxu0 0.0
    %2725 = vmatprep.subr.mxu0 0.0
    %2726 = vmatpush1.msra.mxu0 0.0
    %2727 = vmatprep.subr.mxu0 0.0
    %2728 = vmatpush1.msra.mxu0 0.0
    %2729 = vmatprep.subr.mxu0 0.0
    %2730 = vmatpush1.msra.mxu0 0.0
    %2731 = vmatprep.subr.mxu0 0.0
    %2732 = vmatpush1.msra.mxu0 0.0
    %2733 = vmatprep.subr.mxu0 0.0
    %2734 = vmatpush1.msra.mxu0 0.0
    %2735 = vmatprep.subr.mxu0 0.0
    %2736 = vmatpush1.msra.mxu0 0.0
    %2737 = vmatprep.subr.mxu0 0.0
    %2738 = vmatpush1.msra.mxu0 0.0
    %2739 = vmatprep.subr.mxu0 0.0
    %2740 = vmatpush1.msra.mxu0 0.0
    %2741 = vmatprep.subr.mxu0 0.0
    %2742 = vmatpush1.msra.mxu0 0.0
    %2743 = vmatprep.subr.mxu0 0.0
    %2744 = vmatpush1.msra.mxu0 0.0
    %2745 = vmatprep.subr.mxu0 0.0
    %2746 = vmatpush1.msra.mxu0 0.0
    %2747 = vmatprep.subr.mxu0 0.0
    %2748 = vmatpush1.msra.mxu0 0.0
    %2749 = vmatprep.subr.mxu0 0.0
    %2750 = vmatpush1.msra.mxu0 0.0
    %2751 = vmatprep.subr.mxu0 0.0
    %2752 = vmatpush1.msra.mxu0 0.0
    %2753 = vmatprep.subr.mxu0 0.0
    %2754 = vmatpush1.msra.mxu0 0.0
    %2755 = vmatprep.subr.mxu0 0.0
    %2756 = vmatpush1.msra.mxu0 0.0
    %2757 = vmatprep.mubr.f32.mxu0 0.0
    %2758 = vmatmul.mubr.f32.gmra.mrb[0].mxu0 %v2688
    %v2759 = vpop.f32.mrb[0].mxu0
    %v2760 = vadd.f32 0.0, %v2759
    %v2761 = vpop.f32.mrb[0].mxu0
    %2762 = vmatprep.mubr.f32.mxu0 0.0
    %2763 = vmatmul.mubr.f32.gmra.mrb[0].mxu0 %v2691
    %v2764 = vpop.f32.mrb[0].mxu0
    %v2765 = vadd.f32 0.0, %v2764
    %v2766 = vpop.f32.mrb[0].mxu0
    %2767 = vdwg.mxu0
    %v2768 = vadd.f32 %v2685, %v2760
    %v2769 = vadd.f32 %v2686, %v2765
    %v2771 = vsel %vm2412, %v2395, 0
    %v2774 = vsel %vm2412, %v2402, 0
    %2776 = vmatprep.subr.mxu0 0.0
    %2777 = vmatpush1.msra.mxu0 %v2408
    %2778 = vmatprep.subr.mxu0 0.0
    %2779 = vmatpush1.msra.mxu0 0.0
    %2780 = vmatprep.subr.mxu0 0.0
    %2781 = vmatpush1.msra.mxu0 0.0
    %2782 = vmatprep.subr.mxu0 0.0
    %2783 = vmatpush1.msra.mxu0 0.0
    %2784 = vmatprep.subr.mxu0 0.0
    %2785 = vmatpush1.msra.mxu0 0.0
    %2786 = vmatprep.subr.mxu0 0.0
    %2787 = vmatpush1.msra.mxu0 0.0
    %2788 = vmatprep.subr.mxu0 0.0
    %2789 = vmatpush1.msra.mxu0 0.0
    %2790 = vmatprep.subr.mxu0 0.0
    %2791 = vmatpush1.msra.mxu0 0.0
    %2792 = vmatprep.subr.mxu0 0.0
    %2793 = vmatpush1.msra.mxu0 0.0
    %2794 = vmatprep.subr.mxu0 0.0
    %2795 = vmatpush1.msra.mxu0 0.0
    %2796 = vmatprep.subr.mxu0 0.0
    %2797 = vmatpush1.msra.mxu0 0.0
    %2798 = vmatprep.subr.mxu0 0.0
    %2799 = vmatpush1.msra.mxu0 0.0
    %2800 = vmatprep.subr.mxu0 0.0
    %2801 = vmatpush1.msra.mxu0 0.0
    %2802 = vmatprep.subr.mxu0 0.0
    %2803 = vmatpush1.msra.mxu0 0.0
    %2804 = vmatprep.subr.mxu0 0.0
    %2805 = vmatpush1.msra.mxu0 0.0
    %2806 = vmatprep.subr.mxu0 0.0
    %2807 = vmatpush1.msra.mxu0 0.0
    %2808 = vmatprep.subr.mxu0 0.0
    %2809 = vmatpush1.msra.mxu0 0.0
    %2810 = vmatprep.subr.mxu0 0.0
    %2811 = vmatpush1.msra.mxu0 0.0
    %2812 = vmatprep.subr.mxu0 0.0
    %2813 = vmatpush1.msra.mxu0 0.0
    %2814 = vmatprep.subr.mxu0 0.0
    %2815 = vmatpush1.msra.mxu0 0.0
    %2816 = vmatprep.subr.mxu0 0.0
    %2817 = vmatpush1.msra.mxu0 0.0
    %2818 = vmatprep.subr.mxu0 0.0
    %2819 = vmatpush1.msra.mxu0 0.0
    %2820 = vmatprep.subr.mxu0 0.0
    %2821 = vmatpush1.msra.mxu0 0.0
    %2822 = vmatprep.subr.mxu0 0.0
    %2823 = vmatpush1.msra.mxu0 0.0
    %2824 = vmatprep.subr.mxu0 0.0
    %2825 = vmatpush1.msra.mxu0 0.0
    %2826 = vmatprep.subr.mxu0 0.0
    %2827 = vmatpush1.msra.mxu0 0.0
    %2828 = vmatprep.subr.mxu0 0.0
    %2829 = vmatpush1.msra.mxu0 0.0
    %2830 = vmatprep.subr.mxu0 0.0
    %2831 = vmatpush1.msra.mxu0 0.0
    %2832 = vmatprep.subr.mxu0 0.0
    %2833 = vmatpush1.msra.mxu0 0.0
    %2834 = vmatprep.subr.mxu0 0.0
    %2835 = vmatpush1.msra.mxu0 0.0
    %2836 = vmatprep.subr.mxu0 0.0
    %2837 = vmatpush1.msra.mxu0 0.0
    %2838 = vmatprep.subr.mxu0 0.0
    %2839 = vmatpush1.msra.mxu0 0.0
    %2840 = vmatprep.mubr.f32.mxu0 0.0
    %2841 = vmatmul.mubr.f32.gmra.mrb[0].mxu0 %v2771
    %v2842 = vpop.f32.mrb[0].mxu0
    %v2843 = vadd.f32 0.0, %v2842
    %v2844 = vpop.f32.mrb[0].mxu0
    %2845 = vmatprep.mubr.f32.mxu0 0.0
    %2846 = vmatmul.mubr.f32.gmra.mrb[0].mxu0 %v2774
    %v2847 = vpop.f32.mrb[0].mxu0
    %v2848 = vadd.f32 0.0, %v2847
    %v2849 = vpop.f32.mrb[0].mxu0
    %2850 = vdwg.mxu0
    %v2851 = vadd.f32 %v2768, %v2843
    %v2852 = vadd.f32 %v2769, %v2848
    %v2869 = vsel %vm715, %v1868, %v1861
    %v2870 = vsel %vm717, %v1875, %v2869
    %v2871 = vsel %vm719, %v1882, %v2870
    %v2872 = vsel %vm721, %v1889, %v2871
    %v2873 = vsel %vm723, %v1896, %v2872
    %v2874 = vsel %vm725, %v1903, %v2873
    %v2875 = vsel %vm727, %v1910, %v2874
    %v2876 = vsel %vm715, %v1924, %v1917
    %v2877 = vsel %vm717, %v1931, %v2876
    %v2878 = vsel %vm719, %v1938, %v2877
    %v2879 = vsel %vm721, %v1945, %v2878
    %v2880 = vsel %vm723, %v1952, %v2879
    %v2881 = vsel %vm725, %v1959, %v2880
    %v2882 = vsel %vm727, %v1966, %v2881
    %v2883 = vsel %vm2524, %v2875, 0
    %v2885 = vsel %vm2524, %v2882, 0
    %2887 = vmatprep.subr.mxu0 0.0
    %2888 = vmatpush1.msra.mxu0 %v2409
    %2889 = vmatprep.subr.mxu0 0.0
    %2890 = vmatpush1.msra.mxu0 %v2410
    %2891 = vmatprep.subr.mxu0 0.0
    %2892 = vmatpush1.msra.mxu0 0.0
    %2893 = vmatprep.subr.mxu0 0.0
    %2894 = vmatpush1.msra.mxu0 0.0
    %2895 = vmatprep.subr.mxu0 0.0
    %2896 = vmatpush1.msra.mxu0 0.0
    %2897 = vmatprep.subr.mxu0 0.0
    %2898 = vmatpush1.msra.mxu0 0.0
    %2899 = vmatprep.subr.mxu0 0.0
    %2900 = vmatpush1.msra.mxu0 0.0
    %2901 = vmatprep.subr.mxu0 0.0
    %2902 = vmatpush1.msra.mxu0 0.0
    %2903 = vmatprep.subr.mxu0 0.0
    %2904 = vmatpush1.msra.mxu0 0.0
    %2905 = vmatprep.subr.mxu0 0.0
    %2906 = vmatpush1.msra.mxu0 0.0
    %2907 = vmatprep.subr.mxu0 0.0
    %2908 = vmatpush1.msra.mxu0 0.0
    %2909 = vmatprep.subr.mxu0 0.0
    %2910 = vmatpush1.msra.mxu0 0.0
    %2911 = vmatprep.subr.mxu0 0.0
    %2912 = vmatpush1.msra.mxu0 0.0
    %2913 = vmatprep.subr.mxu0 0.0
    %2914 = vmatpush1.msra.mxu0 0.0
    %2915 = vmatprep.subr.mxu0 0.0
    %2916 = vmatpush1.msra.mxu0 0.0
    %2917 = vmatprep.subr.mxu0 0.0
    %2918 = vmatpush1.msra.mxu0 0.0
    %2919 = vmatprep.subr.mxu0 0.0
    %2920 = vmatpush1.msra.mxu0 0.0
    %2921 = vmatprep.subr.mxu0 0.0
    %2922 = vmatpush1.msra.mxu0 0.0
    %2923 = vmatprep.subr.mxu0 0.0
    %2924 = vmatpush1.msra.mxu0 0.0
    %2925 = vmatprep.subr.mxu0 0.0
    %2926 = vmatpush1.msra.mxu0 0.0
    %2927 = vmatprep.subr.mxu0 0.0
    %2928 = vmatpush1.msra.mxu0 0.0
    %2929 = vmatprep.subr.mxu0 0.0
    %2930 = vmatpush1.msra.mxu0 0.0
    %2931 = vmatprep.subr.mxu0 0.0
    %2932 = vmatpush1.msra.mxu0 0.0
    %2933 = vmatprep.subr.mxu0 0.0
    %2934 = vmatpush1.msra.mxu0 0.0
    %2935 = vmatprep.subr.mxu0 0.0
    %2936 = vmatpush1.msra.mxu0 0.0
    %2937 = vmatprep.subr.mxu0 0.0
    %2938 = vmatpush1.msra.mxu0 0.0
    %2939 = vmatprep.subr.mxu0 0.0
    %2940 = vmatpush1.msra.mxu0 0.0
    %2941 = vmatprep.subr.mxu0 0.0
    %2942 = vmatpush1.msra.mxu0 0.0
    %2943 = vmatprep.subr.mxu0 0.0
    %2944 = vmatpush1.msra.mxu0 0.0
    %2945 = vmatprep.subr.mxu0 0.0
    %2946 = vmatpush1.msra.mxu0 0.0
    %2947 = vmatprep.subr.mxu0 0.0
    %2948 = vmatpush1.msra.mxu0 0.0
    %2949 = vmatprep.subr.mxu0 0.0
    %2950 = vmatpush1.msra.mxu0 0.0
    %2951 = vmatprep.mubr.f32.mxu0 0.0
    %2952 = vmatmul.mubr.f32.gmra.mrb[0].mxu0 %v2883
    %v2953 = vpop.f32.mrb[0].mxu0
    %v2954 = vadd.f32 0.0, %v2953
    %v2955 = vpop.f32.mrb[0].mxu0
    %2956 = vmatprep.mubr.f32.mxu0 0.0
    %2957 = vmatmul.mubr.f32.gmra.mrb[0].mxu0 %v2885
    %v2958 = vpop.f32.mrb[0].mxu0
    %v2959 = vadd.f32 0.0, %v2958
    %v2960 = vpop.f32.mrb[0].mxu0
    %2961 = vdwg.mxu0
    %v2962 = vadd.f32 %v2851, %v2954
    %v2963 = vadd.f32 %v2852, %v2959
    %v2964 = vlaneseq
    %v2965 = vshrl.u32 %v2964, 7
    %v2966 = vsub.s32 0, %v2965
    %v2967 = vrot.slane %v2411, %v2966
    %v2968 = vadd.f32 %v2962, %v2967
    %v2969 = vadd.f32 %v2963, %v2967
    %v2970 = vld [vmem:[%s5 + $0x3] sm:$0x1]
    %v2971 = vld [vmem:[%s5 + $0x4] sm:$0x1]
    %v2972 = vld [vmem:[%s5 + $0x5] sm:$0x1]
    %v2973 = vld [vmem:[%s5 + $0x6] sm:$0x1]
    %v2974 = vld [vmem:[%s5 + $0x7] sm:$0x1]
    %v2975 = vld [vmem:[%s5 + $0x8] sm:$0x1]
    %2978 = vrot.lane.b32.xlu0 %v2968, 40
    %v2979 = vpop.permute.xlu0 %2978
    %2980 = vrot.lane.b32.xlu0 %v2969, 40
    %v2981 = vpop.permute.xlu0 %2980
    %v2984 = vadd.f32 %v47, %v2979
    %v2985 = vadd.f32 %v48, %v2981
    %2988 = vrot.lane.b32.xlu0 %v2984, 88
    %v2989 = vpop.permute.xlu0 %2988
    %2990 = vrot.lane.b32.xlu0 %v2985, 88
    %v2991 = vpop.permute.xlu0 %2990
    %v2994 = vsel %vm2524, %v2989, 0.0
    %2995 = vadd.xlane.f32.xlu0 %v2994
    %v2996 = vpop.xlane.xlu0 %2995
    %v2997 = vsel %vm2524, %v2991, 0.0
    %2998 = vadd.xlane.f32.xlu0 %v2997
    %v2999 = vpop.xlane.xlu0 %2998
    %v3000 = vrcp.pop 16.0
    %v3001 = vmul.f32 %v2996, %v3000
    %v3002 = vmul.f32 %v2999, %v3000
    %v3003 = vsub.f32 %v2984, %v3001
    %v3004 = vsub.f32 %v2985, %v3002
    %v3005 = vmul.f32 %v3003, %v3003
    %v3006 = vmul.f32 %v3004, %v3004
    %3009 = vrot.lane.b32.xlu0 %v3005, 88
    %v3010 = vpop.permute.xlu0 %3009
    %3011 = vrot.lane.b32.xlu0 %v3006, 88
    %v3012 = vpop.permute.xlu0 %3011
    %v3015 = vsel %vm2524, %v3010, 0.0
    %3016 = vadd.xlane.f32.xlu0 %v3015
    %v3017 = vpop.xlane.xlu0 %3016
    %v3018 = vsel %vm2524, %v3012, 0.0
    %3019 = vadd.xlane.f32.xlu0 %v3018
    %v3020 = vpop.xlane.xlu0 %3019
    %v3021 = vmul.f32 %v3017, %v3000
    %v3022 = vmul.f32 %v3020, %v3000
    %v3023 = vadd.f32 %v3021, 1e-05
    %v3024 = vadd.f32 %v3022, 1e-05
    %v3025 = vrsqrt.pop %v3023
    %v3026 = vrsqrt.pop %v3024
    %v3027 = vmul.f32 %v3003, %v3025
    %v3028 = vmul.f32 %v3004, %v3026
    %v3029 = vlaneseq
    %v3030 = vshrl.u32 %v3029, 7
    %v3031 = vsub.s32 0, %v3030
    %v3032 = vrot.slane %v2972, %v3031
    %3034 = vrot.lane.b32.xlu0 %v3032, 40
    %v3035 = vpop.permute.xlu0 %3034
    %v3037 = vmul.f32 %v3027, %v3035
    %v3038 = vmul.f32 %v3028, %v3035
    %v3039 = vlaneseq
    %v3040 = vshrl.u32 %v3039, 7
    %v3041 = vsub.s32 0, %v3040
    %v3042 = vrot.slane %v2973, %v3041
    %3044 = vrot.lane.b32.xlu0 %v3042, 40
    %v3045 = vpop.permute.xlu0 %3044
    %v3047 = vadd.f32 %v3037, %v3045
    %v3048 = vadd.f32 %v3038, %v3045
    %v3049 = vld [vmem:[%s7] sm:$0xff]
    %v3050 = vld [vmem:[%s7 + $0x8] sm:$0xff]
    %v3051 = vlaneseq
    %v3052 = vshrl.u32 %v3051, 7
    %v3053 = vsub.s32 0, %v3052
    %v3054 = vrot.slane %v2970, %v3053
    %3057 = vrot.lane.b32.xlu0 %v3047, 88
    %v3058 = vpop.permute.xlu0 %3057
    %3059 = vrot.lane.b32.xlu0 %v3048, 88
    %v3060 = vpop.permute.xlu0 %3059
    %v3061 = vsel %vm2524, %v3058, 0
    %v3063 = vsel %vm2524, %v3060, 0
    %3065 = vmatprep.subr.mxu0 0.0
    %3066 = vmatpush1.msra.mxu0 %v3049
    %3067 = vmatprep.subr.mxu0 0.0
    %3068 = vmatpush1.msra.mxu0 %v3050
    %3069 = vmatprep.subr.mxu0 0.0
    %3070 = vmatpush1.msra.mxu0 0.0
    %3071 = vmatprep.subr.mxu0 0.0
    %3072 = vmatpush1.msra.mxu0 0.0
    %3073 = vmatprep.subr.mxu0 0.0
    %3074 = vmatpush1.msra.mxu0 0.0
    %3075 = vmatprep.subr.mxu0 0.0
    %3076 = vmatpush1.msra.mxu0 0.0
    %3077 = vmatprep.subr.mxu0 0.0
    %3078 = vmatpush1.msra.mxu0 0.0
    %3079 = vmatprep.subr.mxu0 0.0
    %3080 = vmatpush1.msra.mxu0 0.0
    %3081 = vmatprep.subr.mxu0 0.0
    %3082 = vmatpush1.msra.mxu0 0.0
    %3083 = vmatprep.subr.mxu0 0.0
    %3084 = vmatpush1.msra.mxu0 0.0
    %3085 = vmatprep.subr.mxu0 0.0
    %3086 = vmatpush1.msra.mxu0 0.0
    %3087 = vmatprep.subr.mxu0 0.0
    %3088 = vmatpush1.msra.mxu0 0.0
    %3089 = vmatprep.subr.mxu0 0.0
    %3090 = vmatpush1.msra.mxu0 0.0
    %3091 = vmatprep.subr.mxu0 0.0
    %3092 = vmatpush1.msra.mxu0 0.0
    %3093 = vmatprep.subr.mxu0 0.0
    %3094 = vmatpush1.msra.mxu0 0.0
    %3095 = vmatprep.subr.mxu0 0.0
    %3096 = vmatpush1.msra.mxu0 0.0
    %3097 = vmatprep.subr.mxu0 0.0
    %3098 = vmatpush1.msra.mxu0 0.0
    %3099 = vmatprep.subr.mxu0 0.0
    %3100 = vmatpush1.msra.mxu0 0.0
    %3101 = vmatprep.subr.mxu0 0.0
    %3102 = vmatpush1.msra.mxu0 0.0
    %3103 = vmatprep.subr.mxu0 0.0
    %3104 = vmatpush1.msra.mxu0 0.0
    %3105 = vmatprep.subr.mxu0 0.0
    %3106 = vmatpush1.msra.mxu0 0.0
    %3107 = vmatprep.subr.mxu0 0.0
    %3108 = vmatpush1.msra.mxu0 0.0
    %3109 = vmatprep.subr.mxu0 0.0
    %3110 = vmatpush1.msra.mxu0 0.0
    %3111 = vmatprep.subr.mxu0 0.0
    %3112 = vmatpush1.msra.mxu0 0.0
    %3113 = vmatprep.subr.mxu0 0.0
    %3114 = vmatpush1.msra.mxu0 0.0
    %3115 = vmatprep.subr.mxu0 0.0
    %3116 = vmatpush1.msra.mxu0 0.0
    %3117 = vmatprep.subr.mxu0 0.0
    %3118 = vmatpush1.msra.mxu0 0.0
    %3119 = vmatprep.subr.mxu0 0.0
    %3120 = vmatpush1.msra.mxu0 0.0
    %3121 = vmatprep.subr.mxu0 0.0
    %3122 = vmatpush1.msra.mxu0 0.0
    %3123 = vmatprep.subr.mxu0 0.0
    %3124 = vmatpush1.msra.mxu0 0.0
    %3125 = vmatprep.subr.mxu0 0.0
    %3126 = vmatpush1.msra.mxu0 0.0
    %3127 = vmatprep.subr.mxu0 0.0
    %3128 = vmatpush1.msra.mxu0 0.0
    %3129 = vmatprep.mubr.f32.mxu0 0.0
    %3130 = vmatmul.mubr.f32.gmra.mrb[0].mxu0 %v3061
    %v3131 = vpop.f32.mrb[0].mxu0
    %v3132 = vadd.f32 %v3054, %v3131
    %v3133 = vpop.f32.mrb[0].mxu0
    %3134 = vmatprep.mubr.f32.mxu0 0.0
    %3135 = vmatmul.mubr.f32.gmra.mrb[0].mxu0 %v3063
    %v3136 = vpop.f32.mrb[0].mxu0
    %v3137 = vadd.f32 %v3054, %v3136
    %v3138 = vpop.f32.mrb[0].mxu0
    %3139 = vdwg.mxu0
    %v3140 = vmax.f32 %v3132, 0.0
    %v3141 = vmax.f32 %v3137, 0.0
    %v3142 = vld [vmem:[%s8] sm:$0xff]
    %v3143 = vld [vmem:[%s8 + $0x8] sm:$0xff]
    %v3144 = vld [vmem:[%s8 + $0x10] sm:$0xff]
    %v3145 = vld [vmem:[%s8 + $0x18] sm:$0xff]
    %v3146 = vld [vmem:[%s8 + $0x20] sm:$0xff]
    %v3147 = vld [vmem:[%s8 + $0x28] sm:$0xff]
    %v3148 = vld [vmem:[%s8 + $0x30] sm:$0xff]
    %v3149 = vld [vmem:[%s8 + $0x38] sm:$0xff]
    %v3150 = vlaneseq
    %v3151 = vshrl.u32 %v3150, 7
    %v3152 = vsub.s32 0, %v3151
    %v3153 = vrot.slane %v2971, %v3152
    %vm3154 = vcmask 523264
    %v3156 = vsel %vm3154, %v3140, 0
    %v3159 = vsel %vm3154, %v3141, 0
    %3161 = vmatprep.subr.mxu0 0.0
    %3162 = vmatpush1.msra.mxu0 %v3142
    %3163 = vmatprep.subr.mxu0 0.0
    %3164 = vmatpush1.msra.mxu0 %v3143
    %3165 = vmatprep.subr.mxu0 0.0
    %3166 = vmatpush1.msra.mxu0 %v3144
    %3167 = vmatprep.subr.mxu0 0.0
    %3168 = vmatpush1.msra.mxu0 %v3145
    %3169 = vmatprep.subr.mxu0 0.0
    %3170 = vmatpush1.msra.mxu0 %v3146
    %3171 = vmatprep.subr.mxu0 0.0
    %3172 = vmatpush1.msra.mxu0 %v3147
    %3173 = vmatprep.subr.mxu0 0.0
    %3174 = vmatpush1.msra.mxu0 %v3148
    %3175 = vmatprep.subr.mxu0 0.0
    %3176 = vmatpush1.msra.mxu0 %v3149
    %3177 = vmatprep.subr.mxu0 0.0
    %3178 = vmatpush1.msra.mxu0 0.0
    %3179 = vmatprep.subr.mxu0 0.0
    %3180 = vmatpush1.msra.mxu0 0.0
    %3181 = vmatprep.subr.mxu0 0.0
    %3182 = vmatpush1.msra.mxu0 0.0
    %3183 = vmatprep.subr.mxu0 0.0
    %3184 = vmatpush1.msra.mxu0 0.0
    %3185 = vmatprep.subr.mxu0 0.0
    %3186 = vmatpush1.msra.mxu0 0.0
    %3187 = vmatprep.subr.mxu0 0.0
    %3188 = vmatpush1.msra.mxu0 0.0
    %3189 = vmatprep.subr.mxu0 0.0
    %3190 = vmatpush1.msra.mxu0 0.0
    %3191 = vmatprep.subr.mxu0 0.0
    %3192 = vmatpush1.msra.mxu0 0.0
    %3193 = vmatprep.subr.mxu0 0.0
    %3194 = vmatpush1.msra.mxu0 0.0
    %3195 = vmatprep.subr.mxu0 0.0
    %3196 = vmatpush1.msra.mxu0 0.0
    %3197 = vmatprep.subr.mxu0 0.0
    %3198 = vmatpush1.msra.mxu0 0.0
    %3199 = vmatprep.subr.mxu0 0.0
    %3200 = vmatpush1.msra.mxu0 0.0
    %3201 = vmatprep.subr.mxu0 0.0
    %3202 = vmatpush1.msra.mxu0 0.0
    %3203 = vmatprep.subr.mxu0 0.0
    %3204 = vmatpush1.msra.mxu0 0.0
    %3205 = vmatprep.subr.mxu0 0.0
    %3206 = vmatpush1.msra.mxu0 0.0
    %3207 = vmatprep.subr.mxu0 0.0
    %3208 = vmatpush1.msra.mxu0 0.0
    %3209 = vmatprep.subr.mxu0 0.0
    %3210 = vmatpush1.msra.mxu0 0.0
    %3211 = vmatprep.subr.mxu0 0.0
    %3212 = vmatpush1.msra.mxu0 0.0
    %3213 = vmatprep.subr.mxu0 0.0
    %3214 = vmatpush1.msra.mxu0 0.0
    %3215 = vmatprep.subr.mxu0 0.0
    %3216 = vmatpush1.msra.mxu0 0.0
    %3217 = vmatprep.subr.mxu0 0.0
    %3218 = vmatpush1.msra.mxu0 0.0
    %3219 = vmatprep.subr.mxu0 0.0
    %3220 = vmatpush1.msra.mxu0 0.0
    %3221 = vmatprep.subr.mxu0 0.0
    %3222 = vmatpush1.msra.mxu0 0.0
    %3223 = vmatprep.subr.mxu0 0.0
    %3224 = vmatpush1.msra.mxu0 0.0
    %3225 = vmatprep.mubr.f32.mxu0 0.0
    %3226 = vmatmul.mubr.f32.gmra.mrb[0].mxu0 %v3156
    %v3227 = vpop.f32.mrb[0].mxu0
    %v3228 = vadd.f32 %v3153, %v3227
    %v3229 = vpop.f32.mrb[0].mxu0
    %3230 = vmatprep.mubr.f32.mxu0 0.0
    %3231 = vmatmul.mubr.f32.gmra.mrb[0].mxu0 %v3159
    %v3232 = vpop.f32.mrb[0].mxu0
    %v3233 = vadd.f32 %v3153, %v3232
    %v3234 = vpop.f32.mrb[0].mxu0
    %3235 = vdwg.mxu0
    %3238 = vrot.lane.b32.xlu0 %v3228, 40
    %v3239 = vpop.permute.xlu0 %3238
    %3240 = vrot.lane.b32.xlu0 %v3233, 40
    %v3241 = vpop.permute.xlu0 %3240
    %v3244 = vadd.f32 %v3047, %v3239
    %v3245 = vadd.f32 %v3048, %v3241
    %3248 = vrot.lane.b32.xlu0 %v3244, 88
    %v3249 = vpop.permute.xlu0 %3248
    %3250 = vrot.lane.b32.xlu0 %v3245, 88
    %v3251 = vpop.permute.xlu0 %3250
    %v3254 = vsel %vm2524, %v3249, 0.0
    %3255 = vadd.xlane.f32.xlu0 %v3254
    %v3256 = vpop.xlane.xlu0 %3255
    %v3257 = vsel %vm2524, %v3251, 0.0
    %3258 = vadd.xlane.f32.xlu0 %v3257
    %v3259 = vpop.xlane.xlu0 %3258
    %v3260 = vmul.f32 %v3256, %v3000
    %v3261 = vmul.f32 %v3259, %v3000
    %v3262 = vsub.f32 %v3244, %v3260
    %v3263 = vsub.f32 %v3245, %v3261
    %v3264 = vmul.f32 %v3262, %v3262
    %v3265 = vmul.f32 %v3263, %v3263
    %3268 = vrot.lane.b32.xlu0 %v3264, 88
    %v3269 = vpop.permute.xlu0 %3268
    %3270 = vrot.lane.b32.xlu0 %v3265, 88
    %v3271 = vpop.permute.xlu0 %3270
    %v3274 = vsel %vm2524, %v3269, 0.0
    %3275 = vadd.xlane.f32.xlu0 %v3274
    %v3276 = vpop.xlane.xlu0 %3275
    %v3277 = vsel %vm2524, %v3271, 0.0
    %3278 = vadd.xlane.f32.xlu0 %v3277
    %v3279 = vpop.xlane.xlu0 %3278
    %v3280 = vmul.f32 %v3276, %v3000
    %v3281 = vmul.f32 %v3279, %v3000
    %v3282 = vadd.f32 %v3280, 1e-05
    %v3283 = vadd.f32 %v3281, 1e-05
    %v3284 = vrsqrt.pop %v3282
    %v3285 = vrsqrt.pop %v3283
    %v3286 = vmul.f32 %v3262, %v3284
    %v3287 = vmul.f32 %v3263, %v3285
    %v3288 = vlaneseq
    %v3289 = vshrl.u32 %v3288, 7
    %v3290 = vsub.s32 0, %v3289
    %v3291 = vrot.slane %v2974, %v3290
    %3293 = vrot.lane.b32.xlu0 %v3291, 40
    %v3294 = vpop.permute.xlu0 %3293
    %v3296 = vmul.f32 %v3286, %v3294
    %v3297 = vmul.f32 %v3287, %v3294
    %v3298 = vlaneseq
    %v3299 = vshrl.u32 %v3298, 7
    %v3300 = vsub.s32 0, %v3299
    %v3301 = vrot.slane %v2975, %v3300
    %3303 = vrot.lane.b32.xlu0 %v3301, 40
    %v3304 = vpop.permute.xlu0 %3303
    %v3306 = vadd.f32 %v3296, %v3304
    %v3307 = vadd.f32 %v3297, %v3304
    %3310 = vrot.lane.b32.xlu0 %v3306, 88
    %v3311 = vpop.permute.xlu0 %3310
    %3312 = vrot.lane.b32.xlu0 %v3307, 88
    %v3313 = vpop.permute.xlu0 %3312
    %3316 = vst.msk [vmem:[%s9] sm:$0xff] %vm2524, %v3311
    %3317 = vst.msk [vmem:[%s9 + $0x8] sm:$0xff] %vm2524, %v3313
    // Predicated region
    $region42: #{ipmp_ipa_forward.3} parent=1 // pred_check
      _
    $region43: #{ipmp_ipa_forward.3} parent=1 // pred_check_branch
      %3319 = sbr.rel (0) target = $region45
    $region44: #{ipmp_ipa_forward.3} parent=1 // pred_region
      _
    $region45: #{ipmp_ipa_forward.3} parent=1 // pred_fallthru
      _
    // Predicated region
    $region46: #{ipmp_ipa_forward.3} parent=1 // pred_check
      _
    $region47: #{ipmp_ipa_forward.3} parent=1 // pred_check_branch
      %3321 = sbr.rel (0) target = $region49
    $region48: #{ipmp_ipa_forward.3} parent=1 // pred_region
      _
    $region49: #{ipmp_ipa_forward.3} parent=1 // pred_fallthru
      _
    %3322 = vsyncpa [#allocation3], 1

</llo_original>
